<compile_context>
chip_gen: v7x
topology: tpu7x:2x2x1
jax: 0.10.0
libtpu: 0.0.40
codegen_flags: <defaults>
</compile_context>

<pallas_src>
import jax
import jax.numpy as jnp
from jax import lax
from jax.experimental import pallas as pl
from jax.experimental.pallas import tpu as pltpu

NUM_MC_SAMPLES = 10
DROPOUT_SCALE = 2.0  # 1 / (1 - p) with p = 0.5


def _se_uncertainty_kernel(x_ref, bits_ref, w1t_ref, w2t_ref, wct_ref, out_ref):
    x = x_ref[0]                                     # (HW, C) f32
    bits = bits_ref[0]                               # (HW, C) i32 random bits
    hw, c = x.shape

    # ---- SE gate: global average pool -> fc -> relu -> fc -> sigmoid ----
    pooled = jnp.mean(x, axis=0, keepdims=True)      # (1, C)
    h = jnp.maximum(
        jnp.dot(pooled, w1t_ref[...], preferred_element_type=jnp.float32), 0.0
    )                                                # (1, C//r)
    y = jax.nn.sigmoid(
        jnp.dot(h, w2t_ref[...], preferred_element_type=jnp.float32)
    )                                                # (1, C)

    # ---- MC-dropout uncertainty ----
    # Bit s of each element's random word -> keep mask of sample s (value 0 or 2).
    shifts = lax.broadcasted_iota(jnp.int32, (NUM_MC_SAMPLES, 1, 1), 0)
    keep = jnp.where(((bits[None, :, :] >> shifts) & 1) != 0, DROPOUT_SCALE, 0.0)
    xd = (x[None, :, :] * keep).astype(jnp.bfloat16)            # (S, HW, C)

    # All 10 samples as one large-M MXU matmul; bias omitted (cancels in var).
    preds = jnp.dot(
        xd.reshape(NUM_MC_SAMPLES * hw, c),
        wct_ref[...].astype(jnp.bfloat16),
        preferred_element_type=jnp.float32,
    ).reshape(NUM_MC_SAMPLES, hw, c)                             # (S, HW, C) f32

    # Unbiased variance over the sample axis (torch.var default, correction=1),
    # centered for numerical robustness; mean_prediction itself is unused.
    mean_p = jnp.mean(preds, axis=0)                             # (HW, C)
    dev = preds - mean_p[None, :, :]
    var = jnp.sum(dev * dev, axis=0) * (1.0 / (NUM_MC_SAMPLES - 1))
    uncertainty = jnp.mean(var, axis=0, keepdims=True)           # (1, C)

    # Fuse SE gate and uncertainty damping into one per-channel scale,
    # then a single broadcast multiply over the (HW, C) tile.
    scale = y * (1.0 - uncertainty)                              # (1, C)
    out_ref[0] = x * scale


def _dropout_bits(seed, shape):
    """One random 32-bit word per element; bit s is sample s's keep decision."""
    raw = jax.random.bits(jax.random.PRNGKey(seed), shape, dtype=jnp.uint32)
    return lax.bitcast_convert_type(raw, jnp.int32)


def se_attention_forward(x_nchw, w1, w2, conv_w, conv_b=None, seed=0):
    """x_nchw: (B, C, H, W) float32. Returns (B, C, H, W) float32."""
    B, C, H, W = x_nchw.shape
    Cr = w1.shape[0]
    HW = H * W

    # Glue: NCHW -> (B, HW, C); pre-transpose weights so the kernel does x @ W^T.
    x_blc = jnp.transpose(x_nchw, (0, 2, 3, 1)).reshape(B, HW, C).astype(jnp.float32)
    w1_t = jnp.asarray(w1, jnp.float32).T                        # (C, Cr)
    w2_t = jnp.asarray(w2, jnp.float32).T                        # (Cr, C)
    wc_t = jnp.asarray(conv_w, jnp.float32).reshape(C, C).T      # (C_in, C_out)
    # conv_b intentionally unused: additive constant cancels in the variance and
    # only feeds the unused mean_prediction, so it never reaches the kernel.
    del conv_b
    bits = _dropout_bits(seed, (B, HW, C))

    out_blc = pl.pallas_call(
        _se_uncertainty_kernel,
        out_shape=jax.ShapeDtypeStruct((B, HW, C), jnp.float32),
        grid_spec=pltpu.PrefetchScalarGridSpec(
            num_scalar_prefetch=0,
            grid=(B,),
            in_specs=[
                pl.BlockSpec((1, HW, C), lambda b: (b, 0, 0)),   # x
                pl.BlockSpec((1, HW, C), lambda b: (b, 0, 0)),   # dropout bits
                pl.BlockSpec((C, Cr), lambda b: (0, 0)),         # W1^T
                pl.BlockSpec((Cr, C), lambda b: (0, 0)),         # W2^T
                pl.BlockSpec((C, C), lambda b: (0, 0)),          # conv W^T
            ],
            out_specs=pl.BlockSpec((1, HW, C), lambda b: (b, 0, 0)),
        ),
        compiler_params=pltpu.CompilerParams(
            # Independent batch elements -> shardable across TensorCores on v7x;
            # harmless no-op on single-TC v5e/v6e.
            dimension_semantics=("parallel",),
        ),
    )(x_blc, bits, w1_t, w2_t, wc_t)

    # TODO(synk): for C < 128 at production scale, present a lane-dense output
    # view (e.g. fold a factor of HW into the lane axis) so the final store is
    # unmasked; at these toy shapes the masked stores are negligible.
    return jnp.transpose(out_blc.reshape(B, H, W, C), (0, 3, 1, 2))


def _reference_forward(x_nchw, w1, w2, conv_w, seed):
    """Pure-JAX (non-Pallas) reference with identical mask derivation (f32 matmuls)."""
    B, C, H, W = x_nchw.shape
    HW = H * W
    x = jnp.transpose(x_nchw, (0, 2, 3, 1)).reshape(B, HW, C).astype(jnp.float32)
    bits = _dropout_bits(seed, (B, HW, C))

    pooled = jnp.mean(x, axis=1)                                 # (B, C)
    h = jnp.maximum(pooled @ jnp.asarray(w1, jnp.float32).T, 0.0)
    y = jax.nn.sigmoid(h @ jnp.asarray(w2, jnp.float32).T)       # (B, C)

    wct = jnp.asarray(conv_w, jnp.float32).reshape(C, C).T
    shifts = jnp.arange(NUM_MC_SAMPLES, dtype=jnp.int32).reshape(-1, 1, 1, 1)
    keep = jnp.where(((bits[None] >> shifts) & 1) != 0, DROPOUT_SCALE, 0.0)
    preds = (x[None] * keep) @ wct                               # (S, B, HW, C)
    var = jnp.var(preds, axis=0, ddof=1)                         # (B, HW, C)
    unc = jnp.mean(var, axis=1, keepdims=True)                   # (B, 1, C)

    out = x * y[:, None, :] * (1.0 - unc)
    return jnp.transpose(out.reshape(B, H, W, C), (0, 3, 1, 2))


if __name__ == "__main__":
    # Small shapes consistent with the module: channel=32, reduction=4.
    B, C, H, W = 2, 32, 16, 16
    reduction = 4
    Cr = C // reduction

    key = jax.random.PRNGKey(0)
    kx, k1, k2, kc, kb = jax.random.split(key, 5)

    x = jax.random.normal(kx, (B, C, H, W), dtype=jnp.float32)
    w1 = jax.random.normal(k1, (Cr, C), dtype=jnp.float32) * 0.05   # Linear(C, C//r), no bias
    w2 = jax.random.normal(k2, (C, Cr), dtype=jnp.float32) * 0.05   # Linear(C//r, C), no bias
    conv_w = jax.random.normal(kc, (C, C, 1, 1), dtype=jnp.float32) * 0.05  # Conv2d(C, C, 1)
    conv_b = jax.random.normal(kb, (C,), dtype=jnp.float32) * 0.05

    out = se_attention_forward(x, w1, w2, conv_w, conv_b, seed=0)
    jax.block_until_ready(out)
    assert out.shape == (B, C, H, W) and out.dtype == jnp.float32
    assert bool(jnp.all(jnp.isfinite(out)))

    ref = _reference_forward(x, w1, w2, conv_w, seed=0)
    assert bool(jnp.allclose(out, ref, rtol=5e-2, atol=5e-2)), float(
        jnp.max(jnp.abs(out - ref)))

    print("KERNEL_OK")
</pallas_src>

<mosaic_0001>
module attributes {stable_mosaic.version = 11 : i64} {
  func.func @_se_uncertainty_kernel(%arg0: i32, %arg1: memref<1x256x32xf32, #tpu.memory_space<vmem>>, %arg2: memref<1x256x32xi32, #tpu.memory_space<vmem>>, %arg3: memref<32x8xf32, #tpu.memory_space<vmem>>, %arg4: memref<8x32xf32, #tpu.memory_space<vmem>>, %arg5: memref<32x32xf32, #tpu.memory_space<vmem>>, %arg6: memref<1x256x32xf32, #tpu.memory_space<vmem>>) attributes {dimension_semantics = [#tpu.dimension_semantics<parallel>], iteration_bounds = array<i64: 2>, scalar_prefetch = 0 : i64, scratch_operands = 0 : i64, tpu.core_type = #tpu.core_type<tc>, window_params = [{transform_indices = @transform_0, window_bounds = array<i64: 1, 256, 32>}, {transform_indices = @transform_1, window_bounds = array<i64: 1, 256, 32>}, {pipeline_mode = #tpu.pipeline_mode<synchronous>, transform_indices = @transform_2, window_bounds = array<i64: 32, 8>}, {pipeline_mode = #tpu.pipeline_mode<synchronous>, transform_indices = @transform_3, window_bounds = array<i64: 8, 32>}, {pipeline_mode = #tpu.pipeline_mode<synchronous>, transform_indices = @transform_4, window_bounds = array<i64: 32, 32>}, {transform_indices = @transform_5, window_bounds = array<i64: 1, 256, 32>}]} {
    %c0 = arith.constant 0 : index
    %c0_0 = arith.constant 0 : index
    %c0_1 = arith.constant 0 : index
    %0 = vector.load %arg1[%c0, %c0_0, %c0_1] : memref<1x256x32xf32, #tpu.memory_space<vmem>>, vector<1x256x32xf32>
    %1 = vector.shape_cast %0 : vector<1x256x32xf32> to vector<256x32xf32>
    %c0_2 = arith.constant 0 : index
    %c0_3 = arith.constant 0 : index
    %c0_4 = arith.constant 0 : index
    %2 = vector.load %arg2[%c0_2, %c0_3, %c0_4] : memref<1x256x32xi32, #tpu.memory_space<vmem>>, vector<1x256x32xi32>
    %3 = vector.shape_cast %2 : vector<1x256x32xi32> to vector<256x32xi32>
    %cst = arith.constant dense<0.000000e+00> : vector<32xf32>
    %4 = vector.multi_reduction <add>, %1, %cst [0] : vector<256x32xf32> to vector<32xf32>
    %5 = vector.shape_cast %4 : vector<32xf32> to vector<1x32xf32>
    %cst_5 = arith.constant 2.560000e+02 : f32
    %6 = vector.broadcast %cst_5 : f32 to vector<1x32xf32>
    %7 = arith.divf %5, %6 : vector<1x32xf32>
    %c0_6 = arith.constant 0 : index
    %c0_7 = arith.constant 0 : index
    %8 = vector.load %arg3[%c0_6, %c0_7] : memref<32x8xf32, #tpu.memory_space<vmem>>, vector<32x8xf32>
    %cst_8 = arith.constant dense<0.000000e+00> : vector<1x8xf32>
    %9 = tpu.matmul %7, %8, %cst_8 {dimension_numbers = #tpu.dot_dimension_numbers<[1], [0], [0], [1], [0, 0, 1, 1], [], []>} : vector<1x32xf32>, vector<32x8xf32>, vector<1x8xf32> -> vector<1x8xf32>
    %cst_9 = arith.constant 0.000000e+00 : f32
    %10 = vector.broadcast %cst_9 : f32 to vector<1x8xf32>
    %11 = arith.maximumf %9, %10 : vector<1x8xf32>
    %c0_10 = arith.constant 0 : index
    %c0_11 = arith.constant 0 : index
    %12 = vector.load %arg4[%c0_10, %c0_11] : memref<8x32xf32, #tpu.memory_space<vmem>>, vector<8x32xf32>
    %cst_12 = arith.constant dense<0.000000e+00> : vector<1x32xf32>
    %13 = tpu.matmul %11, %12, %cst_12 {dimension_numbers = #tpu.dot_dimension_numbers<[1], [0], [0], [1], [0, 0, 1, 1], [], []>} : vector<1x8xf32>, vector<8x32xf32>, vector<1x32xf32> -> vector<1x32xf32>
    %14 = arith.negf %13 : vector<1x32xf32>
    %15 = math.exp %14 : vector<1x32xf32>
    %cst_13 = arith.constant 1.000000e+00 : f32
    %16 = vector.broadcast %cst_13 : f32 to vector<1x32xf32>
    %17 = arith.addf %16, %15 : vector<1x32xf32>
    %18 = arith.divf %16, %17 : vector<1x32xf32>
    %19 = tpu.iota {dimensions = array<i32: 0>} : vector<10x1x1xi32>
    %20 = vector.shape_cast %3 : vector<256x32xi32> to vector<1x256x32xi32>
    %21 = vector.broadcast %20 : vector<1x256x32xi32> to vector<10x256x32xi32>
    %22 = vector.broadcast %19 : vector<10x1x1xi32> to vector<10x256x32xi32>
    %23 = arith.shrsi %21, %22 : vector<10x256x32xi32>
    %c1_i32 = arith.constant 1 : i32
    %24 = vector.broadcast %c1_i32 : i32 to vector<10x256x32xi32>
    %25 = arith.andi %23, %24 : vector<10x256x32xi32>
    %c0_i32 = arith.constant 0 : i32
    %26 = vector.broadcast %c0_i32 : i32 to vector<10x256x32xi32>
    %27 = arith.cmpi ne, %25, %26 : vector<10x256x32xi32>
    %cst_14 = arith.constant 2.000000e+00 : f32
    %cst_15 = arith.constant 0.000000e+00 : f32
    %28 = vector.broadcast %cst_14 : f32 to vector<10x256x32xf32>
    %29 = vector.broadcast %cst_15 : f32 to vector<10x256x32xf32>
    %30 = arith.select %27, %28, %29 : vector<10x256x32xi1>, vector<10x256x32xf32>
    %31 = vector.shape_cast %1 : vector<256x32xf32> to vector<1x256x32xf32>
    %32 = vector.broadcast %31 : vector<1x256x32xf32> to vector<10x256x32xf32>
    %33 = arith.mulf %32, %30 : vector<10x256x32xf32>
    %34 = arith.truncf %33 : vector<10x256x32xf32> to vector<10x256x32xbf16>
    %35 = vector.shape_cast %34 : vector<10x256x32xbf16> to vector<2560x32xbf16>
    %c0_16 = arith.constant 0 : index
    %c0_17 = arith.constant 0 : index
    %36 = vector.load %arg5[%c0_16, %c0_17] : memref<32x32xf32, #tpu.memory_space<vmem>>, vector<32x32xf32>
    %37 = arith.truncf %36 : vector<32x32xf32> to vector<32x32xbf16>
    %cst_18 = arith.constant dense<0.000000e+00> : vector<2560x32xf32>
    %38 = tpu.matmul %35, %37, %cst_18 {dimension_numbers = #tpu.dot_dimension_numbers<[1], [0], [0], [1], [0, 0, 1, 1], [], []>} : vector<2560x32xbf16>, vector<32x32xbf16>, vector<2560x32xf32> -> vector<2560x32xf32>
    %39 = vector.shape_cast %38 : vector<2560x32xf32> to vector<10x256x32xf32>
    %cst_19 = arith.constant dense<0.000000e+00> : vector<256x32xf32>
    %40 = vector.multi_reduction <add>, %39, %cst_19 [0] : vector<10x256x32xf32> to vector<256x32xf32>
    %cst_20 = arith.constant 1.000000e+01 : f32
    %41 = vector.broadcast %cst_20 : f32 to vector<256x32xf32>
    %42 = arith.divf %40, %41 : vector<256x32xf32>
    %43 = vector.shape_cast %42 : vector<256x32xf32> to vector<1x256x32xf32>
    %44 = vector.broadcast %43 : vector<1x256x32xf32> to vector<10x256x32xf32>
    %45 = arith.subf %39, %44 : vector<10x256x32xf32>
    %46 = arith.mulf %45, %45 : vector<10x256x32xf32>
    %cst_21 = arith.constant dense<0.000000e+00> : vector<256x32xf32>
    %47 = vector.multi_reduction <add>, %46, %cst_21 [0] : vector<10x256x32xf32> to vector<256x32xf32>
    %cst_22 = arith.constant 0.111111112 : f32
    %48 = vector.broadcast %cst_22 : f32 to vector<256x32xf32>
    %49 = arith.mulf %47, %48 : vector<256x32xf32>
    %cst_23 = arith.constant dense<0.000000e+00> : vector<32xf32>
    %50 = vector.multi_reduction <add>, %49, %cst_23 [0] : vector<256x32xf32> to vector<32xf32>
    %51 = vector.shape_cast %50 : vector<32xf32> to vector<1x32xf32>
    %cst_24 = arith.constant 2.560000e+02 : f32
    %52 = vector.broadcast %cst_24 : f32 to vector<1x32xf32>
    %53 = arith.divf %51, %52 : vector<1x32xf32>
    %cst_25 = arith.constant 1.000000e+00 : f32
    %54 = vector.broadcast %cst_25 : f32 to vector<1x32xf32>
    %55 = arith.subf %54, %53 : vector<1x32xf32>
    %56 = arith.mulf %18, %55 : vector<1x32xf32>
    %57 = vector.broadcast %56 : vector<1x32xf32> to vector<256x32xf32>
    %58 = arith.mulf %1, %57 : vector<256x32xf32>
    %c0_26 = arith.constant 0 : index
    %c0_27 = arith.constant 0 : index
    %c0_28 = arith.constant 0 : index
    %59 = vector.load %arg6[%c0_26, %c0_27, %c0_28] : memref<1x256x32xf32, #tpu.memory_space<vmem>>, vector<1x256x32xf32>
    %60 = vector.shape_cast %59 : vector<1x256x32xf32> to vector<256x32xf32>
    %61 = vector.shape_cast %58 : vector<256x32xf32> to vector<1x256x32xf32>
    tpu.vector_store %arg6[%c0_26, %c0_27, %c0_28], %61 {strides = array<i32>} : memref<1x256x32xf32, #tpu.memory_space<vmem>>, vector<1x256x32xf32>,
    return
  }
  func.func @transform_0(%arg0: i32) -> (i32, i32, i32) {
    %c0_i32 = arith.constant 0 : i32
    %c0_i32_0 = arith.constant 0 : i32
    %c0_i32_1 = arith.constant 0 : i32
    return %arg0, %c0_i32, %c0_i32_0 : i32, i32, i32
  }
  func.func @transform_1(%arg0: i32) -> (i32, i32, i32) {
    %c0_i32 = arith.constant 0 : i32
    %c0_i32_0 = arith.constant 0 : i32
    %c0_i32_1 = arith.constant 0 : i32
    return %arg0, %c0_i32, %c0_i32_0 : i32, i32, i32
  }
  func.func @transform_2(%arg0: i32) -> (i32, i32) {
    %c0_i32 = arith.constant 0 : i32
    %c0_i32_0 = arith.constant 0 : i32
    %c0_i32_1 = arith.constant 0 : i32
    return %c0_i32, %c0_i32_0 : i32, i32
  }
  func.func @transform_3(%arg0: i32) -> (i32, i32) {
    %c0_i32 = arith.constant 0 : i32
    %c0_i32_0 = arith.constant 0 : i32
    %c0_i32_1 = arith.constant 0 : i32
    return %c0_i32, %c0_i32_0 : i32, i32
  }
  func.func @transform_4(%arg0: i32) -> (i32, i32) {
    %c0_i32 = arith.constant 0 : i32
    %c0_i32_0 = arith.constant 0 : i32
    %c0_i32_1 = arith.constant 0 : i32
    return %c0_i32, %c0_i32_0 : i32, i32
  }
  func.func @transform_5(%arg0: i32) -> (i32, i32, i32) {
    %c0_i32 = arith.constant 0 : i32
    %c0_i32_0 = arith.constant 0 : i32
    %c0_i32_1 = arith.constant 0 : i32
    return %arg0, %c0_i32, %c0_i32_0 : i32, i32, i32
  }
}

</mosaic_0001>

<llo_original>
// kernel: tpu_custom_call.1
$region0: #{tpu_custom_call.1}
  #allocation0 [shape = 'u32[]', space=smem, size = 0x4, offset = 0x4, fixed_abs, tag = 'smem constant byte address 0x4 - core index']
  #allocation1 [shape = 'u32[144,128]{1,0:T(1,128)}', space=vmem, size = 0x12000, scoped, tag = 'internal scratch']
  %s0 = inlined_call_operand.vmem [shape: f32[2,256,32], index: 0, kind: input, shape index: {}]
  %s1 = inlined_call_operand.vmem [shape: s32[2,256,32], index: 1, kind: input, shape index: {}]
  %s2 = inlined_call_operand.vmem [shape: f32[32,8], index: 2, kind: input, shape index: {}]
  %s3 = inlined_call_operand.vmem [shape: f32[8,32], index: 3, kind: input, shape index: {}]
  %s4 = inlined_call_operand.vmem [shape: f32[32,32], index: 4, kind: input, shape index: {}]
  %s5 = inlined_call_operand.vmem [shape: f32[2,256,32], index: 5, kind: output, shape index: {}]
  %s6 = sld [smem:[#allocation0]]
  $region53: #{tpu_custom_call.1} parent=0
    _
  %s8 = ssub.s32 1, %s6
  %s9 = scalar_select 0, %s8, %s6
  loop: start=0, step=1, limit=4
  $region2: #{tpu_custom_call.1} parent=0 // loop_pre_header
    _
  $region3: #{tpu_custom_call.1} parent=0 // loop_header
    %s11 = sphi 0, %s15
    %p12 = scmp.ge.s32.totalorder %s11, 4
    %s21 = sphi 0, %s23
    %s24 = sphi 0, %s21
    %s25 = sphi 0, %s24
    %s41 = sphi 0, %s25
    %s47 = sphi 0, %s49
    %s50 = sphi 0, %s47
    %s51 = sphi 0, %s50
    %s67 = sphi 0, %s51
    %s71 = sphi 0, %s71
    %s73 = sphi 0, %s71
    %s74 = sphi 0, %s73
    %s88 = sphi 0, %s74
    %s92 = sphi 0, %s92
    %s94 = sphi 0, %s92
    %s95 = sphi 0, %s94
    %s109 = sphi 0, %s95
    %s113 = sphi 0, %s113
    %s115 = sphi 0, %s113
    %s116 = sphi 0, %s115
    %s130 = sphi 0, %s116
    %s136 = sphi 0, %s138
    %s139 = sphi 0, %s136
    %s140 = sphi 0, %s139
    %s156 = sphi 0, %s140
  $region4: #{tpu_custom_call.1} parent=0 // loop_header_branch
    %14 = sbr.rel (%p12) target = $region8
  $region5: #{tpu_custom_call.1} parent=0 // loop_body
    %s16 = ssub.s32 %s11, 1
    %s17 = ssub.s32 %s11, 2
    %s18 = sadd.s32 %s11, 1
    %s19 = ssub.s32 %s11, %s18
    %p20 = scmp.eq.s32.totalorder %s19, 0
    %s22 = sadd.s32 %s21, 1
    %s23 = scalar_select %p20, %s21, %s22
    %p26 = pneg %p20
    %p27 = scmp.eq.s32.totalorder %s11, 1
    %p28 = por %p26, %p27
    %p29 = scmp.ne.s32.totalorder %s21, %s24
    %p30 = scmp.eq.s32.totalorder %s11, 0
    %p31 = por %p29, %p30
    %p32 = scmp.ne.s32.totalorder %s21, %s24
    %p33 = scmp.eq.s32.totalorder %s16, 1
    %p34 = por %p32, %p33
    %p35 = scmp.ne.s32.totalorder %s24, %s25
    %p36 = scmp.eq.s32.totalorder %s16, 0
    %p37 = por %p35, %p36
    %p38 = scmp.ne.s32.totalorder %s24, %s25
    %p39 = scmp.eq.s32.totalorder %s17, 1
    %p40 = por %p38, %p39
    %p42 = scmp.ne.s32.totalorder %s25, %s41
    %p43 = scmp.eq.s32.totalorder %s17, 0
    %p44 = por %p42, %p43
    %s45 = ssub.s32 %s11, %s18
    %p46 = scmp.eq.s32.totalorder %s45, 0
    %s48 = sadd.s32 %s47, 1
    %s49 = scalar_select %p46, %s47, %s48
    %p52 = pneg %p46
    %p53 = scmp.eq.s32.totalorder %s11, 1
    %p54 = por %p52, %p53
    %p55 = scmp.ne.s32.totalorder %s47, %s50
    %p56 = scmp.eq.s32.totalorder %s11, 0
    %p57 = por %p55, %p56
    %p58 = scmp.ne.s32.totalorder %s47, %s50
    %p59 = scmp.eq.s32.totalorder %s16, 1
    %p60 = por %p58, %p59
    %p61 = scmp.ne.s32.totalorder %s50, %s51
    %p62 = scmp.eq.s32.totalorder %s16, 0
    %p63 = por %p61, %p62
    %p64 = scmp.ne.s32.totalorder %s50, %s51
    %p65 = scmp.eq.s32.totalorder %s17, 1
    %p66 = por %p64, %p65
    %p68 = scmp.ne.s32.totalorder %s51, %s67
    %p69 = scmp.eq.s32.totalorder %s17, 0
    %p70 = por %p68, %p69
    %s72 = sadd.s32 %s71, 1
    %p75 = scmp.eq.s32.totalorder %s11, 1
    %p76 = scmp.ne.s32.totalorder %s71, %s73
    %p77 = scmp.eq.s32.totalorder %s11, 0
    %p78 = por %p76, %p77
    %p79 = scmp.ne.s32.totalorder %s71, %s73
    %p80 = scmp.eq.s32.totalorder %s16, 1
    %p81 = por %p79, %p80
    %p82 = scmp.ne.s32.totalorder %s73, %s74
    %p83 = scmp.eq.s32.totalorder %s16, 0
    %p84 = por %p82, %p83
    %p85 = scmp.ne.s32.totalorder %s73, %s74
    %p86 = scmp.eq.s32.totalorder %s17, 1
    %p87 = por %p85, %p86
    %p89 = scmp.ne.s32.totalorder %s74, %s88
    %p90 = scmp.eq.s32.totalorder %s17, 0
    %p91 = por %p89, %p90
    %s93 = sadd.s32 %s92, 1
    %p96 = scmp.eq.s32.totalorder %s11, 1
    %p97 = scmp.ne.s32.totalorder %s92, %s94
    %p98 = scmp.eq.s32.totalorder %s11, 0
    %p99 = por %p97, %p98
    %p100 = scmp.ne.s32.totalorder %s92, %s94
    %p101 = scmp.eq.s32.totalorder %s16, 1
    %p102 = por %p100, %p101
    %p103 = scmp.ne.s32.totalorder %s94, %s95
    %p104 = scmp.eq.s32.totalorder %s16, 0
    %p105 = por %p103, %p104
    %p106 = scmp.ne.s32.totalorder %s94, %s95
    %p107 = scmp.eq.s32.totalorder %s17, 1
    %p108 = por %p106, %p107
    %p110 = scmp.ne.s32.totalorder %s95, %s109
    %p111 = scmp.eq.s32.totalorder %s17, 0
    %p112 = por %p110, %p111
    %s114 = sadd.s32 %s113, 1
    %p117 = scmp.eq.s32.totalorder %s11, 1
    %p118 = scmp.ne.s32.totalorder %s113, %s115
    %p119 = scmp.eq.s32.totalorder %s11, 0
    %p120 = por %p118, %p119
    %p121 = scmp.ne.s32.totalorder %s113, %s115
    %p122 = scmp.eq.s32.totalorder %s16, 1
    %p123 = por %p121, %p122
    %p124 = scmp.ne.s32.totalorder %s115, %s116
    %p125 = scmp.eq.s32.totalorder %s16, 0
    %p126 = por %p124, %p125
    %p127 = scmp.ne.s32.totalorder %s115, %s116
    %p128 = scmp.eq.s32.totalorder %s17, 1
    %p129 = por %p127, %p128
    %p131 = scmp.ne.s32.totalorder %s116, %s130
    %p132 = scmp.eq.s32.totalorder %s17, 0
    %p133 = por %p131, %p132
    %s134 = ssub.s32 %s11, %s18
    %p135 = scmp.eq.s32.totalorder %s134, 0
    %s137 = sadd.s32 %s136, 1
    %s138 = scalar_select %p135, %s136, %s137
    %p141 = pneg %p135
    %p142 = scmp.eq.s32.totalorder %s11, 1
    %p143 = por %p141, %p142
    %p144 = scmp.ne.s32.totalorder %s136, %s139
    %p145 = scmp.eq.s32.totalorder %s11, 0
    %p146 = por %p144, %p145
    %p147 = scmp.ne.s32.totalorder %s136, %s139
    %p148 = scmp.eq.s32.totalorder %s16, 1
    %p149 = por %p147, %p148
    %p150 = scmp.ne.s32.totalorder %s139, %s140
    %p151 = scmp.eq.s32.totalorder %s16, 0
    %p152 = por %p150, %p151
    %p153 = scmp.ne.s32.totalorder %s139, %s140
    %p154 = scmp.eq.s32.totalorder %s17, 1
    %p155 = por %p153, %p154
    %p157 = scmp.ne.s32.totalorder %s140, %s156
    %p158 = scmp.eq.s32.totalorder %s17, 0
    %p159 = por %p157, %p158
    %p160 = scmp.le.s32.totalorder 1, %s11
    %p161 = scmp.lt.s32.totalorder %s11, 3
    %p162 = pnand %p160, %p161
    %p163 = pneg %p162
    // Predicated region
    $region9: #{tpu_custom_call.1} parent=5 // pred_check
      _
    $region10: #{tpu_custom_call.1} parent=5 // pred_check_branch
      %165 = sbr.rel (%p162) target = $region12
    $region11: #{tpu_custom_call.1} parent=5 // pred_region
      %s166 = ssub.s32 %s11, 1
      // Predicated region
      $region13: #{tpu_custom_call.1} parent=11 // pred_check
        %p167 = pneg %p84
      $region14: #{tpu_custom_call.1} parent=11 // pred_check_branch
        %169 = sbr.rel (%p167) target = $region16
      $region15: #{tpu_custom_call.1} parent=11 // pred_region
        _
      $region16: #{tpu_custom_call.1} parent=11 // pred_fallthru
        _
      // Predicated region
      $region17: #{tpu_custom_call.1} parent=11 // pred_check
        %p170 = pneg %p105
      $region18: #{tpu_custom_call.1} parent=11 // pred_check_branch
        %172 = sbr.rel (%p170) target = $region20
      $region19: #{tpu_custom_call.1} parent=11 // pred_region
        _
      $region20: #{tpu_custom_call.1} parent=11 // pred_fallthru
        _
      // Predicated region
      $region21: #{tpu_custom_call.1} parent=11 // pred_check
        %p173 = pneg %p126
      $region22: #{tpu_custom_call.1} parent=11 // pred_check_branch
        %175 = sbr.rel (%p173) target = $region24
      $region23: #{tpu_custom_call.1} parent=11 // pred_region
        _
      $region24: #{tpu_custom_call.1} parent=11 // pred_fallthru
        _
    $region12: #{tpu_custom_call.1} parent=5 // pred_fallthru
      _
    %p176 = scmp.lt.s32.totalorder %s11, 2
    // Predicated region
    $region25: #{tpu_custom_call.1} parent=5 // pred_check
      %p177 = pneg %p176
    $region26: #{tpu_custom_call.1} parent=5 // pred_check_branch
      %179 = sbr.rel (%p177) target = $region28
    $region27: #{tpu_custom_call.1} parent=5 // pred_region
      // Predicated region
      $region29: #{tpu_custom_call.1} parent=27 // pred_check
        %p180 = pneg %p31
      $region30: #{tpu_custom_call.1} parent=27 // pred_check_branch
        %182 = sbr.rel (%p180) target = $region32
      $region31: #{tpu_custom_call.1} parent=27 // pred_region
        %p183 = scmp.lt.s32.totalorder %s11, 1
        %s184 = scalar_select %p183, %s11, 1
        %s185 = smul.addr %s184, 32
        %s186 = smul.addr %s185, 8
        %s187 = scalar_lea.vmem %s0, %s186
      $region32: #{tpu_custom_call.1} parent=27 // pred_fallthru
        _
      // Predicated region
      $region33: #{tpu_custom_call.1} parent=27 // pred_check
        %p188 = pneg %p57
      $region34: #{tpu_custom_call.1} parent=27 // pred_check_branch
        %190 = sbr.rel (%p188) target = $region36
      $region35: #{tpu_custom_call.1} parent=27 // pred_region
        %p191 = scmp.lt.s32.totalorder %s11, 1
        %s192 = scalar_select %p191, %s11, 1
        %s193 = smul.addr %s192, 32
        %s194 = smul.addr %s193, 8
        %s195 = scalar_lea.vmem %s1, %s194
      $region36: #{tpu_custom_call.1} parent=27 // pred_fallthru
        _
    $region28: #{tpu_custom_call.1} parent=5 // pred_fallthru
      _
    %p196 = scmp.le.s32.totalorder 1, %s11
    %p197 = scmp.lt.s32.totalorder %s11, 3
    %p198 = pnand %p196, %p197
    %p199 = pneg %p198
    // Predicated region
    $region37: #{tpu_custom_call.1} parent=5 // pred_check
      _
    $region38: #{tpu_custom_call.1} parent=5 // pred_check_branch
      %201 = sbr.rel (%p198) target = $region40
    $region39: #{tpu_custom_call.1} parent=5 // pred_region
      %s202 = ssub.s32 %s11, 1
      %p203 = scmp.lt.s32.totalorder %s16, 1
      %s204 = scalar_select %p203, %s16, 1
      %s205 = smul.addr %s204, 32
      %s206 = smul.addr %s205, 8
      %s207 = scalar_lea.vmem %s0, %s206
      %p208 = pneg %p37
      %p209 = pneg %p34
      %p210 = scmp.lt.s32.totalorder %s16, 1
      %s211 = scalar_select %p210, %s16, 1
      %s212 = smul.addr %s211, 32
      %s213 = smul.addr %s212, 8
      %s214 = scalar_lea.vmem %s1, %s213
      %p215 = pneg %p63
      %p216 = pneg %p60
      %p217 = pneg %p84
      %p218 = pneg %p81
      %p219 = pneg %p105
      %p220 = pneg %p102
      %p221 = pneg %p126
      %p222 = pneg %p123
      %p223 = pneg %p152
      %p224 = pneg %p149
      %p225 = scmp.lt.s32.totalorder %s16, 1
      %s226 = scalar_select %p225, %s16, 1
      %s227 = smul.addr %s226, 32
      %s228 = smul.addr %s227, 8
      %s229 = scalar_lea.vmem %s5, %s228
      %p230 = scmp.lt.s32.totalorder %s16, 1
      %s231 = scalar_select %p230, %s16, 1
      %s232 = smul.addr %s231, 32
      %s233 = smul.addr %s232, 8
      %s234 = scalar_lea.vmem %s0, %s233
      %p235 = scmp.lt.s32.totalorder %s16, 1
      %s236 = scalar_select %p235, %s16, 1
      %s237 = smul.addr %s236, 32
      %s238 = smul.addr %s237, 8
      %s239 = scalar_lea.vmem %s1, %s238
      %p240 = scmp.lt.s32.totalorder %s16, 1
      %s241 = scalar_select %p240, %s16, 1
      %s242 = smul.addr %s241, 32
      %s243 = smul.addr %s242, 8
      %s244 = scalar_lea.vmem %s5, %s243
      %v246 = vld [vmem:[%s234] sm:$0xff]
      %v247 = vld [vmem:[%s234 + $0x8] sm:$0xff]
      %v248 = vld [vmem:[%s234 + $0x10] sm:$0xff]
      %v249 = vld [vmem:[%s234 + $0x18] sm:$0xff]
      %v250 = vld [vmem:[%s234 + $0x20] sm:$0xff]
      %v251 = vld [vmem:[%s234 + $0x28] sm:$0xff]
      %v252 = vld [vmem:[%s234 + $0x30] sm:$0xff]
      %v253 = vld [vmem:[%s234 + $0x38] sm:$0xff]
      %v254 = vld [vmem:[%s234 + $0x40] sm:$0xff]
      %v255 = vld [vmem:[%s234 + $0x48] sm:$0xff]
      %v256 = vld [vmem:[%s234 + $0x50] sm:$0xff]
      %v257 = vld [vmem:[%s234 + $0x58] sm:$0xff]
      %v258 = vld [vmem:[%s234 + $0x60] sm:$0xff]
      %v259 = vld [vmem:[%s234 + $0x68] sm:$0xff]
      %v260 = vld [vmem:[%s234 + $0x70] sm:$0xff]
      %v261 = vld [vmem:[%s234 + $0x78] sm:$0xff]
      %v262 = vld [vmem:[%s234 + $0x80] sm:$0xff]
      %v263 = vld [vmem:[%s234 + $0x88] sm:$0xff]
      %v264 = vld [vmem:[%s234 + $0x90] sm:$0xff]
      %v265 = vld [vmem:[%s234 + $0x98] sm:$0xff]
      %v266 = vld [vmem:[%s234 + $0xa0] sm:$0xff]
      %v267 = vld [vmem:[%s234 + $0xa8] sm:$0xff]
      %v268 = vld [vmem:[%s234 + $0xb0] sm:$0xff]
      %v269 = vld [vmem:[%s234 + $0xb8] sm:$0xff]
      %v270 = vld [vmem:[%s234 + $0xc0] sm:$0xff]
      %v271 = vld [vmem:[%s234 + $0xc8] sm:$0xff]
      %v272 = vld [vmem:[%s234 + $0xd0] sm:$0xff]
      %v273 = vld [vmem:[%s234 + $0xd8] sm:$0xff]
      %v274 = vld [vmem:[%s234 + $0xe0] sm:$0xff]
      %v275 = vld [vmem:[%s234 + $0xe8] sm:$0xff]
      %v276 = vld [vmem:[%s234 + $0xf0] sm:$0xff]
      %v277 = vld [vmem:[%s234 + $0xf8] sm:$0xff]
      %v278 = vld [vmem:[%s239] sm:$0xff]
      %v279 = vld [vmem:[%s239 + $0x8] sm:$0xff]
      %v280 = vld [vmem:[%s239 + $0x10] sm:$0xff]
      %v281 = vld [vmem:[%s239 + $0x18] sm:$0xff]
      %v282 = vld [vmem:[%s239 + $0x20] sm:$0xff]
      %v283 = vld [vmem:[%s239 + $0x28] sm:$0xff]
      %v284 = vld [vmem:[%s239 + $0x30] sm:$0xff]
      %v285 = vld [vmem:[%s239 + $0x38] sm:$0xff]
      %v286 = vld [vmem:[%s239 + $0x40] sm:$0xff]
      %v287 = vld [vmem:[%s239 + $0x48] sm:$0xff]
      %v288 = vld [vmem:[%s239 + $0x50] sm:$0xff]
      %v289 = vld [vmem:[%s239 + $0x58] sm:$0xff]
      %v290 = vld [vmem:[%s239 + $0x60] sm:$0xff]
      %v291 = vld [vmem:[%s239 + $0x68] sm:$0xff]
      %v292 = vld [vmem:[%s239 + $0x70] sm:$0xff]
      %v293 = vld [vmem:[%s239 + $0x78] sm:$0xff]
      %v294 = vld [vmem:[%s239 + $0x80] sm:$0xff]
      %v295 = vld [vmem:[%s239 + $0x88] sm:$0xff]
      %v296 = vld [vmem:[%s239 + $0x90] sm:$0xff]
      %v297 = vld [vmem:[%s239 + $0x98] sm:$0xff]
      %v298 = vld [vmem:[%s239 + $0xa0] sm:$0xff]
      %v299 = vld [vmem:[%s239 + $0xa8] sm:$0xff]
      %v300 = vld [vmem:[%s239 + $0xb0] sm:$0xff]
      %v301 = vld [vmem:[%s239 + $0xb8] sm:$0xff]
      %v302 = vld [vmem:[%s239 + $0xc0] sm:$0xff]
      %v303 = vld [vmem:[%s239 + $0xc8] sm:$0xff]
      %v304 = vld [vmem:[%s239 + $0xd0] sm:$0xff]
      %v305 = vld [vmem:[%s239 + $0xd8] sm:$0xff]
      %v306 = vld [vmem:[%s239 + $0xe0] sm:$0xff]
      %v307 = vld [vmem:[%s239 + $0xe8] sm:$0xff]
      %v308 = vld [vmem:[%s239 + $0xf0] sm:$0xff]
      %v309 = vld [vmem:[%s239 + $0xf8] sm:$0xff]
      %vm310 = vcmask 261120
      %v311 = vsel %vm310, %v246, 0.0
      %v312 = vsel %vm310, %v247, 0.0
      %v313 = vadd.f32 %v311, %v312
      %v314 = vsel %vm310, %v248, 0.0
      %v315 = vadd.f32 %v313, %v314
      %v316 = vsel %vm310, %v249, 0.0
      %v317 = vadd.f32 %v315, %v316
      %v318 = vsel %vm310, %v250, 0.0
      %v319 = vadd.f32 %v317, %v318
      %v320 = vsel %vm310, %v251, 0.0
      %v321 = vadd.f32 %v319, %v320
      %v322 = vsel %vm310, %v252, 0.0
      %v323 = vadd.f32 %v321, %v322
      %v324 = vsel %vm310, %v253, 0.0
      %v325 = vadd.f32 %v323, %v324
      %v326 = vsel %vm310, %v254, 0.0
      %v327 = vadd.f32 %v325, %v326
      %v328 = vsel %vm310, %v255, 0.0
      %v329 = vadd.f32 %v327, %v328
      %v330 = vsel %vm310, %v256, 0.0
      %v331 = vadd.f32 %v329, %v330
      %v332 = vsel %vm310, %v257, 0.0
      %v333 = vadd.f32 %v331, %v332
      %v334 = vsel %vm310, %v258, 0.0
      %v335 = vadd.f32 %v333, %v334
      %v336 = vsel %vm310, %v259, 0.0
      %v337 = vadd.f32 %v335, %v336
      %v338 = vsel %vm310, %v260, 0.0
      %v339 = vadd.f32 %v337, %v338
      %v340 = vsel %vm310, %v261, 0.0
      %v341 = vadd.f32 %v339, %v340
      %v342 = vsel %vm310, %v262, 0.0
      %v343 = vadd.f32 %v341, %v342
      %v344 = vsel %vm310, %v263, 0.0
      %v345 = vadd.f32 %v343, %v344
      %v346 = vsel %vm310, %v264, 0.0
      %v347 = vadd.f32 %v345, %v346
      %v348 = vsel %vm310, %v265, 0.0
      %v349 = vadd.f32 %v347, %v348
      %v350 = vsel %vm310, %v266, 0.0
      %v351 = vadd.f32 %v349, %v350
      %v352 = vsel %vm310, %v267, 0.0
      %v353 = vadd.f32 %v351, %v352
      %v354 = vsel %vm310, %v268, 0.0
      %v355 = vadd.f32 %v353, %v354
      %v356 = vsel %vm310, %v269, 0.0
      %v357 = vadd.f32 %v355, %v356
      %v358 = vsel %vm310, %v270, 0.0
      %v359 = vadd.f32 %v357, %v358
      %v360 = vsel %vm310, %v271, 0.0
      %v361 = vadd.f32 %v359, %v360
      %v362 = vsel %vm310, %v272, 0.0
      %v363 = vadd.f32 %v361, %v362
      %v364 = vsel %vm310, %v273, 0.0
      %v365 = vadd.f32 %v363, %v364
      %v366 = vsel %vm310, %v274, 0.0
      %v367 = vadd.f32 %v365, %v366
      %v368 = vsel %vm310, %v275, 0.0
      %v369 = vadd.f32 %v367, %v368
      %v370 = vsel %vm310, %v276, 0.0
      %v371 = vadd.f32 %v369, %v370
      %v372 = vsel %vm310, %v277, 0.0
      %v373 = vadd.f32 %v371, %v372
      %v374 = vrot.slane %v373, 4
      %v375 = vadd.f32 %v373, %v374
      %v376 = vrot.slane %v375, 2
      %v377 = vadd.f32 %v375, %v376
      %v378 = vrot.slane %v377, 1
      %v379 = vadd.f32 %v377, %v378
      %v380 = vrcp.pop 256.0
      %v381 = vmul.f32 %v379, %v380
      %v382 = vld [vmem:[%s2] sm:$0xff]
      %v383 = vld [vmem:[%s2 + $0x8] sm:$0xff]
      %v384 = vld [vmem:[%s2 + $0x10] sm:$0xff]
      %v385 = vld [vmem:[%s2 + $0x18] sm:$0xff]
      %v387 = vsel %vm310, %v381, 0
      %389 = vmatprep.subr.mxu0 0.0
      %390 = vmatpush1.msra.mxu0 %v382
      %391 = vmatprep.subr.mxu0 0.0
      %392 = vmatpush1.msra.mxu0 %v383
      %393 = vmatprep.subr.mxu0 0.0
      %394 = vmatpush1.msra.mxu0 %v384
      %395 = vmatprep.subr.mxu0 0.0
      %396 = vmatpush1.msra.mxu0 %v385
      %397 = vmatprep.subr.mxu0 0.0
      %398 = vmatpush1.msra.mxu0 0.0
      %399 = vmatprep.subr.mxu0 0.0
      %400 = vmatpush1.msra.mxu0 0.0
      %401 = vmatprep.subr.mxu0 0.0
      %402 = vmatpush1.msra.mxu0 0.0
      %403 = vmatprep.subr.mxu0 0.0
      %404 = vmatpush1.msra.mxu0 0.0
      %405 = vmatprep.subr.mxu0 0.0
      %406 = vmatpush1.msra.mxu0 0.0
      %407 = vmatprep.subr.mxu0 0.0
      %408 = vmatpush1.msra.mxu0 0.0
      %409 = vmatprep.subr.mxu0 0.0
      %410 = vmatpush1.msra.mxu0 0.0
      %411 = vmatprep.subr.mxu0 0.0
      %412 = vmatpush1.msra.mxu0 0.0
      %413 = vmatprep.subr.mxu0 0.0
      %414 = vmatpush1.msra.mxu0 0.0
      %415 = vmatprep.subr.mxu0 0.0
      %416 = vmatpush1.msra.mxu0 0.0
      %417 = vmatprep.subr.mxu0 0.0
      %418 = vmatpush1.msra.mxu0 0.0
      %419 = vmatprep.subr.mxu0 0.0
      %420 = vmatpush1.msra.mxu0 0.0
      %421 = vmatprep.subr.mxu0 0.0
      %422 = vmatpush1.msra.mxu0 0.0
      %423 = vmatprep.subr.mxu0 0.0
      %424 = vmatpush1.msra.mxu0 0.0
      %425 = vmatprep.subr.mxu0 0.0
      %426 = vmatpush1.msra.mxu0 0.0
      %427 = vmatprep.subr.mxu0 0.0
      %428 = vmatpush1.msra.mxu0 0.0
      %429 = vmatprep.subr.mxu0 0.0
      %430 = vmatpush1.msra.mxu0 0.0
      %431 = vmatprep.subr.mxu0 0.0
      %432 = vmatpush1.msra.mxu0 0.0
      %433 = vmatprep.subr.mxu0 0.0
      %434 = vmatpush1.msra.mxu0 0.0
      %435 = vmatprep.subr.mxu0 0.0
      %436 = vmatpush1.msra.mxu0 0.0
      %437 = vmatprep.subr.mxu0 0.0
      %438 = vmatpush1.msra.mxu0 0.0
      %439 = vmatprep.subr.mxu0 0.0
      %440 = vmatpush1.msra.mxu0 0.0
      %441 = vmatprep.subr.mxu0 0.0
      %442 = vmatpush1.msra.mxu0 0.0
      %443 = vmatprep.subr.mxu0 0.0
      %444 = vmatpush1.msra.mxu0 0.0
      %445 = vmatprep.subr.mxu0 0.0
      %446 = vmatpush1.msra.mxu0 0.0
      %447 = vmatprep.subr.mxu0 0.0
      %448 = vmatpush1.msra.mxu0 0.0
      %449 = vmatprep.subr.mxu0 0.0
      %450 = vmatpush1.msra.mxu0 0.0
      %451 = vmatprep.subr.mxu0 0.0
      %452 = vmatpush1.msra.mxu0 0.0
      %453 = vmatprep.mubr.f32.mxu0 0.0
      %454 = vmatmul.mubr.f32.gmra.mrb[0].mxu0 %v387
      %v455 = vpop.f32.mrb[0].mxu0
      %v456 = vadd.f32 0.0, %v455
      %v457 = vpop.f32.mrb[0].mxu0
      %458 = vdwg.mxu0
      %v459 = vmax.f32 %v456, 0.0
      %v460 = vld [vmem:[%s3] sm:$0xff]
      %vm461 = vcmask 64512
      %v463 = vsel %vm461, %v459, 0
      %465 = vmatprep.subr.mxu0 0.0
      %466 = vmatpush1.msra.mxu0 %v460
      %467 = vmatprep.subr.mxu0 0.0
      %468 = vmatpush1.msra.mxu0 0.0
      %469 = vmatprep.subr.mxu0 0.0
      %470 = vmatpush1.msra.mxu0 0.0
      %471 = vmatprep.subr.mxu0 0.0
      %472 = vmatpush1.msra.mxu0 0.0
      %473 = vmatprep.subr.mxu0 0.0
      %474 = vmatpush1.msra.mxu0 0.0
      %475 = vmatprep.subr.mxu0 0.0
      %476 = vmatpush1.msra.mxu0 0.0
      %477 = vmatprep.subr.mxu0 0.0
      %478 = vmatpush1.msra.mxu0 0.0
      %479 = vmatprep.subr.mxu0 0.0
      %480 = vmatpush1.msra.mxu0 0.0
      %481 = vmatprep.subr.mxu0 0.0
      %482 = vmatpush1.msra.mxu0 0.0
      %483 = vmatprep.subr.mxu0 0.0
      %484 = vmatpush1.msra.mxu0 0.0
      %485 = vmatprep.subr.mxu0 0.0
      %486 = vmatpush1.msra.mxu0 0.0
      %487 = vmatprep.subr.mxu0 0.0
      %488 = vmatpush1.msra.mxu0 0.0
      %489 = vmatprep.subr.mxu0 0.0
      %490 = vmatpush1.msra.mxu0 0.0
      %491 = vmatprep.subr.mxu0 0.0
      %492 = vmatpush1.msra.mxu0 0.0
      %493 = vmatprep.subr.mxu0 0.0
      %494 = vmatpush1.msra.mxu0 0.0
      %495 = vmatprep.subr.mxu0 0.0
      %496 = vmatpush1.msra.mxu0 0.0
      %497 = vmatprep.subr.mxu0 0.0
      %498 = vmatpush1.msra.mxu0 0.0
      %499 = vmatprep.subr.mxu0 0.0
      %500 = vmatpush1.msra.mxu0 0.0
      %501 = vmatprep.subr.mxu0 0.0
      %502 = vmatpush1.msra.mxu0 0.0
      %503 = vmatprep.subr.mxu0 0.0
      %504 = vmatpush1.msra.mxu0 0.0
      %505 = vmatprep.subr.mxu0 0.0
      %506 = vmatpush1.msra.mxu0 0.0
      %507 = vmatprep.subr.mxu0 0.0
      %508 = vmatpush1.msra.mxu0 0.0
      %509 = vmatprep.subr.mxu0 0.0
      %510 = vmatpush1.msra.mxu0 0.0
      %511 = vmatprep.subr.mxu0 0.0
      %512 = vmatpush1.msra.mxu0 0.0
      %513 = vmatprep.subr.mxu0 0.0
      %514 = vmatpush1.msra.mxu0 0.0
      %515 = vmatprep.subr.mxu0 0.0
      %516 = vmatpush1.msra.mxu0 0.0
      %517 = vmatprep.subr.mxu0 0.0
      %518 = vmatpush1.msra.mxu0 0.0
      %519 = vmatprep.subr.mxu0 0.0
      %520 = vmatpush1.msra.mxu0 0.0
      %521 = vmatprep.subr.mxu0 0.0
      %522 = vmatpush1.msra.mxu0 0.0
      %523 = vmatprep.subr.mxu0 0.0
      %524 = vmatpush1.msra.mxu0 0.0
      %525 = vmatprep.subr.mxu0 0.0
      %526 = vmatpush1.msra.mxu0 0.0
      %527 = vmatprep.subr.mxu0 0.0
      %528 = vmatpush1.msra.mxu0 0.0
      %529 = vmatprep.mubr.f32.mxu0 0.0
      %530 = vmatmul.mubr.f32.gmra.mrb[0].mxu0 %v463
      %v531 = vpop.f32.mrb[0].mxu0
      %v532 = vadd.f32 0.0, %v531
      %v533 = vpop.f32.mrb[0].mxu0
      %534 = vdwg.mxu0
      %v535 = vxor.u32 %v532, 2147483648
      %v536 = vmul.f32 %v535, 1.442695
      %v537 = vpow.pop %v536
      %v538 = vadd.f32 %v537, 1.0
      %v539 = vrcp.pop %v538
      %v540 = vmul.f32 1.0, %v539
      %v541 = vshra.s32 %v278, 1
      %v542 = vshra.s32 %v279, 1
      %v543 = vshra.s32 %v280, 1
      %v544 = vshra.s32 %v281, 1
      %v545 = vshra.s32 %v282, 1
      %v546 = vshra.s32 %v283, 1
      %v547 = vshra.s32 %v284, 1
      %v548 = vshra.s32 %v285, 1
      %v549 = vshra.s32 %v286, 1
      %v550 = vshra.s32 %v287, 1
      %v551 = vshra.s32 %v288, 1
      %v552 = vshra.s32 %v289, 1
      %v553 = vshra.s32 %v290, 1
      %v554 = vshra.s32 %v291, 1
      %v555 = vshra.s32 %v292, 1
      %v556 = vshra.s32 %v293, 1
      %v557 = vshra.s32 %v294, 1
      %v558 = vshra.s32 %v295, 1
      %v559 = vshra.s32 %v296, 1
      %v560 = vshra.s32 %v297, 1
      %v561 = vshra.s32 %v298, 1
      %v562 = vshra.s32 %v299, 1
      %v563 = vshra.s32 %v300, 1
      %v564 = vshra.s32 %v301, 1
      %v565 = vshra.s32 %v302, 1
      %v566 = vshra.s32 %v303, 1
      %v567 = vshra.s32 %v304, 1
      %v568 = vshra.s32 %v305, 1
      %v569 = vshra.s32 %v306, 1
      %v570 = vshra.s32 %v307, 1
      %v571 = vshra.s32 %v308, 1
      %v572 = vshra.s32 %v309, 1
      %v573 = vshra.s32 %v278, 2
      %v574 = vshra.s32 %v279, 2
      %v575 = vshra.s32 %v280, 2
      %v576 = vshra.s32 %v281, 2
      %v577 = vshra.s32 %v282, 2
      %v578 = vshra.s32 %v283, 2
      %v579 = vshra.s32 %v284, 2
      %v580 = vshra.s32 %v285, 2
      %v581 = vshra.s32 %v286, 2
      %v582 = vshra.s32 %v287, 2
      %v583 = vshra.s32 %v288, 2
      %v584 = vshra.s32 %v289, 2
      %v585 = vshra.s32 %v290, 2
      %v586 = vshra.s32 %v291, 2
      %v587 = vshra.s32 %v292, 2
      %v588 = vshra.s32 %v293, 2
      %v589 = vshra.s32 %v294, 2
      %v590 = vshra.s32 %v295, 2
      %v591 = vshra.s32 %v296, 2
      %v592 = vshra.s32 %v297, 2
      %v593 = vshra.s32 %v298, 2
      %v594 = vshra.s32 %v299, 2
      %v595 = vshra.s32 %v300, 2
      %v596 = vshra.s32 %v301, 2
      %v597 = vshra.s32 %v302, 2
      %v598 = vshra.s32 %v303, 2
      %v599 = vshra.s32 %v304, 2
      %v600 = vshra.s32 %v305, 2
      %v601 = vshra.s32 %v306, 2
      %v602 = vshra.s32 %v307, 2
      %v603 = vshra.s32 %v308, 2
      %v604 = vshra.s32 %v309, 2
      %v605 = vshra.s32 %v278, 3
      %v606 = vshra.s32 %v279, 3
      %v607 = vshra.s32 %v280, 3
      %v608 = vshra.s32 %v281, 3
      %v609 = vshra.s32 %v282, 3
      %v610 = vshra.s32 %v283, 3
      %v611 = vshra.s32 %v284, 3
      %v612 = vshra.s32 %v285, 3
      %v613 = vshra.s32 %v286, 3
      %v614 = vshra.s32 %v287, 3
      %v615 = vshra.s32 %v288, 3
      %v616 = vshra.s32 %v289, 3
      %v617 = vshra.s32 %v290, 3
      %v618 = vshra.s32 %v291, 3
      %v619 = vshra.s32 %v292, 3
      %v620 = vshra.s32 %v293, 3
      %v621 = vshra.s32 %v294, 3
      %v622 = vshra.s32 %v295, 3
      %v623 = vshra.s32 %v296, 3
      %v624 = vshra.s32 %v297, 3
      %v625 = vshra.s32 %v298, 3
      %v626 = vshra.s32 %v299, 3
      %v627 = vshra.s32 %v300, 3
      %v628 = vshra.s32 %v301, 3
      %v629 = vshra.s32 %v302, 3
      %v630 = vshra.s32 %v303, 3
      %v631 = vshra.s32 %v304, 3
      %v632 = vshra.s32 %v305, 3
      %v633 = vshra.s32 %v306, 3
      %v634 = vshra.s32 %v307, 3
      %v635 = vshra.s32 %v308, 3
      %v636 = vshra.s32 %v309, 3
      %v637 = vshra.s32 %v278, 4
      %v638 = vshra.s32 %v279, 4
      %v639 = vshra.s32 %v280, 4
      %v640 = vshra.s32 %v281, 4
      %v641 = vshra.s32 %v282, 4
      %v642 = vshra.s32 %v283, 4
      %v643 = vshra.s32 %v284, 4
      %v644 = vshra.s32 %v285, 4
      %v645 = vshra.s32 %v286, 4
      %v646 = vshra.s32 %v287, 4
      %v647 = vshra.s32 %v288, 4
      %v648 = vshra.s32 %v289, 4
      %v649 = vshra.s32 %v290, 4
      %v650 = vshra.s32 %v291, 4
      %v651 = vshra.s32 %v292, 4
      %v652 = vshra.s32 %v293, 4
      %v653 = vshra.s32 %v294, 4
      %v654 = vshra.s32 %v295, 4
      %v655 = vshra.s32 %v296, 4
      %v656 = vshra.s32 %v297, 4
      %v657 = vshra.s32 %v298, 4
      %v658 = vshra.s32 %v299, 4
      %v659 = vshra.s32 %v300, 4
      %v660 = vshra.s32 %v301, 4
      %v661 = vshra.s32 %v302, 4
      %v662 = vshra.s32 %v303, 4
      %v663 = vshra.s32 %v304, 4
      %v664 = vshra.s32 %v305, 4
      %v665 = vshra.s32 %v306, 4
      %v666 = vshra.s32 %v307, 4
      %v667 = vshra.s32 %v308, 4
      %v668 = vshra.s32 %v309, 4
      %v669 = vshra.s32 %v278, 5
      %v670 = vshra.s32 %v279, 5
      %v671 = vshra.s32 %v280, 5
      %v672 = vshra.s32 %v281, 5
      %v673 = vshra.s32 %v282, 5
      %v674 = vshra.s32 %v283, 5
      %v675 = vshra.s32 %v284, 5
      %v676 = vshra.s32 %v285, 5
      %v677 = vshra.s32 %v286, 5
      %v678 = vshra.s32 %v287, 5
      %v679 = vshra.s32 %v288, 5
      %v680 = vshra.s32 %v289, 5
      %v681 = vshra.s32 %v290, 5
      %v682 = vshra.s32 %v291, 5
      %v683 = vshra.s32 %v292, 5
      %v684 = vshra.s32 %v293, 5
      %v685 = vshra.s32 %v294, 5
      %v686 = vshra.s32 %v295, 5
      %v687 = vshra.s32 %v296, 5
      %v688 = vshra.s32 %v297, 5
      %v689 = vshra.s32 %v298, 5
      %v690 = vshra.s32 %v299, 5
      %v691 = vshra.s32 %v300, 5
      %v692 = vshra.s32 %v301, 5
      %v693 = vshra.s32 %v302, 5
      %v694 = vshra.s32 %v303, 5
      %v695 = vshra.s32 %v304, 5
      %v696 = vshra.s32 %v305, 5
      %v697 = vshra.s32 %v306, 5
      %v698 = vshra.s32 %v307, 5
      %v699 = vshra.s32 %v308, 5
      %v700 = vshra.s32 %v309, 5
      %v701 = vshra.s32 %v278, 6
      %v702 = vshra.s32 %v279, 6
      %v703 = vshra.s32 %v280, 6
      %v704 = vshra.s32 %v281, 6
      %v705 = vshra.s32 %v282, 6
      %v706 = vshra.s32 %v283, 6
      %v707 = vshra.s32 %v284, 6
      %v708 = vshra.s32 %v285, 6
      %v709 = vshra.s32 %v286, 6
      %v710 = vshra.s32 %v287, 6
      %v711 = vshra.s32 %v288, 6
      %v712 = vshra.s32 %v289, 6
      %v713 = vshra.s32 %v290, 6
      %v714 = vshra.s32 %v291, 6
      %v715 = vshra.s32 %v292, 6
      %v716 = vshra.s32 %v293, 6
      %v717 = vshra.s32 %v294, 6
      %v718 = vshra.s32 %v295, 6
      %v719 = vshra.s32 %v296, 6
      %v720 = vshra.s32 %v297, 6
      %v721 = vshra.s32 %v298, 6
      %v722 = vshra.s32 %v299, 6
      %v723 = vshra.s32 %v300, 6
      %v724 = vshra.s32 %v301, 6
      %v725 = vshra.s32 %v302, 6
      %v726 = vshra.s32 %v303, 6
      %v727 = vshra.s32 %v304, 6
      %v728 = vshra.s32 %v305, 6
      %v729 = vshra.s32 %v306, 6
      %v730 = vshra.s32 %v307, 6
      %v731 = vshra.s32 %v308, 6
      %v732 = vshra.s32 %v309, 6
      %v733 = vshra.s32 %v278, 7
      %v734 = vshra.s32 %v279, 7
      %v735 = vshra.s32 %v280, 7
      %v736 = vshra.s32 %v281, 7
      %v737 = vshra.s32 %v282, 7
      %v738 = vshra.s32 %v283, 7
      %v739 = vshra.s32 %v284, 7
      %v740 = vshra.s32 %v285, 7
      %v741 = vshra.s32 %v286, 7
      %v742 = vshra.s32 %v287, 7
      %v743 = vshra.s32 %v288, 7
      %v744 = vshra.s32 %v289, 7
      %v745 = vshra.s32 %v290, 7
      %v746 = vshra.s32 %v291, 7
      %v747 = vshra.s32 %v292, 7
      %v748 = vshra.s32 %v293, 7
      %v749 = vshra.s32 %v294, 7
      %v750 = vshra.s32 %v295, 7
      %v751 = vshra.s32 %v296, 7
      %v752 = vshra.s32 %v297, 7
      %v753 = vshra.s32 %v298, 7
      %v754 = vshra.s32 %v299, 7
      %v755 = vshra.s32 %v300, 7
      %v756 = vshra.s32 %v301, 7
      %v757 = vshra.s32 %v302, 7
      %v758 = vshra.s32 %v303, 7
      %v759 = vshra.s32 %v304, 7
      %v760 = vshra.s32 %v305, 7
      %v761 = vshra.s32 %v306, 7
      %v762 = vshra.s32 %v307, 7
      %v763 = vshra.s32 %v308, 7
      %v764 = vshra.s32 %v309, 7
      %v765 = vshra.s32 %v278, 8
      %v766 = vshra.s32 %v279, 8
      %v767 = vshra.s32 %v280, 8
      %v768 = vshra.s32 %v281, 8
      %v769 = vshra.s32 %v282, 8
      %v770 = vshra.s32 %v283, 8
      %v771 = vshra.s32 %v284, 8
      %v772 = vshra.s32 %v285, 8
      %v773 = vshra.s32 %v286, 8
      %v774 = vshra.s32 %v287, 8
      %v775 = vshra.s32 %v288, 8
      %v776 = vshra.s32 %v289, 8
      %v777 = vshra.s32 %v290, 8
      %v778 = vshra.s32 %v291, 8
      %v779 = vshra.s32 %v292, 8
      %v780 = vshra.s32 %v293, 8
      %v781 = vshra.s32 %v294, 8
      %v782 = vshra.s32 %v295, 8
      %v783 = vshra.s32 %v296, 8
      %v784 = vshra.s32 %v297, 8
      %v785 = vshra.s32 %v298, 8
      %v786 = vshra.s32 %v299, 8
      %v787 = vshra.s32 %v300, 8
      %v788 = vshra.s32 %v301, 8
      %v789 = vshra.s32 %v302, 8
      %v790 = vshra.s32 %v303, 8
      %v791 = vshra.s32 %v304, 8
      %v792 = vshra.s32 %v305, 8
      %v793 = vshra.s32 %v306, 8
      %v794 = vshra.s32 %v307, 8
      %v795 = vshra.s32 %v308, 8
      %v796 = vshra.s32 %v309, 8
      %v797 = vshra.s32 %v278, 9
      %v798 = vshra.s32 %v279, 9
      %v799 = vshra.s32 %v280, 9
      %v800 = vshra.s32 %v281, 9
      %v801 = vshra.s32 %v282, 9
      %v802 = vshra.s32 %v283, 9
      %v803 = vshra.s32 %v284, 9
      %v804 = vshra.s32 %v285, 9
      %v805 = vshra.s32 %v286, 9
      %v806 = vshra.s32 %v287, 9
      %v807 = vshra.s32 %v288, 9
      %v808 = vshra.s32 %v289, 9
      %v809 = vshra.s32 %v290, 9
      %v810 = vshra.s32 %v291, 9
      %v811 = vshra.s32 %v292, 9
      %v812 = vshra.s32 %v293, 9
      %v813 = vshra.s32 %v294, 9
      %v814 = vshra.s32 %v295, 9
      %v815 = vshra.s32 %v296, 9
      %v816 = vshra.s32 %v297, 9
      %v817 = vshra.s32 %v298, 9
      %v818 = vshra.s32 %v299, 9
      %v819 = vshra.s32 %v300, 9
      %v820 = vshra.s32 %v301, 9
      %v821 = vshra.s32 %v302, 9
      %v822 = vshra.s32 %v303, 9
      %v823 = vshra.s32 %v304, 9
      %v824 = vshra.s32 %v305, 9
      %v825 = vshra.s32 %v306, 9
      %v826 = vshra.s32 %v307, 9
      %v827 = vshra.s32 %v308, 9
      %v828 = vshra.s32 %v309, 9
      %v829 = vand.u32 %v278, 1
      %v830 = vand.u32 %v279, 1
      %v831 = vand.u32 %v280, 1
      %v832 = vand.u32 %v281, 1
      %v833 = vand.u32 %v282, 1
      %v834 = vand.u32 %v283, 1
      %v835 = vand.u32 %v284, 1
      %v836 = vand.u32 %v285, 1
      %v837 = vand.u32 %v286, 1
      %v838 = vand.u32 %v287, 1
      %v839 = vand.u32 %v288, 1
      %v840 = vand.u32 %v289, 1
      %v841 = vand.u32 %v290, 1
      %v842 = vand.u32 %v291, 1
      %v843 = vand.u32 %v292, 1
      %v844 = vand.u32 %v293, 1
      %v845 = vand.u32 %v294, 1
      %v846 = vand.u32 %v295, 1
      %v847 = vand.u32 %v296, 1
      %v848 = vand.u32 %v297, 1
      %v849 = vand.u32 %v298, 1
      %v850 = vand.u32 %v299, 1
      %v851 = vand.u32 %v300, 1
      %v852 = vand.u32 %v301, 1
      %v853 = vand.u32 %v302, 1
      %v854 = vand.u32 %v303, 1
      %v855 = vand.u32 %v304, 1
      %v856 = vand.u32 %v305, 1
      %v857 = vand.u32 %v306, 1
      %v858 = vand.u32 %v307, 1
      %v859 = vand.u32 %v308, 1
      %v860 = vand.u32 %v309, 1
      %v861 = vand.u32 %v541, 1
      %v862 = vand.u32 %v542, 1
      %v863 = vand.u32 %v543, 1
      %v864 = vand.u32 %v544, 1
      %v865 = vand.u32 %v545, 1
      %v866 = vand.u32 %v546, 1
      %v867 = vand.u32 %v547, 1
      %v868 = vand.u32 %v548, 1
      %v869 = vand.u32 %v549, 1
      %v870 = vand.u32 %v550, 1
      %v871 = vand.u32 %v551, 1
      %v872 = vand.u32 %v552, 1
      %v873 = vand.u32 %v553, 1
      %v874 = vand.u32 %v554, 1
      %v875 = vand.u32 %v555, 1
      %v876 = vand.u32 %v556, 1
      %v877 = vand.u32 %v557, 1
      %v878 = vand.u32 %v558, 1
      %v879 = vand.u32 %v559, 1
      %v880 = vand.u32 %v560, 1
      %v881 = vand.u32 %v561, 1
      %v882 = vand.u32 %v562, 1
      %v883 = vand.u32 %v563, 1
      %v884 = vand.u32 %v564, 1
      %v885 = vand.u32 %v565, 1
      %v886 = vand.u32 %v566, 1
      %v887 = vand.u32 %v567, 1
      %v888 = vand.u32 %v568, 1
      %v889 = vand.u32 %v569, 1
      %v890 = vand.u32 %v570, 1
      %v891 = vand.u32 %v571, 1
      %v892 = vand.u32 %v572, 1
      %v893 = vand.u32 %v573, 1
      %v894 = vand.u32 %v574, 1
      %v895 = vand.u32 %v575, 1
      %v896 = vand.u32 %v576, 1
      %v897 = vand.u32 %v577, 1
      %v898 = vand.u32 %v578, 1
      %v899 = vand.u32 %v579, 1
      %v900 = vand.u32 %v580, 1
      %v901 = vand.u32 %v581, 1
      %v902 = vand.u32 %v582, 1
      %v903 = vand.u32 %v583, 1
      %v904 = vand.u32 %v584, 1
      %v905 = vand.u32 %v585, 1
      %v906 = vand.u32 %v586, 1
      %v907 = vand.u32 %v587, 1
      %v908 = vand.u32 %v588, 1
      %v909 = vand.u32 %v589, 1
      %v910 = vand.u32 %v590, 1
      %v911 = vand.u32 %v591, 1
      %v912 = vand.u32 %v592, 1
      %v913 = vand.u32 %v593, 1
      %v914 = vand.u32 %v594, 1
      %v915 = vand.u32 %v595, 1
      %v916 = vand.u32 %v596, 1
      %v917 = vand.u32 %v597, 1
      %v918 = vand.u32 %v598, 1
      %v919 = vand.u32 %v599, 1
      %v920 = vand.u32 %v600, 1
      %v921 = vand.u32 %v601, 1
      %v922 = vand.u32 %v602, 1
      %v923 = vand.u32 %v603, 1
      %v924 = vand.u32 %v604, 1
      %v925 = vand.u32 %v605, 1
      %v926 = vand.u32 %v606, 1
      %v927 = vand.u32 %v607, 1
      %v928 = vand.u32 %v608, 1
      %v929 = vand.u32 %v609, 1
      %v930 = vand.u32 %v610, 1
      %v931 = vand.u32 %v611, 1
      %v932 = vand.u32 %v612, 1
      %v933 = vand.u32 %v613, 1
      %v934 = vand.u32 %v614, 1
      %v935 = vand.u32 %v615, 1
      %v936 = vand.u32 %v616, 1
      %v937 = vand.u32 %v617, 1
      %v938 = vand.u32 %v618, 1
      %v939 = vand.u32 %v619, 1
      %v940 = vand.u32 %v620, 1
      %v941 = vand.u32 %v621, 1
      %v942 = vand.u32 %v622, 1
      %v943 = vand.u32 %v623, 1
      %v944 = vand.u32 %v624, 1
      %v945 = vand.u32 %v625, 1
      %v946 = vand.u32 %v626, 1
      %v947 = vand.u32 %v627, 1
      %v948 = vand.u32 %v628, 1
      %v949 = vand.u32 %v629, 1
      %v950 = vand.u32 %v630, 1
      %v951 = vand.u32 %v631, 1
      %v952 = vand.u32 %v632, 1
      %v953 = vand.u32 %v633, 1
      %v954 = vand.u32 %v634, 1
      %v955 = vand.u32 %v635, 1
      %v956 = vand.u32 %v636, 1
      %v957 = vand.u32 %v637, 1
      %v958 = vand.u32 %v638, 1
      %v959 = vand.u32 %v639, 1
      %v960 = vand.u32 %v640, 1
      %v961 = vand.u32 %v641, 1
      %v962 = vand.u32 %v642, 1
      %v963 = vand.u32 %v643, 1
      %v964 = vand.u32 %v644, 1
      %v965 = vand.u32 %v645, 1
      %v966 = vand.u32 %v646, 1
      %v967 = vand.u32 %v647, 1
      %v968 = vand.u32 %v648, 1
      %v969 = vand.u32 %v649, 1
      %v970 = vand.u32 %v650, 1
      %v971 = vand.u32 %v651, 1
      %v972 = vand.u32 %v652, 1
      %v973 = vand.u32 %v653, 1
      %v974 = vand.u32 %v654, 1
      %v975 = vand.u32 %v655, 1
      %v976 = vand.u32 %v656, 1
      %v977 = vand.u32 %v657, 1
      %v978 = vand.u32 %v658, 1
      %v979 = vand.u32 %v659, 1
      %v980 = vand.u32 %v660, 1
      %v981 = vand.u32 %v661, 1
      %v982 = vand.u32 %v662, 1
      %v983 = vand.u32 %v663, 1
      %v984 = vand.u32 %v664, 1
      %v985 = vand.u32 %v665, 1
      %v986 = vand.u32 %v666, 1
      %v987 = vand.u32 %v667, 1
      %v988 = vand.u32 %v668, 1
      %v989 = vand.u32 %v669, 1
      %v990 = vand.u32 %v670, 1
      %v991 = vand.u32 %v671, 1
      %v992 = vand.u32 %v672, 1
      %v993 = vand.u32 %v673, 1
      %v994 = vand.u32 %v674, 1
      %v995 = vand.u32 %v675, 1
      %v996 = vand.u32 %v676, 1
      %v997 = vand.u32 %v677, 1
      %v998 = vand.u32 %v678, 1
      %v999 = vand.u32 %v679, 1
      %v1000 = vand.u32 %v680, 1
      %v1001 = vand.u32 %v681, 1
      %v1002 = vand.u32 %v682, 1
      %v1003 = vand.u32 %v683, 1
      %v1004 = vand.u32 %v684, 1
      %v1005 = vand.u32 %v685, 1
      %v1006 = vand.u32 %v686, 1
      %v1007 = vand.u32 %v687, 1
      %v1008 = vand.u32 %v688, 1
      %v1009 = vand.u32 %v689, 1
      %v1010 = vand.u32 %v690, 1
      %v1011 = vand.u32 %v691, 1
      %v1012 = vand.u32 %v692, 1
      %v1013 = vand.u32 %v693, 1
      %v1014 = vand.u32 %v694, 1
      %v1015 = vand.u32 %v695, 1
      %v1016 = vand.u32 %v696, 1
      %v1017 = vand.u32 %v697, 1
      %v1018 = vand.u32 %v698, 1
      %v1019 = vand.u32 %v699, 1
      %v1020 = vand.u32 %v700, 1
      %v1021 = vand.u32 %v701, 1
      %v1022 = vand.u32 %v702, 1
      %v1023 = vand.u32 %v703, 1
      %v1024 = vand.u32 %v704, 1
      %v1025 = vand.u32 %v705, 1
      %v1026 = vand.u32 %v706, 1
      %v1027 = vand.u32 %v707, 1
      %v1028 = vand.u32 %v708, 1
      %v1029 = vand.u32 %v709, 1
      %v1030 = vand.u32 %v710, 1
      %v1031 = vand.u32 %v711, 1
      %v1032 = vand.u32 %v712, 1
      %v1033 = vand.u32 %v713, 1
      %v1034 = vand.u32 %v714, 1
      %v1035 = vand.u32 %v715, 1
      %v1036 = vand.u32 %v716, 1
      %v1037 = vand.u32 %v717, 1
      %v1038 = vand.u32 %v718, 1
      %v1039 = vand.u32 %v719, 1
      %v1040 = vand.u32 %v720, 1
      %v1041 = vand.u32 %v721, 1
      %v1042 = vand.u32 %v722, 1
      %v1043 = vand.u32 %v723, 1
      %v1044 = vand.u32 %v724, 1
      %v1045 = vand.u32 %v725, 1
      %v1046 = vand.u32 %v726, 1
      %v1047 = vand.u32 %v727, 1
      %v1048 = vand.u32 %v728, 1
      %v1049 = vand.u32 %v729, 1
      %v1050 = vand.u32 %v730, 1
      %v1051 = vand.u32 %v731, 1
      %v1052 = vand.u32 %v732, 1
      %v1053 = vand.u32 %v733, 1
      %v1054 = vand.u32 %v734, 1
      %v1055 = vand.u32 %v735, 1
      %v1056 = vand.u32 %v736, 1
      %v1057 = vand.u32 %v737, 1
      %v1058 = vand.u32 %v738, 1
      %v1059 = vand.u32 %v739, 1
      %v1060 = vand.u32 %v740, 1
      %v1061 = vand.u32 %v741, 1
      %v1062 = vand.u32 %v742, 1
      %v1063 = vand.u32 %v743, 1
      %v1064 = vand.u32 %v744, 1
      %v1065 = vand.u32 %v745, 1
      %v1066 = vand.u32 %v746, 1
      %v1067 = vand.u32 %v747, 1
      %v1068 = vand.u32 %v748, 1
      %v1069 = vand.u32 %v749, 1
      %v1070 = vand.u32 %v750, 1
      %v1071 = vand.u32 %v751, 1
      %v1072 = vand.u32 %v752, 1
      %v1073 = vand.u32 %v753, 1
      %v1074 = vand.u32 %v754, 1
      %v1075 = vand.u32 %v755, 1
      %v1076 = vand.u32 %v756, 1
      %v1077 = vand.u32 %v757, 1
      %v1078 = vand.u32 %v758, 1
      %v1079 = vand.u32 %v759, 1
      %v1080 = vand.u32 %v760, 1
      %v1081 = vand.u32 %v761, 1
      %v1082 = vand.u32 %v762, 1
      %v1083 = vand.u32 %v763, 1
      %v1084 = vand.u32 %v764, 1
      %v1085 = vand.u32 %v765, 1
      %v1086 = vand.u32 %v766, 1
      %v1087 = vand.u32 %v767, 1
      %v1088 = vand.u32 %v768, 1
      %v1089 = vand.u32 %v769, 1
      %v1090 = vand.u32 %v770, 1
      %v1091 = vand.u32 %v771, 1
      %v1092 = vand.u32 %v772, 1
      %v1093 = vand.u32 %v773, 1
      %v1094 = vand.u32 %v774, 1
      %v1095 = vand.u32 %v775, 1
      %v1096 = vand.u32 %v776, 1
      %v1097 = vand.u32 %v777, 1
      %v1098 = vand.u32 %v778, 1
      %v1099 = vand.u32 %v779, 1
      %v1100 = vand.u32 %v780, 1
      %v1101 = vand.u32 %v781, 1
      %v1102 = vand.u32 %v782, 1
      %v1103 = vand.u32 %v783, 1
      %v1104 = vand.u32 %v784, 1
      %v1105 = vand.u32 %v785, 1
      %v1106 = vand.u32 %v786, 1
      %v1107 = vand.u32 %v787, 1
      %v1108 = vand.u32 %v788, 1
      %v1109 = vand.u32 %v789, 1
      %v1110 = vand.u32 %v790, 1
      %v1111 = vand.u32 %v791, 1
      %v1112 = vand.u32 %v792, 1
      %v1113 = vand.u32 %v793, 1
      %v1114 = vand.u32 %v794, 1
      %v1115 = vand.u32 %v795, 1
      %v1116 = vand.u32 %v796, 1
      %v1117 = vand.u32 %v797, 1
      %v1118 = vand.u32 %v798, 1
      %v1119 = vand.u32 %v799, 1
      %v1120 = vand.u32 %v800, 1
      %v1121 = vand.u32 %v801, 1
      %v1122 = vand.u32 %v802, 1
      %v1123 = vand.u32 %v803, 1
      %v1124 = vand.u32 %v804, 1
      %v1125 = vand.u32 %v805, 1
      %v1126 = vand.u32 %v806, 1
      %v1127 = vand.u32 %v807, 1
      %v1128 = vand.u32 %v808, 1
      %v1129 = vand.u32 %v809, 1
      %v1130 = vand.u32 %v810, 1
      %v1131 = vand.u32 %v811, 1
      %v1132 = vand.u32 %v812, 1
      %v1133 = vand.u32 %v813, 1
      %v1134 = vand.u32 %v814, 1
      %v1135 = vand.u32 %v815, 1
      %v1136 = vand.u32 %v816, 1
      %v1137 = vand.u32 %v817, 1
      %v1138 = vand.u32 %v818, 1
      %v1139 = vand.u32 %v819, 1
      %v1140 = vand.u32 %v820, 1
      %v1141 = vand.u32 %v821, 1
      %v1142 = vand.u32 %v822, 1
      %v1143 = vand.u32 %v823, 1
      %v1144 = vand.u32 %v824, 1
      %v1145 = vand.u32 %v825, 1
      %v1146 = vand.u32 %v826, 1
      %v1147 = vand.u32 %v827, 1
      %v1148 = vand.u32 %v828, 1
      %vm1149 = vcmp.ne.s32.totalorder %v829, 0
      %vm1150 = vcmp.ne.s32.totalorder %v830, 0
      %vm1151 = vcmp.ne.s32.totalorder %v831, 0
      %vm1152 = vcmp.ne.s32.totalorder %v832, 0
      %vm1153 = vcmp.ne.s32.totalorder %v833, 0
      %vm1154 = vcmp.ne.s32.totalorder %v834, 0
      %vm1155 = vcmp.ne.s32.totalorder %v835, 0
      %vm1156 = vcmp.ne.s32.totalorder %v836, 0
      %vm1157 = vcmp.ne.s32.totalorder %v837, 0
      %vm1158 = vcmp.ne.s32.totalorder %v838, 0
      %vm1159 = vcmp.ne.s32.totalorder %v839, 0
      %vm1160 = vcmp.ne.s32.totalorder %v840, 0
      %vm1161 = vcmp.ne.s32.totalorder %v841, 0
      %vm1162 = vcmp.ne.s32.totalorder %v842, 0
      %vm1163 = vcmp.ne.s32.totalorder %v843, 0
      %vm1164 = vcmp.ne.s32.totalorder %v844, 0
      %vm1165 = vcmp.ne.s32.totalorder %v845, 0
      %vm1166 = vcmp.ne.s32.totalorder %v846, 0
      %vm1167 = vcmp.ne.s32.totalorder %v847, 0
      %vm1168 = vcmp.ne.s32.totalorder %v848, 0
      %vm1169 = vcmp.ne.s32.totalorder %v849, 0
      %vm1170 = vcmp.ne.s32.totalorder %v850, 0
      %vm1171 = vcmp.ne.s32.totalorder %v851, 0
      %vm1172 = vcmp.ne.s32.totalorder %v852, 0
      %vm1173 = vcmp.ne.s32.totalorder %v853, 0
      %vm1174 = vcmp.ne.s32.totalorder %v854, 0
      %vm1175 = vcmp.ne.s32.totalorder %v855, 0
      %vm1176 = vcmp.ne.s32.totalorder %v856, 0
      %vm1177 = vcmp.ne.s32.totalorder %v857, 0
      %vm1178 = vcmp.ne.s32.totalorder %v858, 0
      %vm1179 = vcmp.ne.s32.totalorder %v859, 0
      %vm1180 = vcmp.ne.s32.totalorder %v860, 0
      %vm1181 = vcmp.ne.s32.totalorder %v861, 0
      %vm1182 = vcmp.ne.s32.totalorder %v862, 0
      %vm1183 = vcmp.ne.s32.totalorder %v863, 0
      %vm1184 = vcmp.ne.s32.totalorder %v864, 0
      %vm1185 = vcmp.ne.s32.totalorder %v865, 0
      %vm1186 = vcmp.ne.s32.totalorder %v866, 0
      %vm1187 = vcmp.ne.s32.totalorder %v867, 0
      %vm1188 = vcmp.ne.s32.totalorder %v868, 0
      %vm1189 = vcmp.ne.s32.totalorder %v869, 0
      %vm1190 = vcmp.ne.s32.totalorder %v870, 0
      %vm1191 = vcmp.ne.s32.totalorder %v871, 0
      %vm1192 = vcmp.ne.s32.totalorder %v872, 0
      %vm1193 = vcmp.ne.s32.totalorder %v873, 0
      %vm1194 = vcmp.ne.s32.totalorder %v874, 0
      %vm1195 = vcmp.ne.s32.totalorder %v875, 0
      %vm1196 = vcmp.ne.s32.totalorder %v876, 0
      %vm1197 = vcmp.ne.s32.totalorder %v877, 0
      %vm1198 = vcmp.ne.s32.totalorder %v878, 0
      %vm1199 = vcmp.ne.s32.totalorder %v879, 0
      %vm1200 = vcmp.ne.s32.totalorder %v880, 0
      %vm1201 = vcmp.ne.s32.totalorder %v881, 0
      %vm1202 = vcmp.ne.s32.totalorder %v882, 0
      %vm1203 = vcmp.ne.s32.totalorder %v883, 0
      %vm1204 = vcmp.ne.s32.totalorder %v884, 0
      %vm1205 = vcmp.ne.s32.totalorder %v885, 0
      %vm1206 = vcmp.ne.s32.totalorder %v886, 0
      %vm1207 = vcmp.ne.s32.totalorder %v887, 0
      %vm1208 = vcmp.ne.s32.totalorder %v888, 0
      %vm1209 = vcmp.ne.s32.totalorder %v889, 0
      %vm1210 = vcmp.ne.s32.totalorder %v890, 0
      %vm1211 = vcmp.ne.s32.totalorder %v891, 0
      %vm1212 = vcmp.ne.s32.totalorder %v892, 0
      %vm1213 = vcmp.ne.s32.totalorder %v893, 0
      %vm1214 = vcmp.ne.s32.totalorder %v894, 0
      %vm1215 = vcmp.ne.s32.totalorder %v895, 0
      %vm1216 = vcmp.ne.s32.totalorder %v896, 0
      %vm1217 = vcmp.ne.s32.totalorder %v897, 0
      %vm1218 = vcmp.ne.s32.totalorder %v898, 0
      %vm1219 = vcmp.ne.s32.totalorder %v899, 0
      %vm1220 = vcmp.ne.s32.totalorder %v900, 0
      %vm1221 = vcmp.ne.s32.totalorder %v901, 0
      %vm1222 = vcmp.ne.s32.totalorder %v902, 0
      %vm1223 = vcmp.ne.s32.totalorder %v903, 0
      %vm1224 = vcmp.ne.s32.totalorder %v904, 0
      %vm1225 = vcmp.ne.s32.totalorder %v905, 0
      %vm1226 = vcmp.ne.s32.totalorder %v906, 0
      %vm1227 = vcmp.ne.s32.totalorder %v907, 0
      %vm1228 = vcmp.ne.s32.totalorder %v908, 0
      %vm1229 = vcmp.ne.s32.totalorder %v909, 0
      %vm1230 = vcmp.ne.s32.totalorder %v910, 0
      %vm1231 = vcmp.ne.s32.totalorder %v911, 0
      %vm1232 = vcmp.ne.s32.totalorder %v912, 0
      %vm1233 = vcmp.ne.s32.totalorder %v913, 0
      %vm1234 = vcmp.ne.s32.totalorder %v914, 0
      %vm1235 = vcmp.ne.s32.totalorder %v915, 0
      %vm1236 = vcmp.ne.s32.totalorder %v916, 0
      %vm1237 = vcmp.ne.s32.totalorder %v917, 0
      %vm1238 = vcmp.ne.s32.totalorder %v918, 0
      %vm1239 = vcmp.ne.s32.totalorder %v919, 0
      %vm1240 = vcmp.ne.s32.totalorder %v920, 0
      %vm1241 = vcmp.ne.s32.totalorder %v921, 0
      %vm1242 = vcmp.ne.s32.totalorder %v922, 0
      %vm1243 = vcmp.ne.s32.totalorder %v923, 0
      %vm1244 = vcmp.ne.s32.totalorder %v924, 0
      %vm1245 = vcmp.ne.s32.totalorder %v925, 0
      %vm1246 = vcmp.ne.s32.totalorder %v926, 0
      %vm1247 = vcmp.ne.s32.totalorder %v927, 0
      %vm1248 = vcmp.ne.s32.totalorder %v928, 0
      %vm1249 = vcmp.ne.s32.totalorder %v929, 0
      %vm1250 = vcmp.ne.s32.totalorder %v930, 0
      %vm1251 = vcmp.ne.s32.totalorder %v931, 0
      %vm1252 = vcmp.ne.s32.totalorder %v932, 0
      %vm1253 = vcmp.ne.s32.totalorder %v933, 0
      %vm1254 = vcmp.ne.s32.totalorder %v934, 0
      %vm1255 = vcmp.ne.s32.totalorder %v935, 0
      %vm1256 = vcmp.ne.s32.totalorder %v936, 0
      %vm1257 = vcmp.ne.s32.totalorder %v937, 0
      %vm1258 = vcmp.ne.s32.totalorder %v938, 0
      %vm1259 = vcmp.ne.s32.totalorder %v939, 0
      %vm1260 = vcmp.ne.s32.totalorder %v940, 0
      %vm1261 = vcmp.ne.s32.totalorder %v941, 0
      %vm1262 = vcmp.ne.s32.totalorder %v942, 0
      %vm1263 = vcmp.ne.s32.totalorder %v943, 0
      %vm1264 = vcmp.ne.s32.totalorder %v944, 0
      %vm1265 = vcmp.ne.s32.totalorder %v945, 0
      %vm1266 = vcmp.ne.s32.totalorder %v946, 0
      %vm1267 = vcmp.ne.s32.totalorder %v947, 0
      %vm1268 = vcmp.ne.s32.totalorder %v948, 0
      %vm1269 = vcmp.ne.s32.totalorder %v949, 0
      %vm1270 = vcmp.ne.s32.totalorder %v950, 0
      %vm1271 = vcmp.ne.s32.totalorder %v951, 0
      %vm1272 = vcmp.ne.s32.totalorder %v952, 0
      %vm1273 = vcmp.ne.s32.totalorder %v953, 0
      %vm1274 = vcmp.ne.s32.totalorder %v954, 0
      %vm1275 = vcmp.ne.s32.totalorder %v955, 0
      %vm1276 = vcmp.ne.s32.totalorder %v956, 0
      %vm1277 = vcmp.ne.s32.totalorder %v957, 0
      %vm1278 = vcmp.ne.s32.totalorder %v958, 0
      %vm1279 = vcmp.ne.s32.totalorder %v959, 0
      %vm1280 = vcmp.ne.s32.totalorder %v960, 0
      %vm1281 = vcmp.ne.s32.totalorder %v961, 0
      %vm1282 = vcmp.ne.s32.totalorder %v962, 0
      %vm1283 = vcmp.ne.s32.totalorder %v963, 0
      %vm1284 = vcmp.ne.s32.totalorder %v964, 0
      %vm1285 = vcmp.ne.s32.totalorder %v965, 0
      %vm1286 = vcmp.ne.s32.totalorder %v966, 0
      %vm1287 = vcmp.ne.s32.totalorder %v967, 0
      %vm1288 = vcmp.ne.s32.totalorder %v968, 0
      %vm1289 = vcmp.ne.s32.totalorder %v969, 0
      %vm1290 = vcmp.ne.s32.totalorder %v970, 0
      %vm1291 = vcmp.ne.s32.totalorder %v971, 0
      %vm1292 = vcmp.ne.s32.totalorder %v972, 0
      %vm1293 = vcmp.ne.s32.totalorder %v973, 0
      %vm1294 = vcmp.ne.s32.totalorder %v974, 0
      %vm1295 = vcmp.ne.s32.totalorder %v975, 0
      %vm1296 = vcmp.ne.s32.totalorder %v976, 0
      %vm1297 = vcmp.ne.s32.totalorder %v977, 0
      %vm1298 = vcmp.ne.s32.totalorder %v978, 0
      %vm1299 = vcmp.ne.s32.totalorder %v979, 0
      %vm1300 = vcmp.ne.s32.totalorder %v980, 0
      %vm1301 = vcmp.ne.s32.totalorder %v981, 0
      %vm1302 = vcmp.ne.s32.totalorder %v982, 0
      %vm1303 = vcmp.ne.s32.totalorder %v983, 0
      %vm1304 = vcmp.ne.s32.totalorder %v984, 0
      %vm1305 = vcmp.ne.s32.totalorder %v985, 0
      %vm1306 = vcmp.ne.s32.totalorder %v986, 0
      %vm1307 = vcmp.ne.s32.totalorder %v987, 0
      %vm1308 = vcmp.ne.s32.totalorder %v988, 0
      %vm1309 = vcmp.ne.s32.totalorder %v989, 0
      %vm1310 = vcmp.ne.s32.totalorder %v990, 0
      %vm1311 = vcmp.ne.s32.totalorder %v991, 0
      %vm1312 = vcmp.ne.s32.totalorder %v992, 0
      %vm1313 = vcmp.ne.s32.totalorder %v993, 0
      %vm1314 = vcmp.ne.s32.totalorder %v994, 0
      %vm1315 = vcmp.ne.s32.totalorder %v995, 0
      %vm1316 = vcmp.ne.s32.totalorder %v996, 0
      %vm1317 = vcmp.ne.s32.totalorder %v997, 0
      %vm1318 = vcmp.ne.s32.totalorder %v998, 0
      %vm1319 = vcmp.ne.s32.totalorder %v999, 0
      %vm1320 = vcmp.ne.s32.totalorder %v1000, 0
      %vm1321 = vcmp.ne.s32.totalorder %v1001, 0
      %vm1322 = vcmp.ne.s32.totalorder %v1002, 0
      %vm1323 = vcmp.ne.s32.totalorder %v1003, 0
      %vm1324 = vcmp.ne.s32.totalorder %v1004, 0
      %vm1325 = vcmp.ne.s32.totalorder %v1005, 0
      %vm1326 = vcmp.ne.s32.totalorder %v1006, 0
      %vm1327 = vcmp.ne.s32.totalorder %v1007, 0
      %vm1328 = vcmp.ne.s32.totalorder %v1008, 0
      %vm1329 = vcmp.ne.s32.totalorder %v1009, 0
      %vm1330 = vcmp.ne.s32.totalorder %v1010, 0
      %vm1331 = vcmp.ne.s32.totalorder %v1011, 0
      %vm1332 = vcmp.ne.s32.totalorder %v1012, 0
      %vm1333 = vcmp.ne.s32.totalorder %v1013, 0
      %vm1334 = vcmp.ne.s32.totalorder %v1014, 0
      %vm1335 = vcmp.ne.s32.totalorder %v1015, 0
      %vm1336 = vcmp.ne.s32.totalorder %v1016, 0
      %vm1337 = vcmp.ne.s32.totalorder %v1017, 0
      %vm1338 = vcmp.ne.s32.totalorder %v1018, 0
      %vm1339 = vcmp.ne.s32.totalorder %v1019, 0
      %vm1340 = vcmp.ne.s32.totalorder %v1020, 0
      %vm1341 = vcmp.ne.s32.totalorder %v1021, 0
      %vm1342 = vcmp.ne.s32.totalorder %v1022, 0
      %vm1343 = vcmp.ne.s32.totalorder %v1023, 0
      %vm1344 = vcmp.ne.s32.totalorder %v1024, 0
      %vm1345 = vcmp.ne.s32.totalorder %v1025, 0
      %vm1346 = vcmp.ne.s32.totalorder %v1026, 0
      %vm1347 = vcmp.ne.s32.totalorder %v1027, 0
      %vm1348 = vcmp.ne.s32.totalorder %v1028, 0
      %vm1349 = vcmp.ne.s32.totalorder %v1029, 0
      %vm1350 = vcmp.ne.s32.totalorder %v1030, 0
      %vm1351 = vcmp.ne.s32.totalorder %v1031, 0
      %vm1352 = vcmp.ne.s32.totalorder %v1032, 0
      %vm1353 = vcmp.ne.s32.totalorder %v1033, 0
      %vm1354 = vcmp.ne.s32.totalorder %v1034, 0
      %vm1355 = vcmp.ne.s32.totalorder %v1035, 0
      %vm1356 = vcmp.ne.s32.totalorder %v1036, 0
      %vm1357 = vcmp.ne.s32.totalorder %v1037, 0
      %vm1358 = vcmp.ne.s32.totalorder %v1038, 0
      %vm1359 = vcmp.ne.s32.totalorder %v1039, 0
      %vm1360 = vcmp.ne.s32.totalorder %v1040, 0
      %vm1361 = vcmp.ne.s32.totalorder %v1041, 0
      %vm1362 = vcmp.ne.s32.totalorder %v1042, 0
      %vm1363 = vcmp.ne.s32.totalorder %v1043, 0
      %vm1364 = vcmp.ne.s32.totalorder %v1044, 0
      %vm1365 = vcmp.ne.s32.totalorder %v1045, 0
      %vm1366 = vcmp.ne.s32.totalorder %v1046, 0
      %vm1367 = vcmp.ne.s32.totalorder %v1047, 0
      %vm1368 = vcmp.ne.s32.totalorder %v1048, 0
      %vm1369 = vcmp.ne.s32.totalorder %v1049, 0
      %vm1370 = vcmp.ne.s32.totalorder %v1050, 0
      %vm1371 = vcmp.ne.s32.totalorder %v1051, 0
      %vm1372 = vcmp.ne.s32.totalorder %v1052, 0
      %vm1373 = vcmp.ne.s32.totalorder %v1053, 0
      %vm1374 = vcmp.ne.s32.totalorder %v1054, 0
      %vm1375 = vcmp.ne.s32.totalorder %v1055, 0
      %vm1376 = vcmp.ne.s32.totalorder %v1056, 0
      %vm1377 = vcmp.ne.s32.totalorder %v1057, 0
      %vm1378 = vcmp.ne.s32.totalorder %v1058, 0
      %vm1379 = vcmp.ne.s32.totalorder %v1059, 0
      %vm1380 = vcmp.ne.s32.totalorder %v1060, 0
      %vm1381 = vcmp.ne.s32.totalorder %v1061, 0
      %vm1382 = vcmp.ne.s32.totalorder %v1062, 0
      %vm1383 = vcmp.ne.s32.totalorder %v1063, 0
      %vm1384 = vcmp.ne.s32.totalorder %v1064, 0
      %vm1385 = vcmp.ne.s32.totalorder %v1065, 0
      %vm1386 = vcmp.ne.s32.totalorder %v1066, 0
      %vm1387 = vcmp.ne.s32.totalorder %v1067, 0
      %vm1388 = vcmp.ne.s32.totalorder %v1068, 0
      %vm1389 = vcmp.ne.s32.totalorder %v1069, 0
      %vm1390 = vcmp.ne.s32.totalorder %v1070, 0
      %vm1391 = vcmp.ne.s32.totalorder %v1071, 0
      %vm1392 = vcmp.ne.s32.totalorder %v1072, 0
      %vm1393 = vcmp.ne.s32.totalorder %v1073, 0
      %vm1394 = vcmp.ne.s32.totalorder %v1074, 0
      %vm1395 = vcmp.ne.s32.totalorder %v1075, 0
      %vm1396 = vcmp.ne.s32.totalorder %v1076, 0
      %vm1397 = vcmp.ne.s32.totalorder %v1077, 0
      %vm1398 = vcmp.ne.s32.totalorder %v1078, 0
      %vm1399 = vcmp.ne.s32.totalorder %v1079, 0
      %vm1400 = vcmp.ne.s32.totalorder %v1080, 0
      %vm1401 = vcmp.ne.s32.totalorder %v1081, 0
      %vm1402 = vcmp.ne.s32.totalorder %v1082, 0
      %vm1403 = vcmp.ne.s32.totalorder %v1083, 0
      %vm1404 = vcmp.ne.s32.totalorder %v1084, 0
      %vm1405 = vcmp.ne.s32.totalorder %v1085, 0
      %vm1406 = vcmp.ne.s32.totalorder %v1086, 0
      %vm1407 = vcmp.ne.s32.totalorder %v1087, 0
      %vm1408 = vcmp.ne.s32.totalorder %v1088, 0
      %vm1409 = vcmp.ne.s32.totalorder %v1089, 0
      %vm1410 = vcmp.ne.s32.totalorder %v1090, 0
      %vm1411 = vcmp.ne.s32.totalorder %v1091, 0
      %vm1412 = vcmp.ne.s32.totalorder %v1092, 0
      %vm1413 = vcmp.ne.s32.totalorder %v1093, 0
      %vm1414 = vcmp.ne.s32.totalorder %v1094, 0
      %vm1415 = vcmp.ne.s32.totalorder %v1095, 0
      %vm1416 = vcmp.ne.s32.totalorder %v1096, 0
      %vm1417 = vcmp.ne.s32.totalorder %v1097, 0
      %vm1418 = vcmp.ne.s32.totalorder %v1098, 0
      %vm1419 = vcmp.ne.s32.totalorder %v1099, 0
      %vm1420 = vcmp.ne.s32.totalorder %v1100, 0
      %vm1421 = vcmp.ne.s32.totalorder %v1101, 0
      %vm1422 = vcmp.ne.s32.totalorder %v1102, 0
      %vm1423 = vcmp.ne.s32.totalorder %v1103, 0
      %vm1424 = vcmp.ne.s32.totalorder %v1104, 0
      %vm1425 = vcmp.ne.s32.totalorder %v1105, 0
      %vm1426 = vcmp.ne.s32.totalorder %v1106, 0
      %vm1427 = vcmp.ne.s32.totalorder %v1107, 0
      %vm1428 = vcmp.ne.s32.totalorder %v1108, 0
      %vm1429 = vcmp.ne.s32.totalorder %v1109, 0
      %vm1430 = vcmp.ne.s32.totalorder %v1110, 0
      %vm1431 = vcmp.ne.s32.totalorder %v1111, 0
      %vm1432 = vcmp.ne.s32.totalorder %v1112, 0
      %vm1433 = vcmp.ne.s32.totalorder %v1113, 0
      %vm1434 = vcmp.ne.s32.totalorder %v1114, 0
      %vm1435 = vcmp.ne.s32.totalorder %v1115, 0
      %vm1436 = vcmp.ne.s32.totalorder %v1116, 0
      %vm1437 = vcmp.ne.s32.totalorder %v1117, 0
      %vm1438 = vcmp.ne.s32.totalorder %v1118, 0
      %vm1439 = vcmp.ne.s32.totalorder %v1119, 0
      %vm1440 = vcmp.ne.s32.totalorder %v1120, 0
      %vm1441 = vcmp.ne.s32.totalorder %v1121, 0
      %vm1442 = vcmp.ne.s32.totalorder %v1122, 0
      %vm1443 = vcmp.ne.s32.totalorder %v1123, 0
      %vm1444 = vcmp.ne.s32.totalorder %v1124, 0
      %vm1445 = vcmp.ne.s32.totalorder %v1125, 0
      %vm1446 = vcmp.ne.s32.totalorder %v1126, 0
      %vm1447 = vcmp.ne.s32.totalorder %v1127, 0
      %vm1448 = vcmp.ne.s32.totalorder %v1128, 0
      %vm1449 = vcmp.ne.s32.totalorder %v1129, 0
      %vm1450 = vcmp.ne.s32.totalorder %v1130, 0
      %vm1451 = vcmp.ne.s32.totalorder %v1131, 0
      %vm1452 = vcmp.ne.s32.totalorder %v1132, 0
      %vm1453 = vcmp.ne.s32.totalorder %v1133, 0
      %vm1454 = vcmp.ne.s32.totalorder %v1134, 0
      %vm1455 = vcmp.ne.s32.totalorder %v1135, 0
      %vm1456 = vcmp.ne.s32.totalorder %v1136, 0
      %vm1457 = vcmp.ne.s32.totalorder %v1137, 0
      %vm1458 = vcmp.ne.s32.totalorder %v1138, 0
      %vm1459 = vcmp.ne.s32.totalorder %v1139, 0
      %vm1460 = vcmp.ne.s32.totalorder %v1140, 0
      %vm1461 = vcmp.ne.s32.totalorder %v1141, 0
      %vm1462 = vcmp.ne.s32.totalorder %v1142, 0
      %vm1463 = vcmp.ne.s32.totalorder %v1143, 0
      %vm1464 = vcmp.ne.s32.totalorder %v1144, 0
      %vm1465 = vcmp.ne.s32.totalorder %v1145, 0
      %vm1466 = vcmp.ne.s32.totalorder %v1146, 0
      %vm1467 = vcmp.ne.s32.totalorder %v1147, 0
      %vm1468 = vcmp.ne.s32.totalorder %v1148, 0
      %v1469 = vsel %vm1149, 2.0, 0.0
      %v1470 = vsel %vm1150, 2.0, 0.0
      %v1471 = vsel %vm1151, 2.0, 0.0
      %v1472 = vsel %vm1152, 2.0, 0.0
      %v1473 = vsel %vm1153, 2.0, 0.0
      %v1474 = vsel %vm1154, 2.0, 0.0
      %v1475 = vsel %vm1155, 2.0, 0.0
      %v1476 = vsel %vm1156, 2.0, 0.0
      %v1477 = vsel %vm1157, 2.0, 0.0
      %v1478 = vsel %vm1158, 2.0, 0.0
      %v1479 = vsel %vm1159, 2.0, 0.0
      %v1480 = vsel %vm1160, 2.0, 0.0
      %v1481 = vsel %vm1161, 2.0, 0.0
      %v1482 = vsel %vm1162, 2.0, 0.0
      %v1483 = vsel %vm1163, 2.0, 0.0
      %v1484 = vsel %vm1164, 2.0, 0.0
      %v1485 = vsel %vm1165, 2.0, 0.0
      %v1486 = vsel %vm1166, 2.0, 0.0
      %v1487 = vsel %vm1167, 2.0, 0.0
      %v1488 = vsel %vm1168, 2.0, 0.0
      %v1489 = vsel %vm1169, 2.0, 0.0
      %v1490 = vsel %vm1170, 2.0, 0.0
      %v1491 = vsel %vm1171, 2.0, 0.0
      %v1492 = vsel %vm1172, 2.0, 0.0
      %v1493 = vsel %vm1173, 2.0, 0.0
      %v1494 = vsel %vm1174, 2.0, 0.0
      %v1495 = vsel %vm1175, 2.0, 0.0
      %v1496 = vsel %vm1176, 2.0, 0.0
      %v1497 = vsel %vm1177, 2.0, 0.0
      %v1498 = vsel %vm1178, 2.0, 0.0
      %v1499 = vsel %vm1179, 2.0, 0.0
      %v1500 = vsel %vm1180, 2.0, 0.0
      %v1501 = vsel %vm1181, 2.0, 0.0
      %v1502 = vsel %vm1182, 2.0, 0.0
      %v1503 = vsel %vm1183, 2.0, 0.0
      %v1504 = vsel %vm1184, 2.0, 0.0
      %v1505 = vsel %vm1185, 2.0, 0.0
      %v1506 = vsel %vm1186, 2.0, 0.0
      %v1507 = vsel %vm1187, 2.0, 0.0
      %v1508 = vsel %vm1188, 2.0, 0.0
      %v1509 = vsel %vm1189, 2.0, 0.0
      %v1510 = vsel %vm1190, 2.0, 0.0
      %v1511 = vsel %vm1191, 2.0, 0.0
      %v1512 = vsel %vm1192, 2.0, 0.0
      %v1513 = vsel %vm1193, 2.0, 0.0
      %v1514 = vsel %vm1194, 2.0, 0.0
      %v1515 = vsel %vm1195, 2.0, 0.0
      %v1516 = vsel %vm1196, 2.0, 0.0
      %v1517 = vsel %vm1197, 2.0, 0.0
      %v1518 = vsel %vm1198, 2.0, 0.0
      %v1519 = vsel %vm1199, 2.0, 0.0
      %v1520 = vsel %vm1200, 2.0, 0.0
      %v1521 = vsel %vm1201, 2.0, 0.0
      %v1522 = vsel %vm1202, 2.0, 0.0
      %v1523 = vsel %vm1203, 2.0, 0.0
      %v1524 = vsel %vm1204, 2.0, 0.0
      %v1525 = vsel %vm1205, 2.0, 0.0
      %v1526 = vsel %vm1206, 2.0, 0.0
      %v1527 = vsel %vm1207, 2.0, 0.0
      %v1528 = vsel %vm1208, 2.0, 0.0
      %v1529 = vsel %vm1209, 2.0, 0.0
      %v1530 = vsel %vm1210, 2.0, 0.0
      %v1531 = vsel %vm1211, 2.0, 0.0
      %v1532 = vsel %vm1212, 2.0, 0.0
      %v1533 = vsel %vm1213, 2.0, 0.0
      %v1534 = vsel %vm1214, 2.0, 0.0
      %v1535 = vsel %vm1215, 2.0, 0.0
      %v1536 = vsel %vm1216, 2.0, 0.0
      %v1537 = vsel %vm1217, 2.0, 0.0
      %v1538 = vsel %vm1218, 2.0, 0.0
      %v1539 = vsel %vm1219, 2.0, 0.0
      %v1540 = vsel %vm1220, 2.0, 0.0
      %v1541 = vsel %vm1221, 2.0, 0.0
      %v1542 = vsel %vm1222, 2.0, 0.0
      %v1543 = vsel %vm1223, 2.0, 0.0
      %v1544 = vsel %vm1224, 2.0, 0.0
      %v1545 = vsel %vm1225, 2.0, 0.0
      %v1546 = vsel %vm1226, 2.0, 0.0
      %v1547 = vsel %vm1227, 2.0, 0.0
      %v1548 = vsel %vm1228, 2.0, 0.0
      %v1549 = vsel %vm1229, 2.0, 0.0
      %v1550 = vsel %vm1230, 2.0, 0.0
      %v1551 = vsel %vm1231, 2.0, 0.0
      %v1552 = vsel %vm1232, 2.0, 0.0
      %v1553 = vsel %vm1233, 2.0, 0.0
      %v1554 = vsel %vm1234, 2.0, 0.0
      %v1555 = vsel %vm1235, 2.0, 0.0
      %v1556 = vsel %vm1236, 2.0, 0.0
      %v1557 = vsel %vm1237, 2.0, 0.0
      %v1558 = vsel %vm1238, 2.0, 0.0
      %v1559 = vsel %vm1239, 2.0, 0.0
      %v1560 = vsel %vm1240, 2.0, 0.0
      %v1561 = vsel %vm1241, 2.0, 0.0
      %v1562 = vsel %vm1242, 2.0, 0.0
      %v1563 = vsel %vm1243, 2.0, 0.0
      %v1564 = vsel %vm1244, 2.0, 0.0
      %v1565 = vsel %vm1245, 2.0, 0.0
      %v1566 = vsel %vm1246, 2.0, 0.0
      %v1567 = vsel %vm1247, 2.0, 0.0
      %v1568 = vsel %vm1248, 2.0, 0.0
      %v1569 = vsel %vm1249, 2.0, 0.0
      %v1570 = vsel %vm1250, 2.0, 0.0
      %v1571 = vsel %vm1251, 2.0, 0.0
      %v1572 = vsel %vm1252, 2.0, 0.0
      %v1573 = vsel %vm1253, 2.0, 0.0
      %v1574 = vsel %vm1254, 2.0, 0.0
      %v1575 = vsel %vm1255, 2.0, 0.0
      %v1576 = vsel %vm1256, 2.0, 0.0
      %v1577 = vsel %vm1257, 2.0, 0.0
      %v1578 = vsel %vm1258, 2.0, 0.0
      %v1579 = vsel %vm1259, 2.0, 0.0
      %v1580 = vsel %vm1260, 2.0, 0.0
      %v1581 = vsel %vm1261, 2.0, 0.0
      %v1582 = vsel %vm1262, 2.0, 0.0
      %v1583 = vsel %vm1263, 2.0, 0.0
      %v1584 = vsel %vm1264, 2.0, 0.0
      %v1585 = vsel %vm1265, 2.0, 0.0
      %v1586 = vsel %vm1266, 2.0, 0.0
      %v1587 = vsel %vm1267, 2.0, 0.0
      %v1588 = vsel %vm1268, 2.0, 0.0
      %v1589 = vsel %vm1269, 2.0, 0.0
      %v1590 = vsel %vm1270, 2.0, 0.0
      %v1591 = vsel %vm1271, 2.0, 0.0
      %v1592 = vsel %vm1272, 2.0, 0.0
      %v1593 = vsel %vm1273, 2.0, 0.0
      %v1594 = vsel %vm1274, 2.0, 0.0
      %v1595 = vsel %vm1275, 2.0, 0.0
      %v1596 = vsel %vm1276, 2.0, 0.0
      %v1597 = vsel %vm1277, 2.0, 0.0
      %v1598 = vsel %vm1278, 2.0, 0.0
      %v1599 = vsel %vm1279, 2.0, 0.0
      %v1600 = vsel %vm1280, 2.0, 0.0
      %v1601 = vsel %vm1281, 2.0, 0.0
      %v1602 = vsel %vm1282, 2.0, 0.0
      %v1603 = vsel %vm1283, 2.0, 0.0
      %v1604 = vsel %vm1284, 2.0, 0.0
      %v1605 = vsel %vm1285, 2.0, 0.0
      %v1606 = vsel %vm1286, 2.0, 0.0
      %v1607 = vsel %vm1287, 2.0, 0.0
      %v1608 = vsel %vm1288, 2.0, 0.0
      %v1609 = vsel %vm1289, 2.0, 0.0
      %v1610 = vsel %vm1290, 2.0, 0.0
      %v1611 = vsel %vm1291, 2.0, 0.0
      %v1612 = vsel %vm1292, 2.0, 0.0
      %v1613 = vsel %vm1293, 2.0, 0.0
      %v1614 = vsel %vm1294, 2.0, 0.0
      %v1615 = vsel %vm1295, 2.0, 0.0
      %v1616 = vsel %vm1296, 2.0, 0.0
      %v1617 = vsel %vm1297, 2.0, 0.0
      %v1618 = vsel %vm1298, 2.0, 0.0
      %v1619 = vsel %vm1299, 2.0, 0.0
      %v1620 = vsel %vm1300, 2.0, 0.0
      %v1621 = vsel %vm1301, 2.0, 0.0
      %v1622 = vsel %vm1302, 2.0, 0.0
      %v1623 = vsel %vm1303, 2.0, 0.0
      %v1624 = vsel %vm1304, 2.0, 0.0
      %v1625 = vsel %vm1305, 2.0, 0.0
      %v1626 = vsel %vm1306, 2.0, 0.0
      %v1627 = vsel %vm1307, 2.0, 0.0
      %v1628 = vsel %vm1308, 2.0, 0.0
      %v1629 = vsel %vm1309, 2.0, 0.0
      %v1630 = vsel %vm1310, 2.0, 0.0
      %v1631 = vsel %vm1311, 2.0, 0.0
      %v1632 = vsel %vm1312, 2.0, 0.0
      %v1633 = vsel %vm1313, 2.0, 0.0
      %v1634 = vsel %vm1314, 2.0, 0.0
      %v1635 = vsel %vm1315, 2.0, 0.0
      %v1636 = vsel %vm1316, 2.0, 0.0
      %v1637 = vsel %vm1317, 2.0, 0.0
      %v1638 = vsel %vm1318, 2.0, 0.0
      %v1639 = vsel %vm1319, 2.0, 0.0
      %v1640 = vsel %vm1320, 2.0, 0.0
      %v1641 = vsel %vm1321, 2.0, 0.0
      %v1642 = vsel %vm1322, 2.0, 0.0
      %v1643 = vsel %vm1323, 2.0, 0.0
      %v1644 = vsel %vm1324, 2.0, 0.0
      %v1645 = vsel %vm1325, 2.0, 0.0
      %v1646 = vsel %vm1326, 2.0, 0.0
      %v1647 = vsel %vm1327, 2.0, 0.0
      %v1648 = vsel %vm1328, 2.0, 0.0
      %v1649 = vsel %vm1329, 2.0, 0.0
      %v1650 = vsel %vm1330, 2.0, 0.0
      %v1651 = vsel %vm1331, 2.0, 0.0
      %v1652 = vsel %vm1332, 2.0, 0.0
      %v1653 = vsel %vm1333, 2.0, 0.0
      %v1654 = vsel %vm1334, 2.0, 0.0
      %v1655 = vsel %vm1335, 2.0, 0.0
      %v1656 = vsel %vm1336, 2.0, 0.0
      %v1657 = vsel %vm1337, 2.0, 0.0
      %v1658 = vsel %vm1338, 2.0, 0.0
      %v1659 = vsel %vm1339, 2.0, 0.0
      %v1660 = vsel %vm1340, 2.0, 0.0
      %v1661 = vsel %vm1341, 2.0, 0.0
      %v1662 = vsel %vm1342, 2.0, 0.0
      %v1663 = vsel %vm1343, 2.0, 0.0
      %v1664 = vsel %vm1344, 2.0, 0.0
      %v1665 = vsel %vm1345, 2.0, 0.0
      %v1666 = vsel %vm1346, 2.0, 0.0
      %v1667 = vsel %vm1347, 2.0, 0.0
      %v1668 = vsel %vm1348, 2.0, 0.0
      %v1669 = vsel %vm1349, 2.0, 0.0
      %v1670 = vsel %vm1350, 2.0, 0.0
      %v1671 = vsel %vm1351, 2.0, 0.0
      %v1672 = vsel %vm1352, 2.0, 0.0
      %v1673 = vsel %vm1353, 2.0, 0.0
      %v1674 = vsel %vm1354, 2.0, 0.0
      %v1675 = vsel %vm1355, 2.0, 0.0
      %v1676 = vsel %vm1356, 2.0, 0.0
      %v1677 = vsel %vm1357, 2.0, 0.0
      %v1678 = vsel %vm1358, 2.0, 0.0
      %v1679 = vsel %vm1359, 2.0, 0.0
      %v1680 = vsel %vm1360, 2.0, 0.0
      %v1681 = vsel %vm1361, 2.0, 0.0
      %v1682 = vsel %vm1362, 2.0, 0.0
      %v1683 = vsel %vm1363, 2.0, 0.0
      %v1684 = vsel %vm1364, 2.0, 0.0
      %v1685 = vsel %vm1365, 2.0, 0.0
      %v1686 = vsel %vm1366, 2.0, 0.0
      %v1687 = vsel %vm1367, 2.0, 0.0
      %v1688 = vsel %vm1368, 2.0, 0.0
      %v1689 = vsel %vm1369, 2.0, 0.0
      %v1690 = vsel %vm1370, 2.0, 0.0
      %v1691 = vsel %vm1371, 2.0, 0.0
      %v1692 = vsel %vm1372, 2.0, 0.0
      %v1693 = vsel %vm1373, 2.0, 0.0
      %v1694 = vsel %vm1374, 2.0, 0.0
      %v1695 = vsel %vm1375, 2.0, 0.0
      %v1696 = vsel %vm1376, 2.0, 0.0
      %v1697 = vsel %vm1377, 2.0, 0.0
      %v1698 = vsel %vm1378, 2.0, 0.0
      %v1699 = vsel %vm1379, 2.0, 0.0
      %v1700 = vsel %vm1380, 2.0, 0.0
      %v1701 = vsel %vm1381, 2.0, 0.0
      %v1702 = vsel %vm1382, 2.0, 0.0
      %v1703 = vsel %vm1383, 2.0, 0.0
      %v1704 = vsel %vm1384, 2.0, 0.0
      %v1705 = vsel %vm1385, 2.0, 0.0
      %v1706 = vsel %vm1386, 2.0, 0.0
      %v1707 = vsel %vm1387, 2.0, 0.0
      %v1708 = vsel %vm1388, 2.0, 0.0
      %v1709 = vsel %vm1389, 2.0, 0.0
      %v1710 = vsel %vm1390, 2.0, 0.0
      %v1711 = vsel %vm1391, 2.0, 0.0
      %v1712 = vsel %vm1392, 2.0, 0.0
      %v1713 = vsel %vm1393, 2.0, 0.0
      %v1714 = vsel %vm1394, 2.0, 0.0
      %v1715 = vsel %vm1395, 2.0, 0.0
      %v1716 = vsel %vm1396, 2.0, 0.0
      %v1717 = vsel %vm1397, 2.0, 0.0
      %v1718 = vsel %vm1398, 2.0, 0.0
      %v1719 = vsel %vm1399, 2.0, 0.0
      %v1720 = vsel %vm1400, 2.0, 0.0
      %v1721 = vsel %vm1401, 2.0, 0.0
      %v1722 = vsel %vm1402, 2.0, 0.0
      %v1723 = vsel %vm1403, 2.0, 0.0
      %v1724 = vsel %vm1404, 2.0, 0.0
      %v1725 = vsel %vm1405, 2.0, 0.0
      %v1726 = vsel %vm1406, 2.0, 0.0
      %v1727 = vsel %vm1407, 2.0, 0.0
      %v1728 = vsel %vm1408, 2.0, 0.0
      %v1729 = vsel %vm1409, 2.0, 0.0
      %v1730 = vsel %vm1410, 2.0, 0.0
      %v1731 = vsel %vm1411, 2.0, 0.0
      %v1732 = vsel %vm1412, 2.0, 0.0
      %v1733 = vsel %vm1413, 2.0, 0.0
      %v1734 = vsel %vm1414, 2.0, 0.0
      %v1735 = vsel %vm1415, 2.0, 0.0
      %v1736 = vsel %vm1416, 2.0, 0.0
      %v1737 = vsel %vm1417, 2.0, 0.0
      %v1738 = vsel %vm1418, 2.0, 0.0
      %v1739 = vsel %vm1419, 2.0, 0.0
      %v1740 = vsel %vm1420, 2.0, 0.0
      %v1741 = vsel %vm1421, 2.0, 0.0
      %v1742 = vsel %vm1422, 2.0, 0.0
      %v1743 = vsel %vm1423, 2.0, 0.0
      %v1744 = vsel %vm1424, 2.0, 0.0
      %v1745 = vsel %vm1425, 2.0, 0.0
      %v1746 = vsel %vm1426, 2.0, 0.0
      %v1747 = vsel %vm1427, 2.0, 0.0
      %v1748 = vsel %vm1428, 2.0, 0.0
      %v1749 = vsel %vm1429, 2.0, 0.0
      %v1750 = vsel %vm1430, 2.0, 0.0
      %v1751 = vsel %vm1431, 2.0, 0.0
      %v1752 = vsel %vm1432, 2.0, 0.0
      %v1753 = vsel %vm1433, 2.0, 0.0
      %v1754 = vsel %vm1434, 2.0, 0.0
      %v1755 = vsel %vm1435, 2.0, 0.0
      %v1756 = vsel %vm1436, 2.0, 0.0
      %v1757 = vsel %vm1437, 2.0, 0.0
      %v1758 = vsel %vm1438, 2.0, 0.0
      %v1759 = vsel %vm1439, 2.0, 0.0
      %v1760 = vsel %vm1440, 2.0, 0.0
      %v1761 = vsel %vm1441, 2.0, 0.0
      %v1762 = vsel %vm1442, 2.0, 0.0
      %v1763 = vsel %vm1443, 2.0, 0.0
      %v1764 = vsel %vm1444, 2.0, 0.0
      %v1765 = vsel %vm1445, 2.0, 0.0
      %v1766 = vsel %vm1446, 2.0, 0.0
      %v1767 = vsel %vm1447, 2.0, 0.0
      %v1768 = vsel %vm1448, 2.0, 0.0
      %v1769 = vsel %vm1449, 2.0, 0.0
      %v1770 = vsel %vm1450, 2.0, 0.0
      %v1771 = vsel %vm1451, 2.0, 0.0
      %v1772 = vsel %vm1452, 2.0, 0.0
      %v1773 = vsel %vm1453, 2.0, 0.0
      %v1774 = vsel %vm1454, 2.0, 0.0
      %v1775 = vsel %vm1455, 2.0, 0.0
      %v1776 = vsel %vm1456, 2.0, 0.0
      %v1777 = vsel %vm1457, 2.0, 0.0
      %v1778 = vsel %vm1458, 2.0, 0.0
      %v1779 = vsel %vm1459, 2.0, 0.0
      %v1780 = vsel %vm1460, 2.0, 0.0
      %v1781 = vsel %vm1461, 2.0, 0.0
      %v1782 = vsel %vm1462, 2.0, 0.0
      %v1783 = vsel %vm1463, 2.0, 0.0
      %v1784 = vsel %vm1464, 2.0, 0.0
      %v1785 = vsel %vm1465, 2.0, 0.0
      %v1786 = vsel %vm1466, 2.0, 0.0
      %v1787 = vsel %vm1467, 2.0, 0.0
      %v1788 = vsel %vm1468, 2.0, 0.0
      %v1789 = vmul.f32 %v246, %v1469
      %v1790 = vmul.f32 %v247, %v1470
      %v1791 = vmul.f32 %v248, %v1471
      %v1792 = vmul.f32 %v249, %v1472
      %v1793 = vmul.f32 %v250, %v1473
      %v1794 = vmul.f32 %v251, %v1474
      %v1795 = vmul.f32 %v252, %v1475
      %v1796 = vmul.f32 %v253, %v1476
      %v1797 = vmul.f32 %v254, %v1477
      %v1798 = vmul.f32 %v255, %v1478
      %v1799 = vmul.f32 %v256, %v1479
      %v1800 = vmul.f32 %v257, %v1480
      %v1801 = vmul.f32 %v258, %v1481
      %v1802 = vmul.f32 %v259, %v1482
      %v1803 = vmul.f32 %v260, %v1483
      %v1804 = vmul.f32 %v261, %v1484
      %v1805 = vmul.f32 %v262, %v1485
      %v1806 = vmul.f32 %v263, %v1486
      %v1807 = vmul.f32 %v264, %v1487
      %v1808 = vmul.f32 %v265, %v1488
      %v1809 = vmul.f32 %v266, %v1489
      %v1810 = vmul.f32 %v267, %v1490
      %v1811 = vmul.f32 %v268, %v1491
      %v1812 = vmul.f32 %v269, %v1492
      %v1813 = vmul.f32 %v270, %v1493
      %v1814 = vmul.f32 %v271, %v1494
      %v1815 = vmul.f32 %v272, %v1495
      %v1816 = vmul.f32 %v273, %v1496
      %v1817 = vmul.f32 %v274, %v1497
      %v1818 = vmul.f32 %v275, %v1498
      %v1819 = vmul.f32 %v276, %v1499
      %v1820 = vmul.f32 %v277, %v1500
      %v1821 = vmul.f32 %v246, %v1501
      %v1822 = vmul.f32 %v247, %v1502
      %v1823 = vmul.f32 %v248, %v1503
      %v1824 = vmul.f32 %v249, %v1504
      %v1825 = vmul.f32 %v250, %v1505
      %v1826 = vmul.f32 %v251, %v1506
      %v1827 = vmul.f32 %v252, %v1507
      %v1828 = vmul.f32 %v253, %v1508
      %v1829 = vmul.f32 %v254, %v1509
      %v1830 = vmul.f32 %v255, %v1510
      %v1831 = vmul.f32 %v256, %v1511
      %v1832 = vmul.f32 %v257, %v1512
      %v1833 = vmul.f32 %v258, %v1513
      %v1834 = vmul.f32 %v259, %v1514
      %v1835 = vmul.f32 %v260, %v1515
      %v1836 = vmul.f32 %v261, %v1516
      %v1837 = vmul.f32 %v262, %v1517
      %v1838 = vmul.f32 %v263, %v1518
      %v1839 = vmul.f32 %v264, %v1519
      %v1840 = vmul.f32 %v265, %v1520
      %v1841 = vmul.f32 %v266, %v1521
      %v1842 = vmul.f32 %v267, %v1522
      %v1843 = vmul.f32 %v268, %v1523
      %v1844 = vmul.f32 %v269, %v1524
      %v1845 = vmul.f32 %v270, %v1525
      %v1846 = vmul.f32 %v271, %v1526
      %v1847 = vmul.f32 %v272, %v1527
      %v1848 = vmul.f32 %v273, %v1528
      %v1849 = vmul.f32 %v274, %v1529
      %v1850 = vmul.f32 %v275, %v1530
      %v1851 = vmul.f32 %v276, %v1531
      %v1852 = vmul.f32 %v277, %v1532
      %v1853 = vmul.f32 %v246, %v1533
      %v1854 = vmul.f32 %v247, %v1534
      %v1855 = vmul.f32 %v248, %v1535
      %v1856 = vmul.f32 %v249, %v1536
      %v1857 = vmul.f32 %v250, %v1537
      %v1858 = vmul.f32 %v251, %v1538
      %v1859 = vmul.f32 %v252, %v1539
      %v1860 = vmul.f32 %v253, %v1540
      %v1861 = vmul.f32 %v254, %v1541
      %v1862 = vmul.f32 %v255, %v1542
      %v1863 = vmul.f32 %v256, %v1543
      %v1864 = vmul.f32 %v257, %v1544
      %v1865 = vmul.f32 %v258, %v1545
      %v1866 = vmul.f32 %v259, %v1546
      %v1867 = vmul.f32 %v260, %v1547
      %v1868 = vmul.f32 %v261, %v1548
      %v1869 = vmul.f32 %v262, %v1549
      %v1870 = vmul.f32 %v263, %v1550
      %v1871 = vmul.f32 %v264, %v1551
      %v1872 = vmul.f32 %v265, %v1552
      %v1873 = vmul.f32 %v266, %v1553
      %v1874 = vmul.f32 %v267, %v1554
      %v1875 = vmul.f32 %v268, %v1555
      %v1876 = vmul.f32 %v269, %v1556
      %v1877 = vmul.f32 %v270, %v1557
      %v1878 = vmul.f32 %v271, %v1558
      %v1879 = vmul.f32 %v272, %v1559
      %v1880 = vmul.f32 %v273, %v1560
      %v1881 = vmul.f32 %v274, %v1561
      %v1882 = vmul.f32 %v275, %v1562
      %v1883 = vmul.f32 %v276, %v1563
      %v1884 = vmul.f32 %v277, %v1564
      %v1885 = vmul.f32 %v246, %v1565
      %v1886 = vmul.f32 %v247, %v1566
      %v1887 = vmul.f32 %v248, %v1567
      %v1888 = vmul.f32 %v249, %v1568
      %v1889 = vmul.f32 %v250, %v1569
      %v1890 = vmul.f32 %v251, %v1570
      %v1891 = vmul.f32 %v252, %v1571
      %v1892 = vmul.f32 %v253, %v1572
      %v1893 = vmul.f32 %v254, %v1573
      %v1894 = vmul.f32 %v255, %v1574
      %v1895 = vmul.f32 %v256, %v1575
      %v1896 = vmul.f32 %v257, %v1576
      %v1897 = vmul.f32 %v258, %v1577
      %v1898 = vmul.f32 %v259, %v1578
      %v1899 = vmul.f32 %v260, %v1579
      %v1900 = vmul.f32 %v261, %v1580
      %v1901 = vmul.f32 %v262, %v1581
      %v1902 = vmul.f32 %v263, %v1582
      %v1903 = vmul.f32 %v264, %v1583
      %v1904 = vmul.f32 %v265, %v1584
      %v1905 = vmul.f32 %v266, %v1585
      %v1906 = vmul.f32 %v267, %v1586
      %v1907 = vmul.f32 %v268, %v1587
      %v1908 = vmul.f32 %v269, %v1588
      %v1909 = vmul.f32 %v270, %v1589
      %v1910 = vmul.f32 %v271, %v1590
      %v1911 = vmul.f32 %v272, %v1591
      %v1912 = vmul.f32 %v273, %v1592
      %v1913 = vmul.f32 %v274, %v1593
      %v1914 = vmul.f32 %v275, %v1594
      %v1915 = vmul.f32 %v276, %v1595
      %v1916 = vmul.f32 %v277, %v1596
      %v1917 = vmul.f32 %v246, %v1597
      %v1918 = vmul.f32 %v247, %v1598
      %v1919 = vmul.f32 %v248, %v1599
      %v1920 = vmul.f32 %v249, %v1600
      %v1921 = vmul.f32 %v250, %v1601
      %v1922 = vmul.f32 %v251, %v1602
      %v1923 = vmul.f32 %v252, %v1603
      %v1924 = vmul.f32 %v253, %v1604
      %v1925 = vmul.f32 %v254, %v1605
      %v1926 = vmul.f32 %v255, %v1606
      %v1927 = vmul.f32 %v256, %v1607
      %v1928 = vmul.f32 %v257, %v1608
      %v1929 = vmul.f32 %v258, %v1609
      %v1930 = vmul.f32 %v259, %v1610
      %v1931 = vmul.f32 %v260, %v1611
      %v1932 = vmul.f32 %v261, %v1612
      %v1933 = vmul.f32 %v262, %v1613
      %v1934 = vmul.f32 %v263, %v1614
      %v1935 = vmul.f32 %v264, %v1615
      %v1936 = vmul.f32 %v265, %v1616
      %v1937 = vmul.f32 %v266, %v1617
      %v1938 = vmul.f32 %v267, %v1618
      %v1939 = vmul.f32 %v268, %v1619
      %v1940 = vmul.f32 %v269, %v1620
      %v1941 = vmul.f32 %v270, %v1621
      %v1942 = vmul.f32 %v271, %v1622
      %v1943 = vmul.f32 %v272, %v1623
      %v1944 = vmul.f32 %v273, %v1624
      %v1945 = vmul.f32 %v274, %v1625
      %v1946 = vmul.f32 %v275, %v1626
      %v1947 = vmul.f32 %v276, %v1627
      %v1948 = vmul.f32 %v277, %v1628
      %v1949 = vmul.f32 %v246, %v1629
      %v1950 = vmul.f32 %v247, %v1630
      %v1951 = vmul.f32 %v248, %v1631
      %v1952 = vmul.f32 %v249, %v1632
      %v1953 = vmul.f32 %v250, %v1633
      %v1954 = vmul.f32 %v251, %v1634
      %v1955 = vmul.f32 %v252, %v1635
      %v1956 = vmul.f32 %v253, %v1636
      %v1957 = vmul.f32 %v254, %v1637
      %v1958 = vmul.f32 %v255, %v1638
      %v1959 = vmul.f32 %v256, %v1639
      %v1960 = vmul.f32 %v257, %v1640
      %v1961 = vmul.f32 %v258, %v1641
      %v1962 = vmul.f32 %v259, %v1642
      %v1963 = vmul.f32 %v260, %v1643
      %v1964 = vmul.f32 %v261, %v1644
      %v1965 = vmul.f32 %v262, %v1645
      %v1966 = vmul.f32 %v263, %v1646
      %v1967 = vmul.f32 %v264, %v1647
      %v1968 = vmul.f32 %v265, %v1648
      %v1969 = vmul.f32 %v266, %v1649
      %v1970 = vmul.f32 %v267, %v1650
      %v1971 = vmul.f32 %v268, %v1651
      %v1972 = vmul.f32 %v269, %v1652
      %v1973 = vmul.f32 %v270, %v1653
      %v1974 = vmul.f32 %v271, %v1654
      %v1975 = vmul.f32 %v272, %v1655
      %v1976 = vmul.f32 %v273, %v1656
      %v1977 = vmul.f32 %v274, %v1657
      %v1978 = vmul.f32 %v275, %v1658
      %v1979 = vmul.f32 %v276, %v1659
      %v1980 = vmul.f32 %v277, %v1660
      %v1981 = vmul.f32 %v246, %v1661
      %v1982 = vmul.f32 %v247, %v1662
      %v1983 = vmul.f32 %v248, %v1663
      %v1984 = vmul.f32 %v249, %v1664
      %v1985 = vmul.f32 %v250, %v1665
      %v1986 = vmul.f32 %v251, %v1666
      %v1987 = vmul.f32 %v252, %v1667
      %v1988 = vmul.f32 %v253, %v1668
      %v1989 = vmul.f32 %v254, %v1669
      %v1990 = vmul.f32 %v255, %v1670
      %v1991 = vmul.f32 %v256, %v1671
      %v1992 = vmul.f32 %v257, %v1672
      %v1993 = vmul.f32 %v258, %v1673
      %v1994 = vmul.f32 %v259, %v1674
      %v1995 = vmul.f32 %v260, %v1675
      %v1996 = vmul.f32 %v261, %v1676
      %v1997 = vmul.f32 %v262, %v1677
      %v1998 = vmul.f32 %v263, %v1678
      %v1999 = vmul.f32 %v264, %v1679
      %v2000 = vmul.f32 %v265, %v1680
      %v2001 = vmul.f32 %v266, %v1681
      %v2002 = vmul.f32 %v267, %v1682
      %v2003 = vmul.f32 %v268, %v1683
      %v2004 = vmul.f32 %v269, %v1684
      %v2005 = vmul.f32 %v270, %v1685
      %v2006 = vmul.f32 %v271, %v1686
      %v2007 = vmul.f32 %v272, %v1687
      %v2008 = vmul.f32 %v273, %v1688
      %v2009 = vmul.f32 %v274, %v1689
      %v2010 = vmul.f32 %v275, %v1690
      %v2011 = vmul.f32 %v276, %v1691
      %v2012 = vmul.f32 %v277, %v1692
      %v2013 = vmul.f32 %v246, %v1693
      %v2014 = vmul.f32 %v247, %v1694
      %v2015 = vmul.f32 %v248, %v1695
      %v2016 = vmul.f32 %v249, %v1696
      %v2017 = vmul.f32 %v250, %v1697
      %v2018 = vmul.f32 %v251, %v1698
      %v2019 = vmul.f32 %v252, %v1699
      %v2020 = vmul.f32 %v253, %v1700
      %v2021 = vmul.f32 %v254, %v1701
      %v2022 = vmul.f32 %v255, %v1702
      %v2023 = vmul.f32 %v256, %v1703
      %v2024 = vmul.f32 %v257, %v1704
      %v2025 = vmul.f32 %v258, %v1705
      %v2026 = vmul.f32 %v259, %v1706
      %v2027 = vmul.f32 %v260, %v1707
      %v2028 = vmul.f32 %v261, %v1708
      %v2029 = vmul.f32 %v262, %v1709
      %v2030 = vmul.f32 %v263, %v1710
      %v2031 = vmul.f32 %v264, %v1711
      %v2032 = vmul.f32 %v265, %v1712
      %v2033 = vmul.f32 %v266, %v1713
      %v2034 = vmul.f32 %v267, %v1714
      %v2035 = vmul.f32 %v268, %v1715
      %v2036 = vmul.f32 %v269, %v1716
      %v2037 = vmul.f32 %v270, %v1717
      %v2038 = vmul.f32 %v271, %v1718
      %v2039 = vmul.f32 %v272, %v1719
      %v2040 = vmul.f32 %v273, %v1720
      %v2041 = vmul.f32 %v274, %v1721
      %v2042 = vmul.f32 %v275, %v1722
      %v2043 = vmul.f32 %v276, %v1723
      %v2044 = vmul.f32 %v277, %v1724
      %v2045 = vmul.f32 %v246, %v1725
      %v2046 = vmul.f32 %v247, %v1726
      %v2047 = vmul.f32 %v248, %v1727
      %v2048 = vmul.f32 %v249, %v1728
      %v2049 = vmul.f32 %v250, %v1729
      %v2050 = vmul.f32 %v251, %v1730
      %v2051 = vmul.f32 %v252, %v1731
      %v2052 = vmul.f32 %v253, %v1732
      %v2053 = vmul.f32 %v254, %v1733
      %v2054 = vmul.f32 %v255, %v1734
      %v2055 = vmul.f32 %v256, %v1735
      %v2056 = vmul.f32 %v257, %v1736
      %v2057 = vmul.f32 %v258, %v1737
      %v2058 = vmul.f32 %v259, %v1738
      %v2059 = vmul.f32 %v260, %v1739
      %v2060 = vmul.f32 %v261, %v1740
      %v2061 = vmul.f32 %v262, %v1741
      %v2062 = vmul.f32 %v263, %v1742
      %v2063 = vmul.f32 %v264, %v1743
      %v2064 = vmul.f32 %v265, %v1744
      %v2065 = vmul.f32 %v266, %v1745
      %v2066 = vmul.f32 %v267, %v1746
      %v2067 = vmul.f32 %v268, %v1747
      %v2068 = vmul.f32 %v269, %v1748
      %v2069 = vmul.f32 %v270, %v1749
      %v2070 = vmul.f32 %v271, %v1750
      %v2071 = vmul.f32 %v272, %v1751
      %v2072 = vmul.f32 %v273, %v1752
      %v2073 = vmul.f32 %v274, %v1753
      %v2074 = vmul.f32 %v275, %v1754
      %v2075 = vmul.f32 %v276, %v1755
      %v2076 = vmul.f32 %v277, %v1756
      %v2077 = vmul.f32 %v246, %v1757
      %v2078 = vmul.f32 %v247, %v1758
      %v2079 = vmul.f32 %v248, %v1759
      %v2080 = vmul.f32 %v249, %v1760
      %v2081 = vmul.f32 %v250, %v1761
      %v2082 = vmul.f32 %v251, %v1762
      %v2083 = vmul.f32 %v252, %v1763
      %v2084 = vmul.f32 %v253, %v1764
      %v2085 = vmul.f32 %v254, %v1765
      %v2086 = vmul.f32 %v255, %v1766
      %v2087 = vmul.f32 %v256, %v1767
      %v2088 = vmul.f32 %v257, %v1768
      %v2089 = vmul.f32 %v258, %v1769
      %v2090 = vmul.f32 %v259, %v1770
      %v2091 = vmul.f32 %v260, %v1771
      %v2092 = vmul.f32 %v261, %v1772
      %v2093 = vmul.f32 %v262, %v1773
      %v2094 = vmul.f32 %v263, %v1774
      %v2095 = vmul.f32 %v264, %v1775
      %v2096 = vmul.f32 %v265, %v1776
      %v2097 = vmul.f32 %v266, %v1777
      %v2098 = vmul.f32 %v267, %v1778
      %v2099 = vmul.f32 %v268, %v1779
      %v2100 = vmul.f32 %v269, %v1780
      %v2101 = vmul.f32 %v270, %v1781
      %v2102 = vmul.f32 %v271, %v1782
      %v2103 = vmul.f32 %v272, %v1783
      %v2104 = vmul.f32 %v273, %v1784
      %v2105 = vmul.f32 %v274, %v1785
      %v2106 = vmul.f32 %v275, %v1786
      %v2107 = vmul.f32 %v276, %v1787
      %v2108 = vmul.f32 %v277, %v1788
      %v2109 = vpack.c.bf16 %v1790, %v1789
      %v2110 = vpack.c.bf16 %v1792, %v1791
      %v2111 = vpack.c.bf16 %v1794, %v1793
      %v2112 = vpack.c.bf16 %v1796, %v1795
      %v2113 = vpack.c.bf16 %v1798, %v1797
      %v2114 = vpack.c.bf16 %v1800, %v1799
      %v2115 = vpack.c.bf16 %v1802, %v1801
      %v2116 = vpack.c.bf16 %v1804, %v1803
      %v2117 = vpack.c.bf16 %v1806, %v1805
      %v2118 = vpack.c.bf16 %v1808, %v1807
      %v2119 = vpack.c.bf16 %v1810, %v1809
      %v2120 = vpack.c.bf16 %v1812, %v1811
      %v2121 = vpack.c.bf16 %v1814, %v1813
      %v2122 = vpack.c.bf16 %v1816, %v1815
      %v2123 = vpack.c.bf16 %v1818, %v1817
      %v2124 = vpack.c.bf16 %v1820, %v1819
      %v2125 = vpack.c.bf16 %v1822, %v1821
      %v2126 = vpack.c.bf16 %v1824, %v1823
      %v2127 = vpack.c.bf16 %v1826, %v1825
      %v2128 = vpack.c.bf16 %v1828, %v1827
      %v2129 = vpack.c.bf16 %v1830, %v1829
      %v2130 = vpack.c.bf16 %v1832, %v1831
      %v2131 = vpack.c.bf16 %v1834, %v1833
      %v2132 = vpack.c.bf16 %v1836, %v1835
      %v2133 = vpack.c.bf16 %v1838, %v1837
      %v2134 = vpack.c.bf16 %v1840, %v1839
      %v2135 = vpack.c.bf16 %v1842, %v1841
      %v2136 = vpack.c.bf16 %v1844, %v1843
      %v2137 = vpack.c.bf16 %v1846, %v1845
      %v2138 = vpack.c.bf16 %v1848, %v1847
      %v2139 = vpack.c.bf16 %v1850, %v1849
      %v2140 = vpack.c.bf16 %v1852, %v1851
      %v2141 = vpack.c.bf16 %v1854, %v1853
      %v2142 = vpack.c.bf16 %v1856, %v1855
      %v2143 = vpack.c.bf16 %v1858, %v1857
      %v2144 = vpack.c.bf16 %v1860, %v1859
      %v2145 = vpack.c.bf16 %v1862, %v1861
      %v2146 = vpack.c.bf16 %v1864, %v1863
      %v2147 = vpack.c.bf16 %v1866, %v1865
      %v2148 = vpack.c.bf16 %v1868, %v1867
      %v2149 = vpack.c.bf16 %v1870, %v1869
      %v2150 = vpack.c.bf16 %v1872, %v1871
      %v2151 = vpack.c.bf16 %v1874, %v1873
      %v2152 = vpack.c.bf16 %v1876, %v1875
      %v2153 = vpack.c.bf16 %v1878, %v1877
      %v2154 = vpack.c.bf16 %v1880, %v1879
      %v2155 = vpack.c.bf16 %v1882, %v1881
      %v2156 = vpack.c.bf16 %v1884, %v1883
      %v2157 = vpack.c.bf16 %v1886, %v1885
      %v2158 = vpack.c.bf16 %v1888, %v1887
      %v2159 = vpack.c.bf16 %v1890, %v1889
      %v2160 = vpack.c.bf16 %v1892, %v1891
      %v2161 = vpack.c.bf16 %v1894, %v1893
      %v2162 = vpack.c.bf16 %v1896, %v1895
      %v2163 = vpack.c.bf16 %v1898, %v1897
      %v2164 = vpack.c.bf16 %v1900, %v1899
      %v2165 = vpack.c.bf16 %v1902, %v1901
      %v2166 = vpack.c.bf16 %v1904, %v1903
      %v2167 = vpack.c.bf16 %v1906, %v1905
      %v2168 = vpack.c.bf16 %v1908, %v1907
      %v2169 = vpack.c.bf16 %v1910, %v1909
      %v2170 = vpack.c.bf16 %v1912, %v1911
      %v2171 = vpack.c.bf16 %v1914, %v1913
      %v2172 = vpack.c.bf16 %v1916, %v1915
      %v2173 = vpack.c.bf16 %v1918, %v1917
      %v2174 = vpack.c.bf16 %v1920, %v1919
      %v2175 = vpack.c.bf16 %v1922, %v1921
      %v2176 = vpack.c.bf16 %v1924, %v1923
      %v2177 = vpack.c.bf16 %v1926, %v1925
      %v2178 = vpack.c.bf16 %v1928, %v1927
      %v2179 = vpack.c.bf16 %v1930, %v1929
      %v2180 = vpack.c.bf16 %v1932, %v1931
      %v2181 = vpack.c.bf16 %v1934, %v1933
      %v2182 = vpack.c.bf16 %v1936, %v1935
      %v2183 = vpack.c.bf16 %v1938, %v1937
      %v2184 = vpack.c.bf16 %v1940, %v1939
      %v2185 = vpack.c.bf16 %v1942, %v1941
      %v2186 = vpack.c.bf16 %v1944, %v1943
      %v2187 = vpack.c.bf16 %v1946, %v1945
      %v2188 = vpack.c.bf16 %v1948, %v1947
      %v2189 = vpack.c.bf16 %v1950, %v1949
      %v2190 = vpack.c.bf16 %v1952, %v1951
      %v2191 = vpack.c.bf16 %v1954, %v1953
      %v2192 = vpack.c.bf16 %v1956, %v1955
      %v2193 = vpack.c.bf16 %v1958, %v1957
      %v2194 = vpack.c.bf16 %v1960, %v1959
      %v2195 = vpack.c.bf16 %v1962, %v1961
      %v2196 = vpack.c.bf16 %v1964, %v1963
      %v2197 = vpack.c.bf16 %v1966, %v1965
      %v2198 = vpack.c.bf16 %v1968, %v1967
      %v2199 = vpack.c.bf16 %v1970, %v1969
      %v2200 = vpack.c.bf16 %v1972, %v1971
      %v2201 = vpack.c.bf16 %v1974, %v1973
      %v2202 = vpack.c.bf16 %v1976, %v1975
      %v2203 = vpack.c.bf16 %v1978, %v1977
      %v2204 = vpack.c.bf16 %v1980, %v1979
      %v2205 = vpack.c.bf16 %v1982, %v1981
      %v2206 = vpack.c.bf16 %v1984, %v1983
      %v2207 = vpack.c.bf16 %v1986, %v1985
      %v2208 = vpack.c.bf16 %v1988, %v1987
      %v2209 = vpack.c.bf16 %v1990, %v1989
      %v2210 = vpack.c.bf16 %v1992, %v1991
      %v2211 = vpack.c.bf16 %v1994, %v1993
      %v2212 = vpack.c.bf16 %v1996, %v1995
      %v2213 = vpack.c.bf16 %v1998, %v1997
      %v2214 = vpack.c.bf16 %v2000, %v1999
      %v2215 = vpack.c.bf16 %v2002, %v2001
      %v2216 = vpack.c.bf16 %v2004, %v2003
      %v2217 = vpack.c.bf16 %v2006, %v2005
      %v2218 = vpack.c.bf16 %v2008, %v2007
      %v2219 = vpack.c.bf16 %v2010, %v2009
      %v2220 = vpack.c.bf16 %v2012, %v2011
      %v2221 = vpack.c.bf16 %v2014, %v2013
      %v2222 = vpack.c.bf16 %v2016, %v2015
      %v2223 = vpack.c.bf16 %v2018, %v2017
      %v2224 = vpack.c.bf16 %v2020, %v2019
      %v2225 = vpack.c.bf16 %v2022, %v2021
      %v2226 = vpack.c.bf16 %v2024, %v2023
      %v2227 = vpack.c.bf16 %v2026, %v2025
      %v2228 = vpack.c.bf16 %v2028, %v2027
      %v2229 = vpack.c.bf16 %v2030, %v2029
      %v2230 = vpack.c.bf16 %v2032, %v2031
      %v2231 = vpack.c.bf16 %v2034, %v2033
      %v2232 = vpack.c.bf16 %v2036, %v2035
      %v2233 = vpack.c.bf16 %v2038, %v2037
      %v2234 = vpack.c.bf16 %v2040, %v2039
      %v2235 = vpack.c.bf16 %v2042, %v2041
      %v2236 = vpack.c.bf16 %v2044, %v2043
      %v2237 = vpack.c.bf16 %v2046, %v2045
      %v2238 = vpack.c.bf16 %v2048, %v2047
      %v2239 = vpack.c.bf16 %v2050, %v2049
      %v2240 = vpack.c.bf16 %v2052, %v2051
      %v2241 = vpack.c.bf16 %v2054, %v2053
      %v2242 = vpack.c.bf16 %v2056, %v2055
      %v2243 = vpack.c.bf16 %v2058, %v2057
      %v2244 = vpack.c.bf16 %v2060, %v2059
      %v2245 = vpack.c.bf16 %v2062, %v2061
      %v2246 = vpack.c.bf16 %v2064, %v2063
      %v2247 = vpack.c.bf16 %v2066, %v2065
      %v2248 = vpack.c.bf16 %v2068, %v2067
      %v2249 = vpack.c.bf16 %v2070, %v2069
      %v2250 = vpack.c.bf16 %v2072, %v2071
      %v2251 = vpack.c.bf16 %v2074, %v2073
      %v2252 = vpack.c.bf16 %v2076, %v2075
      %v2253 = vpack.c.bf16 %v2078, %v2077
      %v2254 = vpack.c.bf16 %v2080, %v2079
      %v2255 = vpack.c.bf16 %v2082, %v2081
      %v2256 = vpack.c.bf16 %v2084, %v2083
      %v2257 = vpack.c.bf16 %v2086, %v2085
      %v2258 = vpack.c.bf16 %v2088, %v2087
      %v2259 = vpack.c.bf16 %v2090, %v2089
      %v2260 = vpack.c.bf16 %v2092, %v2091
      %v2261 = vpack.c.bf16 %v2094, %v2093
      %v2262 = vpack.c.bf16 %v2096, %v2095
      %v2263 = vpack.c.bf16 %v2098, %v2097
      %v2264 = vpack.c.bf16 %v2100, %v2099
      %v2265 = vpack.c.bf16 %v2102, %v2101
      %v2266 = vpack.c.bf16 %v2104, %v2103
      %v2267 = vpack.c.bf16 %v2106, %v2105
      %v2268 = vpack.c.bf16 %v2108, %v2107
      %v2269 = vld [vmem:[%s4] sm:$0xff]
      %v2270 = vld [vmem:[%s4 + $0x8] sm:$0xff]
      %v2271 = vld [vmem:[%s4 + $0x10] sm:$0xff]
      %v2272 = vld [vmem:[%s4 + $0x18] sm:$0xff]
      %v2273 = vpack.c.bf16 %v2270, %v2269
      %v2274 = vpack.c.bf16 %v2272, %v2271
      %v2276 = vsel %vm310, %v2109, 0
      %v2279 = vsel %vm310, %v2110, 0
      %v2282 = vsel %vm310, %v2111, 0
      %v2285 = vsel %vm310, %v2112, 0
      %v2288 = vsel %vm310, %v2113, 0
      %v2291 = vsel %vm310, %v2114, 0
      %v2294 = vsel %vm310, %v2115, 0
      %v2297 = vsel %vm310, %v2116, 0
      %v2300 = vsel %vm310, %v2117, 0
      %v2303 = vsel %vm310, %v2118, 0
      %v2306 = vsel %vm310, %v2119, 0
      %v2309 = vsel %vm310, %v2120, 0
      %v2312 = vsel %vm310, %v2121, 0
      %v2315 = vsel %vm310, %v2122, 0
      %v2318 = vsel %vm310, %v2123, 0
      %v2321 = vsel %vm310, %v2124, 0
      %v2324 = vsel %vm310, %v2125, 0
      %v2327 = vsel %vm310, %v2126, 0
      %v2330 = vsel %vm310, %v2127, 0
      %v2333 = vsel %vm310, %v2128, 0
      %v2336 = vsel %vm310, %v2129, 0
      %v2339 = vsel %vm310, %v2130, 0
      %v2342 = vsel %vm310, %v2131, 0
      %v2345 = vsel %vm310, %v2132, 0
      %v2348 = vsel %vm310, %v2133, 0
      %v2351 = vsel %vm310, %v2134, 0
      %v2354 = vsel %vm310, %v2135, 0
      %v2357 = vsel %vm310, %v2136, 0
      %v2360 = vsel %vm310, %v2137, 0
      %v2363 = vsel %vm310, %v2138, 0
      %v2366 = vsel %vm310, %v2139, 0
      %v2369 = vsel %vm310, %v2140, 0
      %v2372 = vsel %vm310, %v2141, 0
      %v2375 = vsel %vm310, %v2142, 0
      %v2378 = vsel %vm310, %v2143, 0
      %v2381 = vsel %vm310, %v2144, 0
      %v2384 = vsel %vm310, %v2145, 0
      %v2387 = vsel %vm310, %v2146, 0
      %v2390 = vsel %vm310, %v2147, 0
      %v2393 = vsel %vm310, %v2148, 0
      %v2396 = vsel %vm310, %v2149, 0
      %v2399 = vsel %vm310, %v2150, 0
      %v2402 = vsel %vm310, %v2151, 0
      %v2405 = vsel %vm310, %v2152, 0
      %v2408 = vsel %vm310, %v2153, 0
      %v2411 = vsel %vm310, %v2154, 0
      %v2414 = vsel %vm310, %v2155, 0
      %v2417 = vsel %vm310, %v2156, 0
      %v2420 = vsel %vm310, %v2157, 0
      %v2423 = vsel %vm310, %v2158, 0
      %v2426 = vsel %vm310, %v2159, 0
      %v2429 = vsel %vm310, %v2160, 0
      %v2432 = vsel %vm310, %v2161, 0
      %v2435 = vsel %vm310, %v2162, 0
      %v2438 = vsel %vm310, %v2163, 0
      %v2441 = vsel %vm310, %v2164, 0
      %v2444 = vsel %vm310, %v2165, 0
      %v2447 = vsel %vm310, %v2166, 0
      %v2450 = vsel %vm310, %v2167, 0
      %v2453 = vsel %vm310, %v2168, 0
      %v2456 = vsel %vm310, %v2169, 0
      %v2459 = vsel %vm310, %v2170, 0
      %v2462 = vsel %vm310, %v2171, 0
      %v2465 = vsel %vm310, %v2172, 0
      %v2468 = vsel %vm310, %v2173, 0
      %v2471 = vsel %vm310, %v2174, 0
      %v2474 = vsel %vm310, %v2175, 0
      %v2477 = vsel %vm310, %v2176, 0
      %v2480 = vsel %vm310, %v2177, 0
      %v2483 = vsel %vm310, %v2178, 0
      %v2486 = vsel %vm310, %v2179, 0
      %v2489 = vsel %vm310, %v2180, 0
      %v2492 = vsel %vm310, %v2181, 0
      %v2495 = vsel %vm310, %v2182, 0
      %v2498 = vsel %vm310, %v2183, 0
      %v2501 = vsel %vm310, %v2184, 0
      %v2504 = vsel %vm310, %v2185, 0
      %v2507 = vsel %vm310, %v2186, 0
      %v2510 = vsel %vm310, %v2187, 0
      %v2513 = vsel %vm310, %v2188, 0
      %v2516 = vsel %vm310, %v2189, 0
      %v2519 = vsel %vm310, %v2190, 0
      %v2522 = vsel %vm310, %v2191, 0
      %v2525 = vsel %vm310, %v2192, 0
      %v2528 = vsel %vm310, %v2193, 0
      %v2531 = vsel %vm310, %v2194, 0
      %v2534 = vsel %vm310, %v2195, 0
      %v2537 = vsel %vm310, %v2196, 0
      %v2540 = vsel %vm310, %v2197, 0
      %v2543 = vsel %vm310, %v2198, 0
      %v2546 = vsel %vm310, %v2199, 0
      %v2549 = vsel %vm310, %v2200, 0
      %v2552 = vsel %vm310, %v2201, 0
      %v2555 = vsel %vm310, %v2202, 0
      %v2558 = vsel %vm310, %v2203, 0
      %v2561 = vsel %vm310, %v2204, 0
      %v2564 = vsel %vm310, %v2205, 0
      %v2567 = vsel %vm310, %v2206, 0
      %v2570 = vsel %vm310, %v2207, 0
      %v2573 = vsel %vm310, %v2208, 0
      %v2576 = vsel %vm310, %v2209, 0
      %v2579 = vsel %vm310, %v2210, 0
      %v2582 = vsel %vm310, %v2211, 0
      %v2585 = vsel %vm310, %v2212, 0
      %v2588 = vsel %vm310, %v2213, 0
      %v2591 = vsel %vm310, %v2214, 0
      %v2594 = vsel %vm310, %v2215, 0
      %v2597 = vsel %vm310, %v2216, 0
      %v2600 = vsel %vm310, %v2217, 0
      %v2603 = vsel %vm310, %v2218, 0
      %v2606 = vsel %vm310, %v2219, 0
      %v2609 = vsel %vm310, %v2220, 0
      %v2612 = vsel %vm310, %v2221, 0
      %v2615 = vsel %vm310, %v2222, 0
      %v2618 = vsel %vm310, %v2223, 0
      %v2621 = vsel %vm310, %v2224, 0
      %v2624 = vsel %vm310, %v2225, 0
      %v2627 = vsel %vm310, %v2226, 0
      %v2630 = vsel %vm310, %v2227, 0
      %v2633 = vsel %vm310, %v2228, 0
      %v2636 = vsel %vm310, %v2229, 0
      %v2639 = vsel %vm310, %v2230, 0
      %v2642 = vsel %vm310, %v2231, 0
      %v2645 = vsel %vm310, %v2232, 0
      %v2648 = vsel %vm310, %v2233, 0
      %v2651 = vsel %vm310, %v2234, 0
      %v2654 = vsel %vm310, %v2235, 0
      %v2657 = vsel %vm310, %v2236, 0
      %v2660 = vsel %vm310, %v2237, 0
      %v2663 = vsel %vm310, %v2238, 0
      %v2666 = vsel %vm310, %v2239, 0
      %v2669 = vsel %vm310, %v2240, 0
      %v2672 = vsel %vm310, %v2241, 0
      %v2675 = vsel %vm310, %v2242, 0
      %v2678 = vsel %vm310, %v2243, 0
      %v2681 = vsel %vm310, %v2244, 0
      %v2684 = vsel %vm310, %v2245, 0
      %v2687 = vsel %vm310, %v2246, 0
      %v2690 = vsel %vm310, %v2247, 0
      %v2693 = vsel %vm310, %v2248, 0
      %v2696 = vsel %vm310, %v2249, 0
      %v2699 = vsel %vm310, %v2250, 0
      %v2702 = vsel %vm310, %v2251, 0
      %v2705 = vsel %vm310, %v2252, 0
      %v2708 = vsel %vm310, %v2253, 0
      %v2711 = vsel %vm310, %v2254, 0
      %v2714 = vsel %vm310, %v2255, 0
      %v2717 = vsel %vm310, %v2256, 0
      %v2720 = vsel %vm310, %v2257, 0
      %v2723 = vsel %vm310, %v2258, 0
      %v2726 = vsel %vm310, %v2259, 0
      %v2729 = vsel %vm310, %v2260, 0
      %v2732 = vsel %vm310, %v2261, 0
      %v2735 = vsel %vm310, %v2262, 0
      %v2738 = vsel %vm310, %v2263, 0
      %v2741 = vsel %vm310, %v2264, 0
      %v2744 = vsel %vm310, %v2265, 0
      %v2747 = vsel %vm310, %v2266, 0
      %v2750 = vsel %vm310, %v2267, 0
      %v2753 = vsel %vm310, %v2268, 0
      %2755 = vmatprep.subr.bf16.mxu0 0
      %2756 = vmatpush1.bf16.msra.mxu0 %v2273
      %2757 = vmatprep.subr.bf16.mxu0 0
      %2758 = vmatpush1.bf16.msra.mxu0 %v2274
      %2759 = vmatprep.subr.bf16.mxu0 0
      %2760 = vmatpush1.bf16.msra.mxu0 0
      %2761 = vmatprep.subr.bf16.mxu0 0
      %2762 = vmatpush1.bf16.msra.mxu0 0
      %2763 = vmatprep.subr.bf16.mxu0 0
      %2764 = vmatpush1.bf16.msra.mxu0 0
      %2765 = vmatprep.subr.bf16.mxu0 0
      %2766 = vmatpush1.bf16.msra.mxu0 0
      %2767 = vmatprep.subr.bf16.mxu0 0
      %2768 = vmatpush1.bf16.msra.mxu0 0
      %2769 = vmatprep.subr.bf16.mxu0 0
      %2770 = vmatpush1.bf16.msra.mxu0 0
      %2771 = vmatprep.subr.bf16.mxu0 0
      %2772 = vmatpush1.bf16.msra.mxu0 0
      %2773 = vmatprep.subr.bf16.mxu0 0
      %2774 = vmatpush1.bf16.msra.mxu0 0
      %2775 = vmatprep.subr.bf16.mxu0 0
      %2776 = vmatpush1.bf16.msra.mxu0 0
      %2777 = vmatprep.subr.bf16.mxu0 0
      %2778 = vmatpush1.bf16.msra.mxu0 0
      %2779 = vmatprep.subr.bf16.mxu0 0
      %2780 = vmatpush1.bf16.msra.mxu0 0
      %2781 = vmatprep.subr.bf16.mxu0 0
      %2782 = vmatpush1.bf16.msra.mxu0 0
      %2783 = vmatprep.subr.bf16.mxu0 0
      %2784 = vmatpush1.bf16.msra.mxu0 0
      %2785 = vmatprep.subr.bf16.mxu0 0
      %2786 = vmatpush1.bf16.msra.mxu0 0
      %2787 = vmatprep.mubr.bf16.mxu0 0
      %2788 = vmatmul.mubr.bf16.gmra.mrb[0].mxu0 %v2276
      %v2789 = vpop.f32.mrb[0].mxu0
      %v2790 = vadd.f32 0.0, %v2789
      %v2791 = vpop.f32.mrb[0].mxu0
      %v2792 = vpop.f32.mrb[0].mxu0
      %v2793 = vadd.f32 0.0, %v2792
      %v2794 = vpop.f32.mrb[0].mxu0
      %2795 = vmatprep.mubr.bf16.mxu0 0
      %2796 = vmatmul.mubr.bf16.gmra.mrb[0].mxu0 %v2279
      %v2797 = vpop.f32.mrb[0].mxu0
      %v2798 = vadd.f32 0.0, %v2797
      %v2799 = vpop.f32.mrb[0].mxu0
      %v2800 = vpop.f32.mrb[0].mxu0
      %v2801 = vadd.f32 0.0, %v2800
      %v2802 = vpop.f32.mrb[0].mxu0
      %2803 = vmatprep.mubr.bf16.mxu0 0
      %2804 = vmatmul.mubr.bf16.gmra.mrb[0].mxu0 %v2282
      %v2805 = vpop.f32.mrb[0].mxu0
      %v2806 = vadd.f32 0.0, %v2805
      %v2807 = vpop.f32.mrb[0].mxu0
      %v2808 = vpop.f32.mrb[0].mxu0
      %v2809 = vadd.f32 0.0, %v2808
      %v2810 = vpop.f32.mrb[0].mxu0
      %2811 = vmatprep.mubr.bf16.mxu0 0
      %2812 = vmatmul.mubr.bf16.gmra.mrb[0].mxu0 %v2285
      %v2813 = vpop.f32.mrb[0].mxu0
      %v2814 = vadd.f32 0.0, %v2813
      %v2815 = vpop.f32.mrb[0].mxu0
      %v2816 = vpop.f32.mrb[0].mxu0
      %v2817 = vadd.f32 0.0, %v2816
      %v2818 = vpop.f32.mrb[0].mxu0
      %2819 = vmatprep.mubr.bf16.mxu0 0
      %2820 = vmatmul.mubr.bf16.gmra.mrb[0].mxu0 %v2288
      %v2821 = vpop.f32.mrb[0].mxu0
      %v2822 = vadd.f32 0.0, %v2821
      %v2823 = vpop.f32.mrb[0].mxu0
      %v2824 = vpop.f32.mrb[0].mxu0
      %v2825 = vadd.f32 0.0, %v2824
      %v2826 = vpop.f32.mrb[0].mxu0
      %2827 = vmatprep.mubr.bf16.mxu0 0
      %2828 = vmatmul.mubr.bf16.gmra.mrb[0].mxu0 %v2291
      %v2829 = vpop.f32.mrb[0].mxu0
      %v2830 = vadd.f32 0.0, %v2829
      %v2831 = vpop.f32.mrb[0].mxu0
      %v2832 = vpop.f32.mrb[0].mxu0
      %v2833 = vadd.f32 0.0, %v2832
      %v2834 = vpop.f32.mrb[0].mxu0
      %2835 = vmatprep.mubr.bf16.mxu0 0
      %2836 = vmatmul.mubr.bf16.gmra.mrb[0].mxu0 %v2294
      %v2837 = vpop.f32.mrb[0].mxu0
      %v2838 = vadd.f32 0.0, %v2837
      %v2839 = vpop.f32.mrb[0].mxu0
      %v2840 = vpop.f32.mrb[0].mxu0
      %v2841 = vadd.f32 0.0, %v2840
      %v2842 = vpop.f32.mrb[0].mxu0
      %2843 = vmatprep.mubr.bf16.mxu0 0
      %2844 = vmatmul.mubr.bf16.gmra.mrb[0].mxu0 %v2297
      %v2845 = vpop.f32.mrb[0].mxu0
      %v2846 = vadd.f32 0.0, %v2845
      %v2847 = vpop.f32.mrb[0].mxu0
      %v2848 = vpop.f32.mrb[0].mxu0
      %v2849 = vadd.f32 0.0, %v2848
      %v2850 = vpop.f32.mrb[0].mxu0
      %2851 = vmatprep.mubr.bf16.mxu0 0
      %2852 = vmatmul.mubr.bf16.gmra.mrb[0].mxu0 %v2300
      %v2853 = vpop.f32.mrb[0].mxu0
      %v2854 = vadd.f32 0.0, %v2853
      %v2855 = vpop.f32.mrb[0].mxu0
      %v2856 = vpop.f32.mrb[0].mxu0
      %v2857 = vadd.f32 0.0, %v2856
      %v2858 = vpop.f32.mrb[0].mxu0
      %2859 = vmatprep.mubr.bf16.mxu0 0
      %2860 = vmatmul.mubr.bf16.gmra.mrb[0].mxu0 %v2303
      %v2861 = vpop.f32.mrb[0].mxu0
      %v2862 = vadd.f32 0.0, %v2861
      %v2863 = vpop.f32.mrb[0].mxu0
      %v2864 = vpop.f32.mrb[0].mxu0
      %v2865 = vadd.f32 0.0, %v2864
      %v2866 = vpop.f32.mrb[0].mxu0
      %2867 = vmatprep.mubr.bf16.mxu0 0
      %2868 = vmatmul.mubr.bf16.gmra.mrb[0].mxu0 %v2306
      %v2869 = vpop.f32.mrb[0].mxu0
      %v2870 = vadd.f32 0.0, %v2869
      %v2871 = vpop.f32.mrb[0].mxu0
      %v2872 = vpop.f32.mrb[0].mxu0
      %v2873 = vadd.f32 0.0, %v2872
      %v2874 = vpop.f32.mrb[0].mxu0
      %2875 = vmatprep.mubr.bf16.mxu0 0
      %2876 = vmatmul.mubr.bf16.gmra.mrb[0].mxu0 %v2309
      %v2877 = vpop.f32.mrb[0].mxu0
      %v2878 = vadd.f32 0.0, %v2877
      %v2879 = vpop.f32.mrb[0].mxu0
      %v2880 = vpop.f32.mrb[0].mxu0
      %v2881 = vadd.f32 0.0, %v2880
      %v2882 = vpop.f32.mrb[0].mxu0
      %2883 = vmatprep.mubr.bf16.mxu0 0
      %2884 = vmatmul.mubr.bf16.gmra.mrb[0].mxu0 %v2312
      %v2885 = vpop.f32.mrb[0].mxu0
      %v2886 = vadd.f32 0.0, %v2885
      %v2887 = vpop.f32.mrb[0].mxu0
      %v2888 = vpop.f32.mrb[0].mxu0
      %v2889 = vadd.f32 0.0, %v2888
      %v2890 = vpop.f32.mrb[0].mxu0
      %2891 = vmatprep.mubr.bf16.mxu0 0
      %2892 = vmatmul.mubr.bf16.gmra.mrb[0].mxu0 %v2315
      %v2893 = vpop.f32.mrb[0].mxu0
      %v2894 = vadd.f32 0.0, %v2893
      %v2895 = vpop.f32.mrb[0].mxu0
      %v2896 = vpop.f32.mrb[0].mxu0
      %v2897 = vadd.f32 0.0, %v2896
      %v2898 = vpop.f32.mrb[0].mxu0
      %2899 = vmatprep.mubr.bf16.mxu0 0
      %2900 = vmatmul.mubr.bf16.gmra.mrb[0].mxu0 %v2318
      %v2901 = vpop.f32.mrb[0].mxu0
      %v2902 = vadd.f32 0.0, %v2901
      %v2903 = vpop.f32.mrb[0].mxu0
      %v2904 = vpop.f32.mrb[0].mxu0
      %v2905 = vadd.f32 0.0, %v2904
      %v2906 = vpop.f32.mrb[0].mxu0
      %2907 = vmatprep.mubr.bf16.mxu0 0
      %2908 = vmatmul.mubr.bf16.gmra.mrb[0].mxu0 %v2321
      %v2909 = vpop.f32.mrb[0].mxu0
      %v2910 = vadd.f32 0.0, %v2909
      %v2911 = vpop.f32.mrb[0].mxu0
      %v2912 = vpop.f32.mrb[0].mxu0
      %v2913 = vadd.f32 0.0, %v2912
      %v2914 = vpop.f32.mrb[0].mxu0
      %2915 = vmatprep.mubr.bf16.mxu0 0
      %2916 = vmatmul.mubr.bf16.gmra.mrb[0].mxu0 %v2324
      %v2917 = vpop.f32.mrb[0].mxu0
      %v2918 = vadd.f32 0.0, %v2917
      %v2919 = vpop.f32.mrb[0].mxu0
      %v2920 = vpop.f32.mrb[0].mxu0
      %v2921 = vadd.f32 0.0, %v2920
      %v2922 = vpop.f32.mrb[0].mxu0
      %2923 = vmatprep.mubr.bf16.mxu0 0
      %2924 = vmatmul.mubr.bf16.gmra.mrb[0].mxu0 %v2327
      %v2925 = vpop.f32.mrb[0].mxu0
      %v2926 = vadd.f32 0.0, %v2925
      %v2927 = vpop.f32.mrb[0].mxu0
      %v2928 = vpop.f32.mrb[0].mxu0
      %v2929 = vadd.f32 0.0, %v2928
      %v2930 = vpop.f32.mrb[0].mxu0
      %2931 = vmatprep.mubr.bf16.mxu0 0
      %2932 = vmatmul.mubr.bf16.gmra.mrb[0].mxu0 %v2330
      %v2933 = vpop.f32.mrb[0].mxu0
      %v2934 = vadd.f32 0.0, %v2933
      %v2935 = vpop.f32.mrb[0].mxu0
      %v2936 = vpop.f32.mrb[0].mxu0
      %v2937 = vadd.f32 0.0, %v2936
      %v2938 = vpop.f32.mrb[0].mxu0
      %2939 = vmatprep.mubr.bf16.mxu0 0
      %2940 = vmatmul.mubr.bf16.gmra.mrb[0].mxu0 %v2333
      %v2941 = vpop.f32.mrb[0].mxu0
      %v2942 = vadd.f32 0.0, %v2941
      %v2943 = vpop.f32.mrb[0].mxu0
      %v2944 = vpop.f32.mrb[0].mxu0
      %v2945 = vadd.f32 0.0, %v2944
      %v2946 = vpop.f32.mrb[0].mxu0
      %2947 = vmatprep.mubr.bf16.mxu0 0
      %2948 = vmatmul.mubr.bf16.gmra.mrb[0].mxu0 %v2336
      %v2949 = vpop.f32.mrb[0].mxu0
      %v2950 = vadd.f32 0.0, %v2949
      %v2951 = vpop.f32.mrb[0].mxu0
      %v2952 = vpop.f32.mrb[0].mxu0
      %v2953 = vadd.f32 0.0, %v2952
      %v2954 = vpop.f32.mrb[0].mxu0
      %2955 = vmatprep.mubr.bf16.mxu0 0
      %2956 = vmatmul.mubr.bf16.gmra.mrb[0].mxu0 %v2339
      %v2957 = vpop.f32.mrb[0].mxu0
      %v2958 = vadd.f32 0.0, %v2957
      %v2959 = vpop.f32.mrb[0].mxu0
      %v2960 = vpop.f32.mrb[0].mxu0
      %v2961 = vadd.f32 0.0, %v2960
      %v2962 = vpop.f32.mrb[0].mxu0
      %2963 = vmatprep.mubr.bf16.mxu0 0
      %2964 = vmatmul.mubr.bf16.gmra.mrb[0].mxu0 %v2342
      %v2965 = vpop.f32.mrb[0].mxu0
      %v2966 = vadd.f32 0.0, %v2965
      %v2967 = vpop.f32.mrb[0].mxu0
      %v2968 = vpop.f32.mrb[0].mxu0
      %v2969 = vadd.f32 0.0, %v2968
      %v2970 = vpop.f32.mrb[0].mxu0
      %2971 = vmatprep.mubr.bf16.mxu0 0
      %2972 = vmatmul.mubr.bf16.gmra.mrb[0].mxu0 %v2345
      %v2973 = vpop.f32.mrb[0].mxu0
      %v2974 = vadd.f32 0.0, %v2973
      %v2975 = vpop.f32.mrb[0].mxu0
      %v2976 = vpop.f32.mrb[0].mxu0
      %v2977 = vadd.f32 0.0, %v2976
      %v2978 = vpop.f32.mrb[0].mxu0
      %2979 = vmatprep.mubr.bf16.mxu0 0
      %2980 = vmatmul.mubr.bf16.gmra.mrb[0].mxu0 %v2348
      %v2981 = vpop.f32.mrb[0].mxu0
      %v2982 = vadd.f32 0.0, %v2981
      %v2983 = vpop.f32.mrb[0].mxu0
      %v2984 = vpop.f32.mrb[0].mxu0
      %v2985 = vadd.f32 0.0, %v2984
      %v2986 = vpop.f32.mrb[0].mxu0
      %2987 = vmatprep.mubr.bf16.mxu0 0
      %2988 = vmatmul.mubr.bf16.gmra.mrb[0].mxu0 %v2351
      %v2989 = vpop.f32.mrb[0].mxu0
      %v2990 = vadd.f32 0.0, %v2989
      %v2991 = vpop.f32.mrb[0].mxu0
      %v2992 = vpop.f32.mrb[0].mxu0
      %v2993 = vadd.f32 0.0, %v2992
      %v2994 = vpop.f32.mrb[0].mxu0
      %2995 = vmatprep.mubr.bf16.mxu0 0
      %2996 = vmatmul.mubr.bf16.gmra.mrb[0].mxu0 %v2354
      %v2997 = vpop.f32.mrb[0].mxu0
      %v2998 = vadd.f32 0.0, %v2997
      %v2999 = vpop.f32.mrb[0].mxu0
      %v3000 = vpop.f32.mrb[0].mxu0
      %v3001 = vadd.f32 0.0, %v3000
      %v3002 = vpop.f32.mrb[0].mxu0
      %3003 = vmatprep.mubr.bf16.mxu0 0
      %3004 = vmatmul.mubr.bf16.gmra.mrb[0].mxu0 %v2357
      %v3005 = vpop.f32.mrb[0].mxu0
      %v3006 = vadd.f32 0.0, %v3005
      %v3007 = vpop.f32.mrb[0].mxu0
      %v3008 = vpop.f32.mrb[0].mxu0
      %v3009 = vadd.f32 0.0, %v3008
      %v3010 = vpop.f32.mrb[0].mxu0
      %3011 = vmatprep.mubr.bf16.mxu0 0
      %3012 = vmatmul.mubr.bf16.gmra.mrb[0].mxu0 %v2360
      %v3013 = vpop.f32.mrb[0].mxu0
      %v3014 = vadd.f32 0.0, %v3013
      %v3015 = vpop.f32.mrb[0].mxu0
      %v3016 = vpop.f32.mrb[0].mxu0
      %v3017 = vadd.f32 0.0, %v3016
      %v3018 = vpop.f32.mrb[0].mxu0
      %3019 = vmatprep.mubr.bf16.mxu0 0
      %3020 = vmatmul.mubr.bf16.gmra.mrb[0].mxu0 %v2363
      %v3021 = vpop.f32.mrb[0].mxu0
      %v3022 = vadd.f32 0.0, %v3021
      %v3023 = vpop.f32.mrb[0].mxu0
      %v3024 = vpop.f32.mrb[0].mxu0
      %v3025 = vadd.f32 0.0, %v3024
      %v3026 = vpop.f32.mrb[0].mxu0
      %3027 = vmatprep.mubr.bf16.mxu0 0
      %3028 = vmatmul.mubr.bf16.gmra.mrb[0].mxu0 %v2366
      %v3029 = vpop.f32.mrb[0].mxu0
      %v3030 = vadd.f32 0.0, %v3029
      %v3031 = vpop.f32.mrb[0].mxu0
      %v3032 = vpop.f32.mrb[0].mxu0
      %v3033 = vadd.f32 0.0, %v3032
      %v3034 = vpop.f32.mrb[0].mxu0
      %3035 = vmatprep.mubr.bf16.mxu0 0
      %3036 = vmatmul.mubr.bf16.gmra.mrb[0].mxu0 %v2369
      %v3037 = vpop.f32.mrb[0].mxu0
      %v3038 = vadd.f32 0.0, %v3037
      %v3039 = vpop.f32.mrb[0].mxu0
      %v3040 = vpop.f32.mrb[0].mxu0
      %v3041 = vadd.f32 0.0, %v3040
      %v3042 = vpop.f32.mrb[0].mxu0
      %3043 = vmatprep.mubr.bf16.mxu0 0
      %3044 = vmatmul.mubr.bf16.gmra.mrb[0].mxu0 %v2372
      %v3045 = vpop.f32.mrb[0].mxu0
      %v3046 = vadd.f32 0.0, %v3045
      %v3047 = vpop.f32.mrb[0].mxu0
      %v3048 = vpop.f32.mrb[0].mxu0
      %v3049 = vadd.f32 0.0, %v3048
      %v3050 = vpop.f32.mrb[0].mxu0
      %3051 = vmatprep.mubr.bf16.mxu0 0
      %3052 = vmatmul.mubr.bf16.gmra.mrb[0].mxu0 %v2375
      %v3053 = vpop.f32.mrb[0].mxu0
      %v3054 = vadd.f32 0.0, %v3053
      %v3055 = vpop.f32.mrb[0].mxu0
      %v3056 = vpop.f32.mrb[0].mxu0
      %v3057 = vadd.f32 0.0, %v3056
      %v3058 = vpop.f32.mrb[0].mxu0
      %3059 = vmatprep.mubr.bf16.mxu0 0
      %3060 = vmatmul.mubr.bf16.gmra.mrb[0].mxu0 %v2378
      %v3061 = vpop.f32.mrb[0].mxu0
      %v3062 = vadd.f32 0.0, %v3061
      %v3063 = vpop.f32.mrb[0].mxu0
      %v3064 = vpop.f32.mrb[0].mxu0
      %v3065 = vadd.f32 0.0, %v3064
      %v3066 = vpop.f32.mrb[0].mxu0
      %3067 = vmatprep.mubr.bf16.mxu0 0
      %3068 = vmatmul.mubr.bf16.gmra.mrb[0].mxu0 %v2381
      %v3069 = vpop.f32.mrb[0].mxu0
      %v3070 = vadd.f32 0.0, %v3069
      %v3071 = vpop.f32.mrb[0].mxu0
      %v3072 = vpop.f32.mrb[0].mxu0
      %v3073 = vadd.f32 0.0, %v3072
      %v3074 = vpop.f32.mrb[0].mxu0
      %3075 = vmatprep.mubr.bf16.mxu0 0
      %3076 = vmatmul.mubr.bf16.gmra.mrb[0].mxu0 %v2384
      %v3077 = vpop.f32.mrb[0].mxu0
      %v3078 = vadd.f32 0.0, %v3077
      %v3079 = vpop.f32.mrb[0].mxu0
      %v3080 = vpop.f32.mrb[0].mxu0
      %v3081 = vadd.f32 0.0, %v3080
      %v3082 = vpop.f32.mrb[0].mxu0
      %3083 = vmatprep.mubr.bf16.mxu0 0
      %3084 = vmatmul.mubr.bf16.gmra.mrb[0].mxu0 %v2387
      %v3085 = vpop.f32.mrb[0].mxu0
      %v3086 = vadd.f32 0.0, %v3085
      %v3087 = vpop.f32.mrb[0].mxu0
      %v3088 = vpop.f32.mrb[0].mxu0
      %v3089 = vadd.f32 0.0, %v3088
      %v3090 = vpop.f32.mrb[0].mxu0
      %3091 = vmatprep.mubr.bf16.mxu0 0
      %3092 = vmatmul.mubr.bf16.gmra.mrb[0].mxu0 %v2390
      %v3093 = vpop.f32.mrb[0].mxu0
      %v3094 = vadd.f32 0.0, %v3093
      %v3095 = vpop.f32.mrb[0].mxu0
      %v3096 = vpop.f32.mrb[0].mxu0
      %v3097 = vadd.f32 0.0, %v3096
      %v3098 = vpop.f32.mrb[0].mxu0
      %3099 = vmatprep.mubr.bf16.mxu0 0
      %3100 = vmatmul.mubr.bf16.gmra.mrb[0].mxu0 %v2393
      %v3101 = vpop.f32.mrb[0].mxu0
      %v3102 = vadd.f32 0.0, %v3101
      %v3103 = vpop.f32.mrb[0].mxu0
      %v3104 = vpop.f32.mrb[0].mxu0
      %v3105 = vadd.f32 0.0, %v3104
      %v3106 = vpop.f32.mrb[0].mxu0
      %3107 = vmatprep.mubr.bf16.mxu0 0
      %3108 = vmatmul.mubr.bf16.gmra.mrb[0].mxu0 %v2396
      %v3109 = vpop.f32.mrb[0].mxu0
      %v3110 = vadd.f32 0.0, %v3109
      %v3111 = vpop.f32.mrb[0].mxu0
      %v3112 = vpop.f32.mrb[0].mxu0
      %v3113 = vadd.f32 0.0, %v3112
      %v3114 = vpop.f32.mrb[0].mxu0
      %3115 = vmatprep.mubr.bf16.mxu0 0
      %3116 = vmatmul.mubr.bf16.gmra.mrb[0].mxu0 %v2399
      %v3117 = vpop.f32.mrb[0].mxu0
      %v3118 = vadd.f32 0.0, %v3117
      %v3119 = vpop.f32.mrb[0].mxu0
      %v3120 = vpop.f32.mrb[0].mxu0
      %v3121 = vadd.f32 0.0, %v3120
      %v3122 = vpop.f32.mrb[0].mxu0
      %3123 = vmatprep.mubr.bf16.mxu0 0
      %3124 = vmatmul.mubr.bf16.gmra.mrb[0].mxu0 %v2402
      %v3125 = vpop.f32.mrb[0].mxu0
      %v3126 = vadd.f32 0.0, %v3125
      %v3127 = vpop.f32.mrb[0].mxu0
      %v3128 = vpop.f32.mrb[0].mxu0
      %v3129 = vadd.f32 0.0, %v3128
      %v3130 = vpop.f32.mrb[0].mxu0
      %3131 = vmatprep.mubr.bf16.mxu0 0
      %3132 = vmatmul.mubr.bf16.gmra.mrb[0].mxu0 %v2405
      %v3133 = vpop.f32.mrb[0].mxu0
      %v3134 = vadd.f32 0.0, %v3133
      %v3135 = vpop.f32.mrb[0].mxu0
      %v3136 = vpop.f32.mrb[0].mxu0
      %v3137 = vadd.f32 0.0, %v3136
      %v3138 = vpop.f32.mrb[0].mxu0
      %3139 = vmatprep.mubr.bf16.mxu0 0
      %3140 = vmatmul.mubr.bf16.gmra.mrb[0].mxu0 %v2408
      %v3141 = vpop.f32.mrb[0].mxu0
      %v3142 = vadd.f32 0.0, %v3141
      %v3143 = vpop.f32.mrb[0].mxu0
      %v3144 = vpop.f32.mrb[0].mxu0
      %v3145 = vadd.f32 0.0, %v3144
      %v3146 = vpop.f32.mrb[0].mxu0
      %3147 = vmatprep.mubr.bf16.mxu0 0
      %3148 = vmatmul.mubr.bf16.gmra.mrb[0].mxu0 %v2411
      %v3149 = vpop.f32.mrb[0].mxu0
      %v3150 = vadd.f32 0.0, %v3149
      %v3151 = vpop.f32.mrb[0].mxu0
      %v3152 = vpop.f32.mrb[0].mxu0
      %v3153 = vadd.f32 0.0, %v3152
      %v3154 = vpop.f32.mrb[0].mxu0
      %3155 = vmatprep.mubr.bf16.mxu0 0
      %3156 = vmatmul.mubr.bf16.gmra.mrb[0].mxu0 %v2414
      %v3157 = vpop.f32.mrb[0].mxu0
      %v3158 = vadd.f32 0.0, %v3157
      %v3159 = vpop.f32.mrb[0].mxu0
      %v3160 = vpop.f32.mrb[0].mxu0
      %v3161 = vadd.f32 0.0, %v3160
      %v3162 = vpop.f32.mrb[0].mxu0
      %3163 = vmatprep.mubr.bf16.mxu0 0
      %3164 = vmatmul.mubr.bf16.gmra.mrb[0].mxu0 %v2417
      %v3165 = vpop.f32.mrb[0].mxu0
      %v3166 = vadd.f32 0.0, %v3165
      %v3167 = vpop.f32.mrb[0].mxu0
      %v3168 = vpop.f32.mrb[0].mxu0
      %v3169 = vadd.f32 0.0, %v3168
      %v3170 = vpop.f32.mrb[0].mxu0
      %3171 = vmatprep.mubr.bf16.mxu0 0
      %3172 = vmatmul.mubr.bf16.gmra.mrb[0].mxu0 %v2420
      %v3173 = vpop.f32.mrb[0].mxu0
      %v3174 = vadd.f32 0.0, %v3173
      %v3175 = vpop.f32.mrb[0].mxu0
      %v3176 = vpop.f32.mrb[0].mxu0
      %v3177 = vadd.f32 0.0, %v3176
      %v3178 = vpop.f32.mrb[0].mxu0
      %3179 = vmatprep.mubr.bf16.mxu0 0
      %3180 = vmatmul.mubr.bf16.gmra.mrb[0].mxu0 %v2423
      %v3181 = vpop.f32.mrb[0].mxu0
      %v3182 = vadd.f32 0.0, %v3181
      %v3183 = vpop.f32.mrb[0].mxu0
      %v3184 = vpop.f32.mrb[0].mxu0
      %v3185 = vadd.f32 0.0, %v3184
      %v3186 = vpop.f32.mrb[0].mxu0
      %3187 = vmatprep.mubr.bf16.mxu0 0
      %3188 = vmatmul.mubr.bf16.gmra.mrb[0].mxu0 %v2426
      %v3189 = vpop.f32.mrb[0].mxu0
      %v3190 = vadd.f32 0.0, %v3189
      %v3191 = vpop.f32.mrb[0].mxu0
      %v3192 = vpop.f32.mrb[0].mxu0
      %v3193 = vadd.f32 0.0, %v3192
      %v3194 = vpop.f32.mrb[0].mxu0
      %3195 = vmatprep.mubr.bf16.mxu0 0
      %3196 = vmatmul.mubr.bf16.gmra.mrb[0].mxu0 %v2429
      %v3197 = vpop.f32.mrb[0].mxu0
      %v3198 = vadd.f32 0.0, %v3197
      %v3199 = vpop.f32.mrb[0].mxu0
      %v3200 = vpop.f32.mrb[0].mxu0
      %v3201 = vadd.f32 0.0, %v3200
      %v3202 = vpop.f32.mrb[0].mxu0
      %3203 = vmatprep.mubr.bf16.mxu0 0
      %3204 = vmatmul.mubr.bf16.gmra.mrb[0].mxu0 %v2432
      %v3205 = vpop.f32.mrb[0].mxu0
      %v3206 = vadd.f32 0.0, %v3205
      %v3207 = vpop.f32.mrb[0].mxu0
      %v3208 = vpop.f32.mrb[0].mxu0
      %v3209 = vadd.f32 0.0, %v3208
      %v3210 = vpop.f32.mrb[0].mxu0
      %3211 = vmatprep.mubr.bf16.mxu0 0
      %3212 = vmatmul.mubr.bf16.gmra.mrb[0].mxu0 %v2435
      %v3213 = vpop.f32.mrb[0].mxu0
      %v3214 = vadd.f32 0.0, %v3213
      %v3215 = vpop.f32.mrb[0].mxu0
      %v3216 = vpop.f32.mrb[0].mxu0
      %v3217 = vadd.f32 0.0, %v3216
      %v3218 = vpop.f32.mrb[0].mxu0
      %3219 = vmatprep.mubr.bf16.mxu0 0
      %3220 = vmatmul.mubr.bf16.gmra.mrb[0].mxu0 %v2438
      %v3221 = vpop.f32.mrb[0].mxu0
      %v3222 = vadd.f32 0.0, %v3221
      %v3223 = vpop.f32.mrb[0].mxu0
      %v3224 = vpop.f32.mrb[0].mxu0
      %v3225 = vadd.f32 0.0, %v3224
      %v3226 = vpop.f32.mrb[0].mxu0
      %3227 = vmatprep.mubr.bf16.mxu0 0
      %3228 = vmatmul.mubr.bf16.gmra.mrb[0].mxu0 %v2441
      %v3229 = vpop.f32.mrb[0].mxu0
      %v3230 = vadd.f32 0.0, %v3229
      %v3231 = vpop.f32.mrb[0].mxu0
      %v3232 = vpop.f32.mrb[0].mxu0
      %v3233 = vadd.f32 0.0, %v3232
      %v3234 = vpop.f32.mrb[0].mxu0
      %3235 = vmatprep.mubr.bf16.mxu0 0
      %3236 = vmatmul.mubr.bf16.gmra.mrb[0].mxu0 %v2444
      %v3237 = vpop.f32.mrb[0].mxu0
      %v3238 = vadd.f32 0.0, %v3237
      %v3239 = vpop.f32.mrb[0].mxu0
      %v3240 = vpop.f32.mrb[0].mxu0
      %v3241 = vadd.f32 0.0, %v3240
      %v3242 = vpop.f32.mrb[0].mxu0
      %3243 = vmatprep.mubr.bf16.mxu0 0
      %3244 = vmatmul.mubr.bf16.gmra.mrb[0].mxu0 %v2447
      %v3245 = vpop.f32.mrb[0].mxu0
      %v3246 = vadd.f32 0.0, %v3245
      %v3247 = vpop.f32.mrb[0].mxu0
      %v3248 = vpop.f32.mrb[0].mxu0
      %v3249 = vadd.f32 0.0, %v3248
      %v3250 = vpop.f32.mrb[0].mxu0
      %3251 = vmatprep.mubr.bf16.mxu0 0
      %3252 = vmatmul.mubr.bf16.gmra.mrb[0].mxu0 %v2450
      %v3253 = vpop.f32.mrb[0].mxu0
      %v3254 = vadd.f32 0.0, %v3253
      %v3255 = vpop.f32.mrb[0].mxu0
      %v3256 = vpop.f32.mrb[0].mxu0
      %v3257 = vadd.f32 0.0, %v3256
      %v3258 = vpop.f32.mrb[0].mxu0
      %3259 = vmatprep.mubr.bf16.mxu0 0
      %3260 = vmatmul.mubr.bf16.gmra.mrb[0].mxu0 %v2453
      %v3261 = vpop.f32.mrb[0].mxu0
      %v3262 = vadd.f32 0.0, %v3261
      %v3263 = vpop.f32.mrb[0].mxu0
      %v3264 = vpop.f32.mrb[0].mxu0
      %v3265 = vadd.f32 0.0, %v3264
      %v3266 = vpop.f32.mrb[0].mxu0
      %3267 = vmatprep.mubr.bf16.mxu0 0
      %3268 = vmatmul.mubr.bf16.gmra.mrb[0].mxu0 %v2456
      %v3269 = vpop.f32.mrb[0].mxu0
      %v3270 = vadd.f32 0.0, %v3269
      %v3271 = vpop.f32.mrb[0].mxu0
      %v3272 = vpop.f32.mrb[0].mxu0
      %v3273 = vadd.f32 0.0, %v3272
      %v3274 = vpop.f32.mrb[0].mxu0
      %3275 = vmatprep.mubr.bf16.mxu0 0
      %3276 = vmatmul.mubr.bf16.gmra.mrb[0].mxu0 %v2459
      %v3277 = vpop.f32.mrb[0].mxu0
      %v3278 = vadd.f32 0.0, %v3277
      %v3279 = vpop.f32.mrb[0].mxu0
      %v3280 = vpop.f32.mrb[0].mxu0
      %v3281 = vadd.f32 0.0, %v3280
      %v3282 = vpop.f32.mrb[0].mxu0
      %3283 = vmatprep.mubr.bf16.mxu0 0
      %3284 = vmatmul.mubr.bf16.gmra.mrb[0].mxu0 %v2462
      %v3285 = vpop.f32.mrb[0].mxu0
      %v3286 = vadd.f32 0.0, %v3285
      %v3287 = vpop.f32.mrb[0].mxu0
      %v3288 = vpop.f32.mrb[0].mxu0
      %v3289 = vadd.f32 0.0, %v3288
      %v3290 = vpop.f32.mrb[0].mxu0
      %3291 = vmatprep.mubr.bf16.mxu0 0
      %3292 = vmatmul.mubr.bf16.gmra.mrb[0].mxu0 %v2465
      %v3293 = vpop.f32.mrb[0].mxu0
      %v3294 = vadd.f32 0.0, %v3293
      %v3295 = vpop.f32.mrb[0].mxu0
      %v3296 = vpop.f32.mrb[0].mxu0
      %v3297 = vadd.f32 0.0, %v3296
      %v3298 = vpop.f32.mrb[0].mxu0
      %3299 = vmatprep.mubr.bf16.mxu0 0
      %3300 = vmatmul.mubr.bf16.gmra.mrb[0].mxu0 %v2468
      %v3301 = vpop.f32.mrb[0].mxu0
      %v3302 = vadd.f32 0.0, %v3301
      %v3303 = vpop.f32.mrb[0].mxu0
      %v3304 = vpop.f32.mrb[0].mxu0
      %v3305 = vadd.f32 0.0, %v3304
      %v3306 = vpop.f32.mrb[0].mxu0
      %3307 = vmatprep.mubr.bf16.mxu0 0
      %3308 = vmatmul.mubr.bf16.gmra.mrb[0].mxu0 %v2471
      %v3309 = vpop.f32.mrb[0].mxu0
      %v3310 = vadd.f32 0.0, %v3309
      %v3311 = vpop.f32.mrb[0].mxu0
      %v3312 = vpop.f32.mrb[0].mxu0
      %v3313 = vadd.f32 0.0, %v3312
      %v3314 = vpop.f32.mrb[0].mxu0
      %3315 = vmatprep.mubr.bf16.mxu0 0
      %3316 = vmatmul.mubr.bf16.gmra.mrb[0].mxu0 %v2474
      %v3317 = vpop.f32.mrb[0].mxu0
      %v3318 = vadd.f32 0.0, %v3317
      %v3319 = vpop.f32.mrb[0].mxu0
      %v3320 = vpop.f32.mrb[0].mxu0
      %v3321 = vadd.f32 0.0, %v3320
      %v3322 = vpop.f32.mrb[0].mxu0
      %3323 = vmatprep.mubr.bf16.mxu0 0
      %3324 = vmatmul.mubr.bf16.gmra.mrb[0].mxu0 %v2477
      %v3325 = vpop.f32.mrb[0].mxu0
      %v3326 = vadd.f32 0.0, %v3325
      %v3327 = vpop.f32.mrb[0].mxu0
      %v3328 = vpop.f32.mrb[0].mxu0
      %v3329 = vadd.f32 0.0, %v3328
      %v3330 = vpop.f32.mrb[0].mxu0
      %3331 = vmatprep.mubr.bf16.mxu0 0
      %3332 = vmatmul.mubr.bf16.gmra.mrb[0].mxu0 %v2480
      %v3333 = vpop.f32.mrb[0].mxu0
      %v3334 = vadd.f32 0.0, %v3333
      %v3335 = vpop.f32.mrb[0].mxu0
      %v3336 = vpop.f32.mrb[0].mxu0
      %v3337 = vadd.f32 0.0, %v3336
      %v3338 = vpop.f32.mrb[0].mxu0
      %3339 = vmatprep.mubr.bf16.mxu0 0
      %3340 = vmatmul.mubr.bf16.gmra.mrb[0].mxu0 %v2483
      %v3341 = vpop.f32.mrb[0].mxu0
      %v3342 = vadd.f32 0.0, %v3341
      %v3343 = vpop.f32.mrb[0].mxu0
      %v3344 = vpop.f32.mrb[0].mxu0
      %v3345 = vadd.f32 0.0, %v3344
      %v3346 = vpop.f32.mrb[0].mxu0
      %3347 = vmatprep.mubr.bf16.mxu0 0
      %3348 = vmatmul.mubr.bf16.gmra.mrb[0].mxu0 %v2486
      %v3349 = vpop.f32.mrb[0].mxu0
      %v3350 = vadd.f32 0.0, %v3349
      %v3351 = vpop.f32.mrb[0].mxu0
      %v3352 = vpop.f32.mrb[0].mxu0
      %v3353 = vadd.f32 0.0, %v3352
      %v3354 = vpop.f32.mrb[0].mxu0
      %3355 = vmatprep.mubr.bf16.mxu0 0
      %3356 = vmatmul.mubr.bf16.gmra.mrb[0].mxu0 %v2489
      %v3357 = vpop.f32.mrb[0].mxu0
      %v3358 = vadd.f32 0.0, %v3357
      %v3359 = vpop.f32.mrb[0].mxu0
      %v3360 = vpop.f32.mrb[0].mxu0
      %v3361 = vadd.f32 0.0, %v3360
      %v3362 = vpop.f32.mrb[0].mxu0
      %3363 = vmatprep.mubr.bf16.mxu0 0
      %3364 = vmatmul.mubr.bf16.gmra.mrb[0].mxu0 %v2492
      %v3365 = vpop.f32.mrb[0].mxu0
      %v3366 = vadd.f32 0.0, %v3365
      %v3367 = vpop.f32.mrb[0].mxu0
      %v3368 = vpop.f32.mrb[0].mxu0
      %v3369 = vadd.f32 0.0, %v3368
      %v3370 = vpop.f32.mrb[0].mxu0
      %3371 = vmatprep.mubr.bf16.mxu0 0
      %3372 = vmatmul.mubr.bf16.gmra.mrb[0].mxu0 %v2495
      %v3373 = vpop.f32.mrb[0].mxu0
      %v3374 = vadd.f32 0.0, %v3373
      %v3375 = vpop.f32.mrb[0].mxu0
      %v3376 = vpop.f32.mrb[0].mxu0
      %v3377 = vadd.f32 0.0, %v3376
      %v3378 = vpop.f32.mrb[0].mxu0
      %3379 = vmatprep.mubr.bf16.mxu0 0
      %3380 = vmatmul.mubr.bf16.gmra.mrb[0].mxu0 %v2498
      %v3381 = vpop.f32.mrb[0].mxu0
      %v3382 = vadd.f32 0.0, %v3381
      %v3383 = vpop.f32.mrb[0].mxu0
      %v3384 = vpop.f32.mrb[0].mxu0
      %v3385 = vadd.f32 0.0, %v3384
      %v3386 = vpop.f32.mrb[0].mxu0
      %3387 = vmatprep.mubr.bf16.mxu0 0
      %3388 = vmatmul.mubr.bf16.gmra.mrb[0].mxu0 %v2501
      %v3389 = vpop.f32.mrb[0].mxu0
      %v3390 = vadd.f32 0.0, %v3389
      %v3391 = vpop.f32.mrb[0].mxu0
      %v3392 = vpop.f32.mrb[0].mxu0
      %v3393 = vadd.f32 0.0, %v3392
      %v3394 = vpop.f32.mrb[0].mxu0
      %3395 = vmatprep.mubr.bf16.mxu0 0
      %3396 = vmatmul.mubr.bf16.gmra.mrb[0].mxu0 %v2504
      %v3397 = vpop.f32.mrb[0].mxu0
      %v3398 = vadd.f32 0.0, %v3397
      %v3399 = vpop.f32.mrb[0].mxu0
      %v3400 = vpop.f32.mrb[0].mxu0
      %v3401 = vadd.f32 0.0, %v3400
      %v3402 = vpop.f32.mrb[0].mxu0
      %3403 = vmatprep.mubr.bf16.mxu0 0
      %3404 = vmatmul.mubr.bf16.gmra.mrb[0].mxu0 %v2507
      %v3405 = vpop.f32.mrb[0].mxu0
      %v3406 = vadd.f32 0.0, %v3405
      %v3407 = vpop.f32.mrb[0].mxu0
      %v3408 = vpop.f32.mrb[0].mxu0
      %v3409 = vadd.f32 0.0, %v3408
      %v3410 = vpop.f32.mrb[0].mxu0
      %3411 = vmatprep.mubr.bf16.mxu0 0
      %3412 = vmatmul.mubr.bf16.gmra.mrb[0].mxu0 %v2510
      %v3413 = vpop.f32.mrb[0].mxu0
      %v3414 = vadd.f32 0.0, %v3413
      %v3415 = vpop.f32.mrb[0].mxu0
      %v3416 = vpop.f32.mrb[0].mxu0
      %v3417 = vadd.f32 0.0, %v3416
      %v3418 = vpop.f32.mrb[0].mxu0
      %3419 = vmatprep.mubr.bf16.mxu0 0
      %3420 = vmatmul.mubr.bf16.gmra.mrb[0].mxu0 %v2513
      %v3421 = vpop.f32.mrb[0].mxu0
      %v3422 = vadd.f32 0.0, %v3421
      %v3423 = vpop.f32.mrb[0].mxu0
      %v3424 = vpop.f32.mrb[0].mxu0
      %v3425 = vadd.f32 0.0, %v3424
      %v3426 = vpop.f32.mrb[0].mxu0
      %3427 = vmatprep.mubr.bf16.mxu0 0
      %3428 = vmatmul.mubr.bf16.gmra.mrb[0].mxu0 %v2516
      %v3429 = vpop.f32.mrb[0].mxu0
      %v3430 = vadd.f32 0.0, %v3429
      %v3431 = vpop.f32.mrb[0].mxu0
      %v3432 = vpop.f32.mrb[0].mxu0
      %v3433 = vadd.f32 0.0, %v3432
      %v3434 = vpop.f32.mrb[0].mxu0
      %3435 = vmatprep.mubr.bf16.mxu0 0
      %3436 = vmatmul.mubr.bf16.gmra.mrb[0].mxu0 %v2519
      %v3437 = vpop.f32.mrb[0].mxu0
      %v3438 = vadd.f32 0.0, %v3437
      %v3439 = vpop.f32.mrb[0].mxu0
      %v3440 = vpop.f32.mrb[0].mxu0
      %v3441 = vadd.f32 0.0, %v3440
      %v3442 = vpop.f32.mrb[0].mxu0
      %3443 = vmatprep.mubr.bf16.mxu0 0
      %3444 = vmatmul.mubr.bf16.gmra.mrb[0].mxu0 %v2522
      %v3445 = vpop.f32.mrb[0].mxu0
      %v3446 = vadd.f32 0.0, %v3445
      %v3447 = vpop.f32.mrb[0].mxu0
      %v3448 = vpop.f32.mrb[0].mxu0
      %v3449 = vadd.f32 0.0, %v3448
      %v3450 = vpop.f32.mrb[0].mxu0
      %3451 = vmatprep.mubr.bf16.mxu0 0
      %3452 = vmatmul.mubr.bf16.gmra.mrb[0].mxu0 %v2525
      %v3453 = vpop.f32.mrb[0].mxu0
      %v3454 = vadd.f32 0.0, %v3453
      %v3455 = vpop.f32.mrb[0].mxu0
      %v3456 = vpop.f32.mrb[0].mxu0
      %v3457 = vadd.f32 0.0, %v3456
      %v3458 = vpop.f32.mrb[0].mxu0
      %3459 = vmatprep.mubr.bf16.mxu0 0
      %3460 = vmatmul.mubr.bf16.gmra.mrb[0].mxu0 %v2528
      %v3461 = vpop.f32.mrb[0].mxu0
      %v3462 = vadd.f32 0.0, %v3461
      %v3463 = vpop.f32.mrb[0].mxu0
      %v3464 = vpop.f32.mrb[0].mxu0
      %v3465 = vadd.f32 0.0, %v3464
      %v3466 = vpop.f32.mrb[0].mxu0
      %3467 = vmatprep.mubr.bf16.mxu0 0
      %3468 = vmatmul.mubr.bf16.gmra.mrb[0].mxu0 %v2531
      %v3469 = vpop.f32.mrb[0].mxu0
      %v3470 = vadd.f32 0.0, %v3469
      %v3471 = vpop.f32.mrb[0].mxu0
      %v3472 = vpop.f32.mrb[0].mxu0
      %v3473 = vadd.f32 0.0, %v3472
      %v3474 = vpop.f32.mrb[0].mxu0
      %3475 = vmatprep.mubr.bf16.mxu0 0
      %3476 = vmatmul.mubr.bf16.gmra.mrb[0].mxu0 %v2534
      %v3477 = vpop.f32.mrb[0].mxu0
      %v3478 = vadd.f32 0.0, %v3477
      %v3479 = vpop.f32.mrb[0].mxu0
      %v3480 = vpop.f32.mrb[0].mxu0
      %v3481 = vadd.f32 0.0, %v3480
      %v3482 = vpop.f32.mrb[0].mxu0
      %3483 = vmatprep.mubr.bf16.mxu0 0
      %3484 = vmatmul.mubr.bf16.gmra.mrb[0].mxu0 %v2537
      %v3485 = vpop.f32.mrb[0].mxu0
      %v3486 = vadd.f32 0.0, %v3485
      %v3487 = vpop.f32.mrb[0].mxu0
      %v3488 = vpop.f32.mrb[0].mxu0
      %v3489 = vadd.f32 0.0, %v3488
      %v3490 = vpop.f32.mrb[0].mxu0
      %3491 = vmatprep.mubr.bf16.mxu0 0
      %3492 = vmatmul.mubr.bf16.gmra.mrb[0].mxu0 %v2540
      %v3493 = vpop.f32.mrb[0].mxu0
      %v3494 = vadd.f32 0.0, %v3493
      %v3495 = vpop.f32.mrb[0].mxu0
      %v3496 = vpop.f32.mrb[0].mxu0
      %v3497 = vadd.f32 0.0, %v3496
      %v3498 = vpop.f32.mrb[0].mxu0
      %3499 = vmatprep.mubr.bf16.mxu0 0
      %3500 = vmatmul.mubr.bf16.gmra.mrb[0].mxu0 %v2543
      %v3501 = vpop.f32.mrb[0].mxu0
      %v3502 = vadd.f32 0.0, %v3501
      %v3503 = vpop.f32.mrb[0].mxu0
      %v3504 = vpop.f32.mrb[0].mxu0
      %v3505 = vadd.f32 0.0, %v3504
      %v3506 = vpop.f32.mrb[0].mxu0
      %3507 = vmatprep.mubr.bf16.mxu0 0
      %3508 = vmatmul.mubr.bf16.gmra.mrb[0].mxu0 %v2546
      %v3509 = vpop.f32.mrb[0].mxu0
      %v3510 = vadd.f32 0.0, %v3509
      %v3511 = vpop.f32.mrb[0].mxu0
      %v3512 = vpop.f32.mrb[0].mxu0
      %v3513 = vadd.f32 0.0, %v3512
      %v3514 = vpop.f32.mrb[0].mxu0
      %3515 = vmatprep.mubr.bf16.mxu0 0
      %3516 = vmatmul.mubr.bf16.gmra.mrb[0].mxu0 %v2549
      %v3517 = vpop.f32.mrb[0].mxu0
      %v3518 = vadd.f32 0.0, %v3517
      %v3519 = vpop.f32.mrb[0].mxu0
      %v3520 = vpop.f32.mrb[0].mxu0
      %v3521 = vadd.f32 0.0, %v3520
      %v3522 = vpop.f32.mrb[0].mxu0
      %3523 = vmatprep.mubr.bf16.mxu0 0
      %3524 = vmatmul.mubr.bf16.gmra.mrb[0].mxu0 %v2552
      %v3525 = vpop.f32.mrb[0].mxu0
      %v3526 = vadd.f32 0.0, %v3525
      %v3527 = vpop.f32.mrb[0].mxu0
      %v3528 = vpop.f32.mrb[0].mxu0
      %v3529 = vadd.f32 0.0, %v3528
      %v3530 = vpop.f32.mrb[0].mxu0
      %3531 = vmatprep.mubr.bf16.mxu0 0
      %3532 = vmatmul.mubr.bf16.gmra.mrb[0].mxu0 %v2555
      %v3533 = vpop.f32.mrb[0].mxu0
      %v3534 = vadd.f32 0.0, %v3533
      %v3535 = vpop.f32.mrb[0].mxu0
      %v3536 = vpop.f32.mrb[0].mxu0
      %v3537 = vadd.f32 0.0, %v3536
      %v3538 = vpop.f32.mrb[0].mxu0
      %3539 = vmatprep.mubr.bf16.mxu0 0
      %3540 = vmatmul.mubr.bf16.gmra.mrb[0].mxu0 %v2558
      %v3541 = vpop.f32.mrb[0].mxu0
      %v3542 = vadd.f32 0.0, %v3541
      %v3543 = vpop.f32.mrb[0].mxu0
      %v3544 = vpop.f32.mrb[0].mxu0
      %v3545 = vadd.f32 0.0, %v3544
      %v3546 = vpop.f32.mrb[0].mxu0
      %3547 = vmatprep.mubr.bf16.mxu0 0
      %3548 = vmatmul.mubr.bf16.gmra.mrb[0].mxu0 %v2561
      %v3549 = vpop.f32.mrb[0].mxu0
      %v3550 = vadd.f32 0.0, %v3549
      %v3551 = vpop.f32.mrb[0].mxu0
      %v3552 = vpop.f32.mrb[0].mxu0
      %v3553 = vadd.f32 0.0, %v3552
      %v3554 = vpop.f32.mrb[0].mxu0
      %3555 = vmatprep.mubr.bf16.mxu0 0
      %3556 = vmatmul.mubr.bf16.gmra.mrb[0].mxu0 %v2564
      %v3557 = vpop.f32.mrb[0].mxu0
      %v3558 = vadd.f32 0.0, %v3557
      %v3559 = vpop.f32.mrb[0].mxu0
      %v3560 = vpop.f32.mrb[0].mxu0
      %v3561 = vadd.f32 0.0, %v3560
      %v3562 = vpop.f32.mrb[0].mxu0
      %3563 = vmatprep.mubr.bf16.mxu0 0
      %3564 = vmatmul.mubr.bf16.gmra.mrb[0].mxu0 %v2567
      %v3565 = vpop.f32.mrb[0].mxu0
      %v3566 = vadd.f32 0.0, %v3565
      %v3567 = vpop.f32.mrb[0].mxu0
      %v3568 = vpop.f32.mrb[0].mxu0
      %v3569 = vadd.f32 0.0, %v3568
      %v3570 = vpop.f32.mrb[0].mxu0
      %3571 = vmatprep.mubr.bf16.mxu0 0
      %3572 = vmatmul.mubr.bf16.gmra.mrb[0].mxu0 %v2570
      %v3573 = vpop.f32.mrb[0].mxu0
      %v3574 = vadd.f32 0.0, %v3573
      %v3575 = vpop.f32.mrb[0].mxu0
      %v3576 = vpop.f32.mrb[0].mxu0
      %v3577 = vadd.f32 0.0, %v3576
      %v3578 = vpop.f32.mrb[0].mxu0
      %3579 = vmatprep.mubr.bf16.mxu0 0
      %3580 = vmatmul.mubr.bf16.gmra.mrb[0].mxu0 %v2573
      %v3581 = vpop.f32.mrb[0].mxu0
      %v3582 = vadd.f32 0.0, %v3581
      %v3583 = vpop.f32.mrb[0].mxu0
      %v3584 = vpop.f32.mrb[0].mxu0
      %v3585 = vadd.f32 0.0, %v3584
      %v3586 = vpop.f32.mrb[0].mxu0
      %3587 = vmatprep.mubr.bf16.mxu0 0
      %3588 = vmatmul.mubr.bf16.gmra.mrb[0].mxu0 %v2576
      %v3589 = vpop.f32.mrb[0].mxu0
      %v3590 = vadd.f32 0.0, %v3589
      %v3591 = vpop.f32.mrb[0].mxu0
      %v3592 = vpop.f32.mrb[0].mxu0
      %v3593 = vadd.f32 0.0, %v3592
      %v3594 = vpop.f32.mrb[0].mxu0
      %3595 = vmatprep.mubr.bf16.mxu0 0
      %3596 = vmatmul.mubr.bf16.gmra.mrb[0].mxu0 %v2579
      %v3597 = vpop.f32.mrb[0].mxu0
      %v3598 = vadd.f32 0.0, %v3597
      %v3599 = vpop.f32.mrb[0].mxu0
      %v3600 = vpop.f32.mrb[0].mxu0
      %v3601 = vadd.f32 0.0, %v3600
      %v3602 = vpop.f32.mrb[0].mxu0
      %3603 = vmatprep.mubr.bf16.mxu0 0
      %3604 = vmatmul.mubr.bf16.gmra.mrb[0].mxu0 %v2582
      %v3605 = vpop.f32.mrb[0].mxu0
      %v3606 = vadd.f32 0.0, %v3605
      %v3607 = vpop.f32.mrb[0].mxu0
      %v3608 = vpop.f32.mrb[0].mxu0
      %v3609 = vadd.f32 0.0, %v3608
      %v3610 = vpop.f32.mrb[0].mxu0
      %3611 = vmatprep.mubr.bf16.mxu0 0
      %3612 = vmatmul.mubr.bf16.gmra.mrb[0].mxu0 %v2585
      %v3613 = vpop.f32.mrb[0].mxu0
      %v3614 = vadd.f32 0.0, %v3613
      %v3615 = vpop.f32.mrb[0].mxu0
      %v3616 = vpop.f32.mrb[0].mxu0
      %v3617 = vadd.f32 0.0, %v3616
      %v3618 = vpop.f32.mrb[0].mxu0
      %3619 = vmatprep.mubr.bf16.mxu0 0
      %3620 = vmatmul.mubr.bf16.gmra.mrb[0].mxu0 %v2588
      %v3621 = vpop.f32.mrb[0].mxu0
      %v3622 = vadd.f32 0.0, %v3621
      %v3623 = vpop.f32.mrb[0].mxu0
      %v3624 = vpop.f32.mrb[0].mxu0
      %v3625 = vadd.f32 0.0, %v3624
      %v3626 = vpop.f32.mrb[0].mxu0
      %3627 = vmatprep.mubr.bf16.mxu0 0
      %3628 = vmatmul.mubr.bf16.gmra.mrb[0].mxu0 %v2591
      %v3629 = vpop.f32.mrb[0].mxu0
      %v3630 = vadd.f32 0.0, %v3629
      %v3631 = vpop.f32.mrb[0].mxu0
      %v3632 = vpop.f32.mrb[0].mxu0
      %v3633 = vadd.f32 0.0, %v3632
      %v3634 = vpop.f32.mrb[0].mxu0
      %3635 = vmatprep.mubr.bf16.mxu0 0
      %3636 = vmatmul.mubr.bf16.gmra.mrb[0].mxu0 %v2594
      %v3637 = vpop.f32.mrb[0].mxu0
      %v3638 = vadd.f32 0.0, %v3637
      %v3639 = vpop.f32.mrb[0].mxu0
      %v3640 = vpop.f32.mrb[0].mxu0
      %v3641 = vadd.f32 0.0, %v3640
      %v3642 = vpop.f32.mrb[0].mxu0
      %3643 = vmatprep.mubr.bf16.mxu0 0
      %3644 = vmatmul.mubr.bf16.gmra.mrb[0].mxu0 %v2597
      %v3645 = vpop.f32.mrb[0].mxu0
      %v3646 = vadd.f32 0.0, %v3645
      %v3647 = vpop.f32.mrb[0].mxu0
      %v3648 = vpop.f32.mrb[0].mxu0
      %v3649 = vadd.f32 0.0, %v3648
      %v3650 = vpop.f32.mrb[0].mxu0
      %3651 = vmatprep.mubr.bf16.mxu0 0
      %3652 = vmatmul.mubr.bf16.gmra.mrb[0].mxu0 %v2600
      %v3653 = vpop.f32.mrb[0].mxu0
      %v3654 = vadd.f32 0.0, %v3653
      %v3655 = vpop.f32.mrb[0].mxu0
      %v3656 = vpop.f32.mrb[0].mxu0
      %v3657 = vadd.f32 0.0, %v3656
      %v3658 = vpop.f32.mrb[0].mxu0
      %3659 = vmatprep.mubr.bf16.mxu0 0
      %3660 = vmatmul.mubr.bf16.gmra.mrb[0].mxu0 %v2603
      %v3661 = vpop.f32.mrb[0].mxu0
      %v3662 = vadd.f32 0.0, %v3661
      %v3663 = vpop.f32.mrb[0].mxu0
      %v3664 = vpop.f32.mrb[0].mxu0
      %v3665 = vadd.f32 0.0, %v3664
      %v3666 = vpop.f32.mrb[0].mxu0
      %3667 = vmatprep.mubr.bf16.mxu0 0
      %3668 = vmatmul.mubr.bf16.gmra.mrb[0].mxu0 %v2606
      %v3669 = vpop.f32.mrb[0].mxu0
      %v3670 = vadd.f32 0.0, %v3669
      %v3671 = vpop.f32.mrb[0].mxu0
      %v3672 = vpop.f32.mrb[0].mxu0
      %v3673 = vadd.f32 0.0, %v3672
      %v3674 = vpop.f32.mrb[0].mxu0
      %3675 = vmatprep.mubr.bf16.mxu0 0
      %3676 = vmatmul.mubr.bf16.gmra.mrb[0].mxu0 %v2609
      %v3677 = vpop.f32.mrb[0].mxu0
      %v3678 = vadd.f32 0.0, %v3677
      %v3679 = vpop.f32.mrb[0].mxu0
      %v3680 = vpop.f32.mrb[0].mxu0
      %v3681 = vadd.f32 0.0, %v3680
      %v3682 = vpop.f32.mrb[0].mxu0
      %3683 = vmatprep.mubr.bf16.mxu0 0
      %3684 = vmatmul.mubr.bf16.gmra.mrb[0].mxu0 %v2612
      %v3685 = vpop.f32.mrb[0].mxu0
      %v3686 = vadd.f32 0.0, %v3685
      %v3687 = vpop.f32.mrb[0].mxu0
      %v3688 = vpop.f32.mrb[0].mxu0
      %v3689 = vadd.f32 0.0, %v3688
      %v3690 = vpop.f32.mrb[0].mxu0
      %3691 = vmatprep.mubr.bf16.mxu0 0
      %3692 = vmatmul.mubr.bf16.gmra.mrb[0].mxu0 %v2615
      %v3693 = vpop.f32.mrb[0].mxu0
      %v3694 = vadd.f32 0.0, %v3693
      %v3695 = vpop.f32.mrb[0].mxu0
      %v3696 = vpop.f32.mrb[0].mxu0
      %v3697 = vadd.f32 0.0, %v3696
      %v3698 = vpop.f32.mrb[0].mxu0
      %3699 = vmatprep.mubr.bf16.mxu0 0
      %3700 = vmatmul.mubr.bf16.gmra.mrb[0].mxu0 %v2618
      %v3701 = vpop.f32.mrb[0].mxu0
      %v3702 = vadd.f32 0.0, %v3701
      %v3703 = vpop.f32.mrb[0].mxu0
      %v3704 = vpop.f32.mrb[0].mxu0
      %v3705 = vadd.f32 0.0, %v3704
      %v3706 = vpop.f32.mrb[0].mxu0
      %3707 = vmatprep.mubr.bf16.mxu0 0
      %3708 = vmatmul.mubr.bf16.gmra.mrb[0].mxu0 %v2621
      %v3709 = vpop.f32.mrb[0].mxu0
      %v3710 = vadd.f32 0.0, %v3709
      %v3711 = vpop.f32.mrb[0].mxu0
      %v3712 = vpop.f32.mrb[0].mxu0
      %v3713 = vadd.f32 0.0, %v3712
      %v3714 = vpop.f32.mrb[0].mxu0
      %3715 = vmatprep.mubr.bf16.mxu0 0
      %3716 = vmatmul.mubr.bf16.gmra.mrb[0].mxu0 %v2624
      %v3717 = vpop.f32.mrb[0].mxu0
      %v3718 = vadd.f32 0.0, %v3717
      %v3719 = vpop.f32.mrb[0].mxu0
      %v3720 = vpop.f32.mrb[0].mxu0
      %v3721 = vadd.f32 0.0, %v3720
      %v3722 = vpop.f32.mrb[0].mxu0
      %3723 = vmatprep.mubr.bf16.mxu0 0
      %3724 = vmatmul.mubr.bf16.gmra.mrb[0].mxu0 %v2627
      %v3725 = vpop.f32.mrb[0].mxu0
      %v3726 = vadd.f32 0.0, %v3725
      %v3727 = vpop.f32.mrb[0].mxu0
      %v3728 = vpop.f32.mrb[0].mxu0
      %v3729 = vadd.f32 0.0, %v3728
      %v3730 = vpop.f32.mrb[0].mxu0
      %3731 = vmatprep.mubr.bf16.mxu0 0
      %3732 = vmatmul.mubr.bf16.gmra.mrb[0].mxu0 %v2630
      %v3733 = vpop.f32.mrb[0].mxu0
      %v3734 = vadd.f32 0.0, %v3733
      %v3735 = vpop.f32.mrb[0].mxu0
      %v3736 = vpop.f32.mrb[0].mxu0
      %v3737 = vadd.f32 0.0, %v3736
      %v3738 = vpop.f32.mrb[0].mxu0
      %3739 = vmatprep.mubr.bf16.mxu0 0
      %3740 = vmatmul.mubr.bf16.gmra.mrb[0].mxu0 %v2633
      %v3741 = vpop.f32.mrb[0].mxu0
      %v3742 = vadd.f32 0.0, %v3741
      %v3743 = vpop.f32.mrb[0].mxu0
      %v3744 = vpop.f32.mrb[0].mxu0
      %v3745 = vadd.f32 0.0, %v3744
      %v3746 = vpop.f32.mrb[0].mxu0
      %3747 = vmatprep.mubr.bf16.mxu0 0
      %3748 = vmatmul.mubr.bf16.gmra.mrb[0].mxu0 %v2636
      %v3749 = vpop.f32.mrb[0].mxu0
      %v3750 = vadd.f32 0.0, %v3749
      %v3751 = vpop.f32.mrb[0].mxu0
      %v3752 = vpop.f32.mrb[0].mxu0
      %v3753 = vadd.f32 0.0, %v3752
      %v3754 = vpop.f32.mrb[0].mxu0
      %3755 = vmatprep.mubr.bf16.mxu0 0
      %3756 = vmatmul.mubr.bf16.gmra.mrb[0].mxu0 %v2639
      %v3757 = vpop.f32.mrb[0].mxu0
      %v3758 = vadd.f32 0.0, %v3757
      %v3759 = vpop.f32.mrb[0].mxu0
      %v3760 = vpop.f32.mrb[0].mxu0
      %v3761 = vadd.f32 0.0, %v3760
      %v3762 = vpop.f32.mrb[0].mxu0
      %3763 = vmatprep.mubr.bf16.mxu0 0
      %3764 = vmatmul.mubr.bf16.gmra.mrb[0].mxu0 %v2642
      %v3765 = vpop.f32.mrb[0].mxu0
      %v3766 = vadd.f32 0.0, %v3765
      %v3767 = vpop.f32.mrb[0].mxu0
      %v3768 = vpop.f32.mrb[0].mxu0
      %v3769 = vadd.f32 0.0, %v3768
      %v3770 = vpop.f32.mrb[0].mxu0
      %3771 = vmatprep.mubr.bf16.mxu0 0
      %3772 = vmatmul.mubr.bf16.gmra.mrb[0].mxu0 %v2645
      %v3773 = vpop.f32.mrb[0].mxu0
      %v3774 = vadd.f32 0.0, %v3773
      %v3775 = vpop.f32.mrb[0].mxu0
      %v3776 = vpop.f32.mrb[0].mxu0
      %v3777 = vadd.f32 0.0, %v3776
      %v3778 = vpop.f32.mrb[0].mxu0
      %3779 = vmatprep.mubr.bf16.mxu0 0
      %3780 = vmatmul.mubr.bf16.gmra.mrb[0].mxu0 %v2648
      %v3781 = vpop.f32.mrb[0].mxu0
      %v3782 = vadd.f32 0.0, %v3781
      %v3783 = vpop.f32.mrb[0].mxu0
      %v3784 = vpop.f32.mrb[0].mxu0
      %v3785 = vadd.f32 0.0, %v3784
      %v3786 = vpop.f32.mrb[0].mxu0
      %3787 = vmatprep.mubr.bf16.mxu0 0
      %3788 = vmatmul.mubr.bf16.gmra.mrb[0].mxu0 %v2651
      %v3789 = vpop.f32.mrb[0].mxu0
      %v3790 = vadd.f32 0.0, %v3789
      %v3791 = vpop.f32.mrb[0].mxu0
      %v3792 = vpop.f32.mrb[0].mxu0
      %v3793 = vadd.f32 0.0, %v3792
      %v3794 = vpop.f32.mrb[0].mxu0
      %3795 = vmatprep.mubr.bf16.mxu0 0
      %3796 = vmatmul.mubr.bf16.gmra.mrb[0].mxu0 %v2654
      %v3797 = vpop.f32.mrb[0].mxu0
      %v3798 = vadd.f32 0.0, %v3797
      %v3799 = vpop.f32.mrb[0].mxu0
      %v3800 = vpop.f32.mrb[0].mxu0
      %v3801 = vadd.f32 0.0, %v3800
      %v3802 = vpop.f32.mrb[0].mxu0
      %3803 = vmatprep.mubr.bf16.mxu0 0
      %3804 = vmatmul.mubr.bf16.gmra.mrb[0].mxu0 %v2657
      %v3805 = vpop.f32.mrb[0].mxu0
      %v3806 = vadd.f32 0.0, %v3805
      %v3807 = vpop.f32.mrb[0].mxu0
      %v3808 = vpop.f32.mrb[0].mxu0
      %v3809 = vadd.f32 0.0, %v3808
      %v3810 = vpop.f32.mrb[0].mxu0
      %3811 = vmatprep.mubr.bf16.mxu0 0
      %3812 = vmatmul.mubr.bf16.gmra.mrb[0].mxu0 %v2660
      %v3813 = vpop.f32.mrb[0].mxu0
      %v3814 = vadd.f32 0.0, %v3813
      %v3815 = vpop.f32.mrb[0].mxu0
      %v3816 = vpop.f32.mrb[0].mxu0
      %v3817 = vadd.f32 0.0, %v3816
      %v3818 = vpop.f32.mrb[0].mxu0
      %3819 = vmatprep.mubr.bf16.mxu0 0
      %3820 = vmatmul.mubr.bf16.gmra.mrb[0].mxu0 %v2663
      %v3821 = vpop.f32.mrb[0].mxu0
      %v3822 = vadd.f32 0.0, %v3821
      %v3823 = vpop.f32.mrb[0].mxu0
      %v3824 = vpop.f32.mrb[0].mxu0
      %v3825 = vadd.f32 0.0, %v3824
      %v3826 = vpop.f32.mrb[0].mxu0
      %3827 = vmatprep.mubr.bf16.mxu0 0
      %3828 = vmatmul.mubr.bf16.gmra.mrb[0].mxu0 %v2666
      %v3829 = vpop.f32.mrb[0].mxu0
      %v3830 = vadd.f32 0.0, %v3829
      %v3831 = vpop.f32.mrb[0].mxu0
      %v3832 = vpop.f32.mrb[0].mxu0
      %v3833 = vadd.f32 0.0, %v3832
      %v3834 = vpop.f32.mrb[0].mxu0
      %3835 = vmatprep.mubr.bf16.mxu0 0
      %3836 = vmatmul.mubr.bf16.gmra.mrb[0].mxu0 %v2669
      %v3837 = vpop.f32.mrb[0].mxu0
      %v3838 = vadd.f32 0.0, %v3837
      %v3839 = vpop.f32.mrb[0].mxu0
      %v3840 = vpop.f32.mrb[0].mxu0
      %v3841 = vadd.f32 0.0, %v3840
      %v3842 = vpop.f32.mrb[0].mxu0
      %3843 = vmatprep.mubr.bf16.mxu0 0
      %3844 = vmatmul.mubr.bf16.gmra.mrb[0].mxu0 %v2672
      %v3845 = vpop.f32.mrb[0].mxu0
      %v3846 = vadd.f32 0.0, %v3845
      %v3847 = vpop.f32.mrb[0].mxu0
      %v3848 = vpop.f32.mrb[0].mxu0
      %v3849 = vadd.f32 0.0, %v3848
      %v3850 = vpop.f32.mrb[0].mxu0
      %3851 = vmatprep.mubr.bf16.mxu0 0
      %3852 = vmatmul.mubr.bf16.gmra.mrb[0].mxu0 %v2675
      %v3853 = vpop.f32.mrb[0].mxu0
      %v3854 = vadd.f32 0.0, %v3853
      %v3855 = vpop.f32.mrb[0].mxu0
      %v3856 = vpop.f32.mrb[0].mxu0
      %v3857 = vadd.f32 0.0, %v3856
      %v3858 = vpop.f32.mrb[0].mxu0
      %3859 = vmatprep.mubr.bf16.mxu0 0
      %3860 = vmatmul.mubr.bf16.gmra.mrb[0].mxu0 %v2678
      %v3861 = vpop.f32.mrb[0].mxu0
      %v3862 = vadd.f32 0.0, %v3861
      %v3863 = vpop.f32.mrb[0].mxu0
      %v3864 = vpop.f32.mrb[0].mxu0
      %v3865 = vadd.f32 0.0, %v3864
      %v3866 = vpop.f32.mrb[0].mxu0
      %3867 = vmatprep.mubr.bf16.mxu0 0
      %3868 = vmatmul.mubr.bf16.gmra.mrb[0].mxu0 %v2681
      %v3869 = vpop.f32.mrb[0].mxu0
      %v3870 = vadd.f32 0.0, %v3869
      %v3871 = vpop.f32.mrb[0].mxu0
      %v3872 = vpop.f32.mrb[0].mxu0
      %v3873 = vadd.f32 0.0, %v3872
      %v3874 = vpop.f32.mrb[0].mxu0
      %3875 = vmatprep.mubr.bf16.mxu0 0
      %3876 = vmatmul.mubr.bf16.gmra.mrb[0].mxu0 %v2684
      %v3877 = vpop.f32.mrb[0].mxu0
      %v3878 = vadd.f32 0.0, %v3877
      %v3879 = vpop.f32.mrb[0].mxu0
      %v3880 = vpop.f32.mrb[0].mxu0
      %v3881 = vadd.f32 0.0, %v3880
      %v3882 = vpop.f32.mrb[0].mxu0
      %3883 = vmatprep.mubr.bf16.mxu0 0
      %3884 = vmatmul.mubr.bf16.gmra.mrb[0].mxu0 %v2687
      %v3885 = vpop.f32.mrb[0].mxu0
      %v3886 = vadd.f32 0.0, %v3885
      %v3887 = vpop.f32.mrb[0].mxu0
      %v3888 = vpop.f32.mrb[0].mxu0
      %v3889 = vadd.f32 0.0, %v3888
      %v3890 = vpop.f32.mrb[0].mxu0
      %3891 = vmatprep.mubr.bf16.mxu0 0
      %3892 = vmatmul.mubr.bf16.gmra.mrb[0].mxu0 %v2690
      %v3893 = vpop.f32.mrb[0].mxu0
      %v3894 = vadd.f32 0.0, %v3893
      %v3895 = vpop.f32.mrb[0].mxu0
      %v3896 = vpop.f32.mrb[0].mxu0
      %v3897 = vadd.f32 0.0, %v3896
      %v3898 = vpop.f32.mrb[0].mxu0
      %3899 = vmatprep.mubr.bf16.mxu0 0
      %3900 = vmatmul.mubr.bf16.gmra.mrb[0].mxu0 %v2693
      %v3901 = vpop.f32.mrb[0].mxu0
      %v3902 = vadd.f32 0.0, %v3901
      %v3903 = vpop.f32.mrb[0].mxu0
      %v3904 = vpop.f32.mrb[0].mxu0
      %v3905 = vadd.f32 0.0, %v3904
      %v3906 = vpop.f32.mrb[0].mxu0
      %3907 = vmatprep.mubr.bf16.mxu0 0
      %3908 = vmatmul.mubr.bf16.gmra.mrb[0].mxu0 %v2696
      %v3909 = vpop.f32.mrb[0].mxu0
      %v3910 = vadd.f32 0.0, %v3909
      %v3911 = vpop.f32.mrb[0].mxu0
      %v3912 = vpop.f32.mrb[0].mxu0
      %v3913 = vadd.f32 0.0, %v3912
      %v3914 = vpop.f32.mrb[0].mxu0
      %3915 = vmatprep.mubr.bf16.mxu0 0
      %3916 = vmatmul.mubr.bf16.gmra.mrb[0].mxu0 %v2699
      %v3917 = vpop.f32.mrb[0].mxu0
      %v3918 = vadd.f32 0.0, %v3917
      %v3919 = vpop.f32.mrb[0].mxu0
      %v3920 = vpop.f32.mrb[0].mxu0
      %v3921 = vadd.f32 0.0, %v3920
      %v3922 = vpop.f32.mrb[0].mxu0
      %3923 = vmatprep.mubr.bf16.mxu0 0
      %3924 = vmatmul.mubr.bf16.gmra.mrb[0].mxu0 %v2702
      %v3925 = vpop.f32.mrb[0].mxu0
      %v3926 = vadd.f32 0.0, %v3925
      %v3927 = vpop.f32.mrb[0].mxu0
      %v3928 = vpop.f32.mrb[0].mxu0
      %v3929 = vadd.f32 0.0, %v3928
      %v3930 = vpop.f32.mrb[0].mxu0
      %3931 = vmatprep.mubr.bf16.mxu0 0
      %3932 = vmatmul.mubr.bf16.gmra.mrb[0].mxu0 %v2705
      %v3933 = vpop.f32.mrb[0].mxu0
      %v3934 = vadd.f32 0.0, %v3933
      %v3935 = vpop.f32.mrb[0].mxu0
      %v3936 = vpop.f32.mrb[0].mxu0
      %v3937 = vadd.f32 0.0, %v3936
      %v3938 = vpop.f32.mrb[0].mxu0
      %3939 = vmatprep.mubr.bf16.mxu0 0
      %3940 = vmatmul.mubr.bf16.gmra.mrb[0].mxu0 %v2708
      %v3941 = vpop.f32.mrb[0].mxu0
      %v3942 = vadd.f32 0.0, %v3941
      %v3943 = vpop.f32.mrb[0].mxu0
      %v3944 = vpop.f32.mrb[0].mxu0
      %v3945 = vadd.f32 0.0, %v3944
      %v3946 = vpop.f32.mrb[0].mxu0
      %3947 = vmatprep.mubr.bf16.mxu0 0
      %3948 = vmatmul.mubr.bf16.gmra.mrb[0].mxu0 %v2711
      %v3949 = vpop.f32.mrb[0].mxu0
      %v3950 = vadd.f32 0.0, %v3949
      %v3951 = vpop.f32.mrb[0].mxu0
      %v3952 = vpop.f32.mrb[0].mxu0
      %v3953 = vadd.f32 0.0, %v3952
      %v3954 = vpop.f32.mrb[0].mxu0
      %3955 = vmatprep.mubr.bf16.mxu0 0
      %3956 = vmatmul.mubr.bf16.gmra.mrb[0].mxu0 %v2714
      %v3957 = vpop.f32.mrb[0].mxu0
      %v3958 = vadd.f32 0.0, %v3957
      %v3959 = vpop.f32.mrb[0].mxu0
      %v3960 = vpop.f32.mrb[0].mxu0
      %v3961 = vadd.f32 0.0, %v3960
      %v3962 = vpop.f32.mrb[0].mxu0
      %3963 = vmatprep.mubr.bf16.mxu0 0
      %3964 = vmatmul.mubr.bf16.gmra.mrb[0].mxu0 %v2717
      %v3965 = vpop.f32.mrb[0].mxu0
      %v3966 = vadd.f32 0.0, %v3965
      %v3967 = vpop.f32.mrb[0].mxu0
      %v3968 = vpop.f32.mrb[0].mxu0
      %v3969 = vadd.f32 0.0, %v3968
      %v3970 = vpop.f32.mrb[0].mxu0
      %3971 = vmatprep.mubr.bf16.mxu0 0
      %3972 = vmatmul.mubr.bf16.gmra.mrb[0].mxu0 %v2720
      %v3973 = vpop.f32.mrb[0].mxu0
      %v3974 = vadd.f32 0.0, %v3973
      %v3975 = vpop.f32.mrb[0].mxu0
      %v3976 = vpop.f32.mrb[0].mxu0
      %v3977 = vadd.f32 0.0, %v3976
      %v3978 = vpop.f32.mrb[0].mxu0
      %3979 = vmatprep.mubr.bf16.mxu0 0
      %3980 = vmatmul.mubr.bf16.gmra.mrb[0].mxu0 %v2723
      %v3981 = vpop.f32.mrb[0].mxu0
      %v3982 = vadd.f32 0.0, %v3981
      %v3983 = vpop.f32.mrb[0].mxu0
      %v3984 = vpop.f32.mrb[0].mxu0
      %v3985 = vadd.f32 0.0, %v3984
      %v3986 = vpop.f32.mrb[0].mxu0
      %3987 = vmatprep.mubr.bf16.mxu0 0
      %3988 = vmatmul.mubr.bf16.gmra.mrb[0].mxu0 %v2726
      %v3989 = vpop.f32.mrb[0].mxu0
      %v3990 = vadd.f32 0.0, %v3989
      %v3991 = vpop.f32.mrb[0].mxu0
      %v3992 = vpop.f32.mrb[0].mxu0
      %v3993 = vadd.f32 0.0, %v3992
      %v3994 = vpop.f32.mrb[0].mxu0
      %3995 = vmatprep.mubr.bf16.mxu0 0
      %3996 = vmatmul.mubr.bf16.gmra.mrb[0].mxu0 %v2729
      %v3997 = vpop.f32.mrb[0].mxu0
      %v3998 = vadd.f32 0.0, %v3997
      %v3999 = vpop.f32.mrb[0].mxu0
      %v4000 = vpop.f32.mrb[0].mxu0
      %v4001 = vadd.f32 0.0, %v4000
      %v4002 = vpop.f32.mrb[0].mxu0
      %4003 = vmatprep.mubr.bf16.mxu0 0
      %4004 = vmatmul.mubr.bf16.gmra.mrb[0].mxu0 %v2732
      %v4005 = vpop.f32.mrb[0].mxu0
      %v4006 = vadd.f32 0.0, %v4005
      %v4007 = vpop.f32.mrb[0].mxu0
      %v4008 = vpop.f32.mrb[0].mxu0
      %v4009 = vadd.f32 0.0, %v4008
      %v4010 = vpop.f32.mrb[0].mxu0
      %4011 = vmatprep.mubr.bf16.mxu0 0
      %4012 = vmatmul.mubr.bf16.gmra.mrb[0].mxu0 %v2735
      %v4013 = vpop.f32.mrb[0].mxu0
      %v4014 = vadd.f32 0.0, %v4013
      %v4015 = vpop.f32.mrb[0].mxu0
      %v4016 = vpop.f32.mrb[0].mxu0
      %v4017 = vadd.f32 0.0, %v4016
      %v4018 = vpop.f32.mrb[0].mxu0
      %4019 = vmatprep.mubr.bf16.mxu0 0
      %4020 = vmatmul.mubr.bf16.gmra.mrb[0].mxu0 %v2738
      %v4021 = vpop.f32.mrb[0].mxu0
      %v4022 = vadd.f32 0.0, %v4021
      %v4023 = vpop.f32.mrb[0].mxu0
      %v4024 = vpop.f32.mrb[0].mxu0
      %v4025 = vadd.f32 0.0, %v4024
      %v4026 = vpop.f32.mrb[0].mxu0
      %4027 = vmatprep.mubr.bf16.mxu0 0
      %4028 = vmatmul.mubr.bf16.gmra.mrb[0].mxu0 %v2741
      %v4029 = vpop.f32.mrb[0].mxu0
      %v4030 = vadd.f32 0.0, %v4029
      %v4031 = vpop.f32.mrb[0].mxu0
      %v4032 = vpop.f32.mrb[0].mxu0
      %v4033 = vadd.f32 0.0, %v4032
      %v4034 = vpop.f32.mrb[0].mxu0
      %4035 = vmatprep.mubr.bf16.mxu0 0
      %4036 = vmatmul.mubr.bf16.gmra.mrb[0].mxu0 %v2744
      %v4037 = vpop.f32.mrb[0].mxu0
      %v4038 = vadd.f32 0.0, %v4037
      %v4039 = vpop.f32.mrb[0].mxu0
      %v4040 = vpop.f32.mrb[0].mxu0
      %v4041 = vadd.f32 0.0, %v4040
      %v4042 = vpop.f32.mrb[0].mxu0
      %4043 = vmatprep.mubr.bf16.mxu0 0
      %4044 = vmatmul.mubr.bf16.gmra.mrb[0].mxu0 %v2747
      %v4045 = vpop.f32.mrb[0].mxu0
      %v4046 = vadd.f32 0.0, %v4045
      %v4047 = vpop.f32.mrb[0].mxu0
      %v4048 = vpop.f32.mrb[0].mxu0
      %v4049 = vadd.f32 0.0, %v4048
      %v4050 = vpop.f32.mrb[0].mxu0
      %4051 = vmatprep.mubr.bf16.mxu0 0
      %4052 = vmatmul.mubr.bf16.gmra.mrb[0].mxu0 %v2750
      %v4053 = vpop.f32.mrb[0].mxu0
      %v4054 = vadd.f32 0.0, %v4053
      %v4055 = vpop.f32.mrb[0].mxu0
      %v4056 = vpop.f32.mrb[0].mxu0
      %v4057 = vadd.f32 0.0, %v4056
      %v4058 = vpop.f32.mrb[0].mxu0
      %4059 = vmatprep.mubr.bf16.mxu0 0
      %4060 = vmatmul.mubr.bf16.gmra.mrb[0].mxu0 %v2753
      %v4061 = vpop.f32.mrb[0].mxu0
      %v4062 = vadd.f32 0.0, %v4061
      %v4063 = vpop.f32.mrb[0].mxu0
      %v4064 = vpop.f32.mrb[0].mxu0
      %v4065 = vadd.f32 0.0, %v4064
      %v4066 = vpop.f32.mrb[0].mxu0
      %4067 = vdwg.mxu0
      %v4068 = vsel %vm310, %v2790, 0.0
      %v4069 = vsel %vm310, %v2918, 0.0
      %v4070 = vadd.f32 %v4068, %v4069
      %v4071 = vsel %vm310, %v3046, 0.0
      %v4072 = vadd.f32 %v4070, %v4071
      %v4073 = vsel %vm310, %v3174, 0.0
      %v4074 = vadd.f32 %v4072, %v4073
      %v4075 = vsel %vm310, %v3302, 0.0
      %v4076 = vadd.f32 %v4074, %v4075
      %v4077 = vsel %vm310, %v3430, 0.0
      %v4078 = vadd.f32 %v4076, %v4077
      %v4079 = vsel %vm310, %v3558, 0.0
      %v4080 = vadd.f32 %v4078, %v4079
      %v4081 = vsel %vm310, %v3686, 0.0
      %v4082 = vadd.f32 %v4080, %v4081
      %v4083 = vsel %vm310, %v3814, 0.0
      %v4084 = vadd.f32 %v4082, %v4083
      %v4085 = vsel %vm310, %v3942, 0.0
      %v4086 = vadd.f32 %v4084, %v4085
      %v4087 = vsel %vm310, %v2793, 0.0
      %v4088 = vsel %vm310, %v2921, 0.0
      %v4089 = vadd.f32 %v4087, %v4088
      %v4090 = vsel %vm310, %v3049, 0.0
      %v4091 = vadd.f32 %v4089, %v4090
      %v4092 = vsel %vm310, %v3177, 0.0
      %v4093 = vadd.f32 %v4091, %v4092
      %v4094 = vsel %vm310, %v3305, 0.0
      %v4095 = vadd.f32 %v4093, %v4094
      %v4096 = vsel %vm310, %v3433, 0.0
      %v4097 = vadd.f32 %v4095, %v4096
      %v4098 = vsel %vm310, %v3561, 0.0
      %v4099 = vadd.f32 %v4097, %v4098
      %v4100 = vsel %vm310, %v3689, 0.0
      %v4101 = vadd.f32 %v4099, %v4100
      %v4102 = vsel %vm310, %v3817, 0.0
      %v4103 = vadd.f32 %v4101, %v4102
      %v4104 = vsel %vm310, %v3945, 0.0
      %v4105 = vadd.f32 %v4103, %v4104
      %v4106 = vsel %vm310, %v2798, 0.0
      %v4107 = vsel %vm310, %v2926, 0.0
      %v4108 = vadd.f32 %v4106, %v4107
      %v4109 = vsel %vm310, %v3054, 0.0
      %v4110 = vadd.f32 %v4108, %v4109
      %v4111 = vsel %vm310, %v3182, 0.0
      %v4112 = vadd.f32 %v4110, %v4111
      %v4113 = vsel %vm310, %v3310, 0.0
      %v4114 = vadd.f32 %v4112, %v4113
      %v4115 = vsel %vm310, %v3438, 0.0
      %v4116 = vadd.f32 %v4114, %v4115
      %v4117 = vsel %vm310, %v3566, 0.0
      %v4118 = vadd.f32 %v4116, %v4117
      %v4119 = vsel %vm310, %v3694, 0.0
      %v4120 = vadd.f32 %v4118, %v4119
      %v4121 = vsel %vm310, %v3822, 0.0
      %v4122 = vadd.f32 %v4120, %v4121
      %v4123 = vsel %vm310, %v3950, 0.0
      %v4124 = vadd.f32 %v4122, %v4123
      %v4125 = vsel %vm310, %v2801, 0.0
      %v4126 = vsel %vm310, %v2929, 0.0
      %v4127 = vadd.f32 %v4125, %v4126
      %v4128 = vsel %vm310, %v3057, 0.0
      %v4129 = vadd.f32 %v4127, %v4128
      %v4130 = vsel %vm310, %v3185, 0.0
      %v4131 = vadd.f32 %v4129, %v4130
      %v4132 = vsel %vm310, %v3313, 0.0
      %v4133 = vadd.f32 %v4131, %v4132
      %v4134 = vsel %vm310, %v3441, 0.0
      %v4135 = vadd.f32 %v4133, %v4134
      %v4136 = vsel %vm310, %v3569, 0.0
      %v4137 = vadd.f32 %v4135, %v4136
      %v4138 = vsel %vm310, %v3697, 0.0
      %v4139 = vadd.f32 %v4137, %v4138
      %v4140 = vsel %vm310, %v3825, 0.0
      %v4141 = vadd.f32 %v4139, %v4140
      %v4142 = vsel %vm310, %v3953, 0.0
      %v4143 = vadd.f32 %v4141, %v4142
      %v4144 = vsel %vm310, %v2806, 0.0
      %v4145 = vsel %vm310, %v2934, 0.0
      %v4146 = vadd.f32 %v4144, %v4145
      %v4147 = vsel %vm310, %v3062, 0.0
      %v4148 = vadd.f32 %v4146, %v4147
      %v4149 = vsel %vm310, %v3190, 0.0
      %v4150 = vadd.f32 %v4148, %v4149
      %v4151 = vsel %vm310, %v3318, 0.0
      %v4152 = vadd.f32 %v4150, %v4151
      %v4153 = vsel %vm310, %v3446, 0.0
      %v4154 = vadd.f32 %v4152, %v4153
      %v4155 = vsel %vm310, %v3574, 0.0
      %v4156 = vadd.f32 %v4154, %v4155
      %v4157 = vsel %vm310, %v3702, 0.0
      %v4158 = vadd.f32 %v4156, %v4157
      %v4159 = vsel %vm310, %v3830, 0.0
      %v4160 = vadd.f32 %v4158, %v4159
      %v4161 = vsel %vm310, %v3958, 0.0
      %v4162 = vadd.f32 %v4160, %v4161
      %v4163 = vsel %vm310, %v2809, 0.0
      %v4164 = vsel %vm310, %v2937, 0.0
      %v4165 = vadd.f32 %v4163, %v4164
      %v4166 = vsel %vm310, %v3065, 0.0
      %v4167 = vadd.f32 %v4165, %v4166
      %v4168 = vsel %vm310, %v3193, 0.0
      %v4169 = vadd.f32 %v4167, %v4168
      %v4170 = vsel %vm310, %v3321, 0.0
      %v4171 = vadd.f32 %v4169, %v4170
      %v4172 = vsel %vm310, %v3449, 0.0
      %v4173 = vadd.f32 %v4171, %v4172
      %v4174 = vsel %vm310, %v3577, 0.0
      %v4175 = vadd.f32 %v4173, %v4174
      %v4176 = vsel %vm310, %v3705, 0.0
      %v4177 = vadd.f32 %v4175, %v4176
      %v4178 = vsel %vm310, %v3833, 0.0
      %v4179 = vadd.f32 %v4177, %v4178
      %v4180 = vsel %vm310, %v3961, 0.0
      %v4181 = vadd.f32 %v4179, %v4180
      %v4182 = vsel %vm310, %v2814, 0.0
      %v4183 = vsel %vm310, %v2942, 0.0
      %v4184 = vadd.f32 %v4182, %v4183
      %v4185 = vsel %vm310, %v3070, 0.0
      %v4186 = vadd.f32 %v4184, %v4185
      %v4187 = vsel %vm310, %v3198, 0.0
      %v4188 = vadd.f32 %v4186, %v4187
      %v4189 = vsel %vm310, %v3326, 0.0
      %v4190 = vadd.f32 %v4188, %v4189
      %v4191 = vsel %vm310, %v3454, 0.0
      %v4192 = vadd.f32 %v4190, %v4191
      %v4193 = vsel %vm310, %v3582, 0.0
      %v4194 = vadd.f32 %v4192, %v4193
      %v4195 = vsel %vm310, %v3710, 0.0
      %v4196 = vadd.f32 %v4194, %v4195
      %v4197 = vsel %vm310, %v3838, 0.0
      %v4198 = vadd.f32 %v4196, %v4197
      %v4199 = vsel %vm310, %v3966, 0.0
      %v4200 = vadd.f32 %v4198, %v4199
      %v4201 = vsel %vm310, %v2817, 0.0
      %v4202 = vsel %vm310, %v2945, 0.0
      %v4203 = vadd.f32 %v4201, %v4202
      %v4204 = vsel %vm310, %v3073, 0.0
      %v4205 = vadd.f32 %v4203, %v4204
      %v4206 = vsel %vm310, %v3201, 0.0
      %v4207 = vadd.f32 %v4205, %v4206
      %v4208 = vsel %vm310, %v3329, 0.0
      %v4209 = vadd.f32 %v4207, %v4208
      %v4210 = vsel %vm310, %v3457, 0.0
      %v4211 = vadd.f32 %v4209, %v4210
      %v4212 = vsel %vm310, %v3585, 0.0
      %v4213 = vadd.f32 %v4211, %v4212
      %v4214 = vsel %vm310, %v3713, 0.0
      %v4215 = vadd.f32 %v4213, %v4214
      %v4216 = vsel %vm310, %v3841, 0.0
      %v4217 = vadd.f32 %v4215, %v4216
      %v4218 = vsel %vm310, %v3969, 0.0
      %v4219 = vadd.f32 %v4217, %v4218
      %v4220 = vsel %vm310, %v2822, 0.0
      %v4221 = vsel %vm310, %v2950, 0.0
      %v4222 = vadd.f32 %v4220, %v4221
      %v4223 = vsel %vm310, %v3078, 0.0
      %v4224 = vadd.f32 %v4222, %v4223
      %v4225 = vsel %vm310, %v3206, 0.0
      %v4226 = vadd.f32 %v4224, %v4225
      %v4227 = vsel %vm310, %v3334, 0.0
      %v4228 = vadd.f32 %v4226, %v4227
      %v4229 = vsel %vm310, %v3462, 0.0
      %v4230 = vadd.f32 %v4228, %v4229
      %v4231 = vsel %vm310, %v3590, 0.0
      %v4232 = vadd.f32 %v4230, %v4231
      %v4233 = vsel %vm310, %v3718, 0.0
      %v4234 = vadd.f32 %v4232, %v4233
      %v4235 = vsel %vm310, %v3846, 0.0
      %v4236 = vadd.f32 %v4234, %v4235
      %v4237 = vsel %vm310, %v3974, 0.0
      %v4238 = vadd.f32 %v4236, %v4237
      %v4239 = vsel %vm310, %v2825, 0.0
      %v4240 = vsel %vm310, %v2953, 0.0
      %v4241 = vadd.f32 %v4239, %v4240
      %v4242 = vsel %vm310, %v3081, 0.0
      %v4243 = vadd.f32 %v4241, %v4242
      %v4244 = vsel %vm310, %v3209, 0.0
      %v4245 = vadd.f32 %v4243, %v4244
      %v4246 = vsel %vm310, %v3337, 0.0
      %v4247 = vadd.f32 %v4245, %v4246
      %v4248 = vsel %vm310, %v3465, 0.0
      %v4249 = vadd.f32 %v4247, %v4248
      %v4250 = vsel %vm310, %v3593, 0.0
      %v4251 = vadd.f32 %v4249, %v4250
      %v4252 = vsel %vm310, %v3721, 0.0
      %v4253 = vadd.f32 %v4251, %v4252
      %v4254 = vsel %vm310, %v3849, 0.0
      %v4255 = vadd.f32 %v4253, %v4254
      %v4256 = vsel %vm310, %v3977, 0.0
      %v4257 = vadd.f32 %v4255, %v4256
      %v4258 = vsel %vm310, %v2830, 0.0
      %v4259 = vsel %vm310, %v2958, 0.0
      %v4260 = vadd.f32 %v4258, %v4259
      %v4261 = vsel %vm310, %v3086, 0.0
      %v4262 = vadd.f32 %v4260, %v4261
      %v4263 = vsel %vm310, %v3214, 0.0
      %v4264 = vadd.f32 %v4262, %v4263
      %v4265 = vsel %vm310, %v3342, 0.0
      %v4266 = vadd.f32 %v4264, %v4265
      %v4267 = vsel %vm310, %v3470, 0.0
      %v4268 = vadd.f32 %v4266, %v4267
      %v4269 = vsel %vm310, %v3598, 0.0
      %v4270 = vadd.f32 %v4268, %v4269
      %v4271 = vsel %vm310, %v3726, 0.0
      %v4272 = vadd.f32 %v4270, %v4271
      %v4273 = vsel %vm310, %v3854, 0.0
      %v4274 = vadd.f32 %v4272, %v4273
      %v4275 = vsel %vm310, %v3982, 0.0
      %v4276 = vadd.f32 %v4274, %v4275
      %v4277 = vsel %vm310, %v2833, 0.0
      %v4278 = vsel %vm310, %v2961, 0.0
      %v4279 = vadd.f32 %v4277, %v4278
      %v4280 = vsel %vm310, %v3089, 0.0
      %v4281 = vadd.f32 %v4279, %v4280
      %v4282 = vsel %vm310, %v3217, 0.0
      %v4283 = vadd.f32 %v4281, %v4282
      %v4284 = vsel %vm310, %v3345, 0.0
      %v4285 = vadd.f32 %v4283, %v4284
      %v4286 = vsel %vm310, %v3473, 0.0
      %v4287 = vadd.f32 %v4285, %v4286
      %v4288 = vsel %vm310, %v3601, 0.0
      %v4289 = vadd.f32 %v4287, %v4288
      %v4290 = vsel %vm310, %v3729, 0.0
      %v4291 = vadd.f32 %v4289, %v4290
      %v4292 = vsel %vm310, %v3857, 0.0
      %v4293 = vadd.f32 %v4291, %v4292
      %v4294 = vsel %vm310, %v3985, 0.0
      %v4295 = vadd.f32 %v4293, %v4294
      %v4296 = vsel %vm310, %v2838, 0.0
      %v4297 = vsel %vm310, %v2966, 0.0
      %v4298 = vadd.f32 %v4296, %v4297
      %v4299 = vsel %vm310, %v3094, 0.0
      %v4300 = vadd.f32 %v4298, %v4299
      %v4301 = vsel %vm310, %v3222, 0.0
      %v4302 = vadd.f32 %v4300, %v4301
      %v4303 = vsel %vm310, %v3350, 0.0
      %v4304 = vadd.f32 %v4302, %v4303
      %v4305 = vsel %vm310, %v3478, 0.0
      %v4306 = vadd.f32 %v4304, %v4305
      %v4307 = vsel %vm310, %v3606, 0.0
      %v4308 = vadd.f32 %v4306, %v4307
      %v4309 = vsel %vm310, %v3734, 0.0
      %v4310 = vadd.f32 %v4308, %v4309
      %v4311 = vsel %vm310, %v3862, 0.0
      %v4312 = vadd.f32 %v4310, %v4311
      %v4313 = vsel %vm310, %v3990, 0.0
      %v4314 = vadd.f32 %v4312, %v4313
      %v4315 = vsel %vm310, %v2841, 0.0
      %v4316 = vsel %vm310, %v2969, 0.0
      %v4317 = vadd.f32 %v4315, %v4316
      %v4318 = vsel %vm310, %v3097, 0.0
      %v4319 = vadd.f32 %v4317, %v4318
      %v4320 = vsel %vm310, %v3225, 0.0
      %v4321 = vadd.f32 %v4319, %v4320
      %v4322 = vsel %vm310, %v3353, 0.0
      %v4323 = vadd.f32 %v4321, %v4322
      %v4324 = vsel %vm310, %v3481, 0.0
      %v4325 = vadd.f32 %v4323, %v4324
      %v4326 = vsel %vm310, %v3609, 0.0
      %v4327 = vadd.f32 %v4325, %v4326
      %v4328 = vsel %vm310, %v3737, 0.0
      %v4329 = vadd.f32 %v4327, %v4328
      %v4330 = vsel %vm310, %v3865, 0.0
      %v4331 = vadd.f32 %v4329, %v4330
      %v4332 = vsel %vm310, %v3993, 0.0
      %v4333 = vadd.f32 %v4331, %v4332
      %v4334 = vsel %vm310, %v2846, 0.0
      %v4335 = vsel %vm310, %v2974, 0.0
      %v4336 = vadd.f32 %v4334, %v4335
      %v4337 = vsel %vm310, %v3102, 0.0
      %v4338 = vadd.f32 %v4336, %v4337
      %v4339 = vsel %vm310, %v3230, 0.0
      %v4340 = vadd.f32 %v4338, %v4339
      %v4341 = vsel %vm310, %v3358, 0.0
      %v4342 = vadd.f32 %v4340, %v4341
      %v4343 = vsel %vm310, %v3486, 0.0
      %v4344 = vadd.f32 %v4342, %v4343
      %v4345 = vsel %vm310, %v3614, 0.0
      %v4346 = vadd.f32 %v4344, %v4345
      %v4347 = vsel %vm310, %v3742, 0.0
      %v4348 = vadd.f32 %v4346, %v4347
      %v4349 = vsel %vm310, %v3870, 0.0
      %v4350 = vadd.f32 %v4348, %v4349
      %v4351 = vsel %vm310, %v3998, 0.0
      %v4352 = vadd.f32 %v4350, %v4351
      %v4353 = vsel %vm310, %v2849, 0.0
      %v4354 = vsel %vm310, %v2977, 0.0
      %v4355 = vadd.f32 %v4353, %v4354
      %v4356 = vsel %vm310, %v3105, 0.0
      %v4357 = vadd.f32 %v4355, %v4356
      %v4358 = vsel %vm310, %v3233, 0.0
      %v4359 = vadd.f32 %v4357, %v4358
      %v4360 = vsel %vm310, %v3361, 0.0
      %v4361 = vadd.f32 %v4359, %v4360
      %v4362 = vsel %vm310, %v3489, 0.0
      %v4363 = vadd.f32 %v4361, %v4362
      %v4364 = vsel %vm310, %v3617, 0.0
      %v4365 = vadd.f32 %v4363, %v4364
      %v4366 = vsel %vm310, %v3745, 0.0
      %v4367 = vadd.f32 %v4365, %v4366
      %v4368 = vsel %vm310, %v3873, 0.0
      %v4369 = vadd.f32 %v4367, %v4368
      %v4370 = vsel %vm310, %v4001, 0.0
      %v4371 = vadd.f32 %v4369, %v4370
      %v4372 = vsel %vm310, %v2854, 0.0
      %v4373 = vsel %vm310, %v2982, 0.0
      %v4374 = vadd.f32 %v4372, %v4373
      %v4375 = vsel %vm310, %v3110, 0.0
      %v4376 = vadd.f32 %v4374, %v4375
      %v4377 = vsel %vm310, %v3238, 0.0
      %v4378 = vadd.f32 %v4376, %v4377
      %v4379 = vsel %vm310, %v3366, 0.0
      %v4380 = vadd.f32 %v4378, %v4379
      %v4381 = vsel %vm310, %v3494, 0.0
      %v4382 = vadd.f32 %v4380, %v4381
      %v4383 = vsel %vm310, %v3622, 0.0
      %v4384 = vadd.f32 %v4382, %v4383
      %v4385 = vsel %vm310, %v3750, 0.0
      %v4386 = vadd.f32 %v4384, %v4385
      %v4387 = vsel %vm310, %v3878, 0.0
      %v4388 = vadd.f32 %v4386, %v4387
      %v4389 = vsel %vm310, %v4006, 0.0
      %v4390 = vadd.f32 %v4388, %v4389
      %v4391 = vsel %vm310, %v2857, 0.0
      %v4392 = vsel %vm310, %v2985, 0.0
      %v4393 = vadd.f32 %v4391, %v4392
      %v4394 = vsel %vm310, %v3113, 0.0
      %v4395 = vadd.f32 %v4393, %v4394
      %v4396 = vsel %vm310, %v3241, 0.0
      %v4397 = vadd.f32 %v4395, %v4396
      %v4398 = vsel %vm310, %v3369, 0.0
      %v4399 = vadd.f32 %v4397, %v4398
      %v4400 = vsel %vm310, %v3497, 0.0
      %v4401 = vadd.f32 %v4399, %v4400
      %v4402 = vsel %vm310, %v3625, 0.0
      %v4403 = vadd.f32 %v4401, %v4402
      %v4404 = vsel %vm310, %v3753, 0.0
      %v4405 = vadd.f32 %v4403, %v4404
      %v4406 = vsel %vm310, %v3881, 0.0
      %v4407 = vadd.f32 %v4405, %v4406
      %v4408 = vsel %vm310, %v4009, 0.0
      %v4409 = vadd.f32 %v4407, %v4408
      %v4410 = vsel %vm310, %v2862, 0.0
      %v4411 = vsel %vm310, %v2990, 0.0
      %v4412 = vadd.f32 %v4410, %v4411
      %v4413 = vsel %vm310, %v3118, 0.0
      %v4414 = vadd.f32 %v4412, %v4413
      %v4415 = vsel %vm310, %v3246, 0.0
      %v4416 = vadd.f32 %v4414, %v4415
      %v4417 = vsel %vm310, %v3374, 0.0
      %v4418 = vadd.f32 %v4416, %v4417
      %v4419 = vsel %vm310, %v3502, 0.0
      %v4420 = vadd.f32 %v4418, %v4419
      %v4421 = vsel %vm310, %v3630, 0.0
      %v4422 = vadd.f32 %v4420, %v4421
      %v4423 = vsel %vm310, %v3758, 0.0
      %v4424 = vadd.f32 %v4422, %v4423
      %v4425 = vsel %vm310, %v3886, 0.0
      %v4426 = vadd.f32 %v4424, %v4425
      %v4427 = vsel %vm310, %v4014, 0.0
      %v4428 = vadd.f32 %v4426, %v4427
      %v4429 = vsel %vm310, %v2865, 0.0
      %v4430 = vsel %vm310, %v2993, 0.0
      %v4431 = vadd.f32 %v4429, %v4430
      %v4432 = vsel %vm310, %v3121, 0.0
      %v4433 = vadd.f32 %v4431, %v4432
      %v4434 = vsel %vm310, %v3249, 0.0
      %v4435 = vadd.f32 %v4433, %v4434
      %v4436 = vsel %vm310, %v3377, 0.0
      %v4437 = vadd.f32 %v4435, %v4436
      %v4438 = vsel %vm310, %v3505, 0.0
      %v4439 = vadd.f32 %v4437, %v4438
      %v4440 = vsel %vm310, %v3633, 0.0
      %v4441 = vadd.f32 %v4439, %v4440
      %v4442 = vsel %vm310, %v3761, 0.0
      %v4443 = vadd.f32 %v4441, %v4442
      %v4444 = vsel %vm310, %v3889, 0.0
      %v4445 = vadd.f32 %v4443, %v4444
      %v4446 = vsel %vm310, %v4017, 0.0
      %v4447 = vadd.f32 %v4445, %v4446
      %v4448 = vsel %vm310, %v2870, 0.0
      %v4449 = vsel %vm310, %v2998, 0.0
      %v4450 = vadd.f32 %v4448, %v4449
      %v4451 = vsel %vm310, %v3126, 0.0
      %v4452 = vadd.f32 %v4450, %v4451
      %v4453 = vsel %vm310, %v3254, 0.0
      %v4454 = vadd.f32 %v4452, %v4453
      %v4455 = vsel %vm310, %v3382, 0.0
      %v4456 = vadd.f32 %v4454, %v4455
      %v4457 = vsel %vm310, %v3510, 0.0
      %v4458 = vadd.f32 %v4456, %v4457
      %v4459 = vsel %vm310, %v3638, 0.0
      %v4460 = vadd.f32 %v4458, %v4459
      %v4461 = vsel %vm310, %v3766, 0.0
      %v4462 = vadd.f32 %v4460, %v4461
      %v4463 = vsel %vm310, %v3894, 0.0
      %v4464 = vadd.f32 %v4462, %v4463
      %v4465 = vsel %vm310, %v4022, 0.0
      %v4466 = vadd.f32 %v4464, %v4465
      %v4467 = vsel %vm310, %v2873, 0.0
      %v4468 = vsel %vm310, %v3001, 0.0
      %v4469 = vadd.f32 %v4467, %v4468
      %v4470 = vsel %vm310, %v3129, 0.0
      %v4471 = vadd.f32 %v4469, %v4470
      %v4472 = vsel %vm310, %v3257, 0.0
      %v4473 = vadd.f32 %v4471, %v4472
      %v4474 = vsel %vm310, %v3385, 0.0
      %v4475 = vadd.f32 %v4473, %v4474
      %v4476 = vsel %vm310, %v3513, 0.0
      %v4477 = vadd.f32 %v4475, %v4476
      %v4478 = vsel %vm310, %v3641, 0.0
      %v4479 = vadd.f32 %v4477, %v4478
      %v4480 = vsel %vm310, %v3769, 0.0
      %v4481 = vadd.f32 %v4479, %v4480
      %v4482 = vsel %vm310, %v3897, 0.0
      %v4483 = vadd.f32 %v4481, %v4482
      %v4484 = vsel %vm310, %v4025, 0.0
      %v4485 = vadd.f32 %v4483, %v4484
      %v4486 = vsel %vm310, %v2878, 0.0
      %v4487 = vsel %vm310, %v3006, 0.0
      %v4488 = vadd.f32 %v4486, %v4487
      %v4489 = vsel %vm310, %v3134, 0.0
      %v4490 = vadd.f32 %v4488, %v4489
      %v4491 = vsel %vm310, %v3262, 0.0
      %v4492 = vadd.f32 %v4490, %v4491
      %v4493 = vsel %vm310, %v3390, 0.0
      %v4494 = vadd.f32 %v4492, %v4493
      %v4495 = vsel %vm310, %v3518, 0.0
      %v4496 = vadd.f32 %v4494, %v4495
      %v4497 = vsel %vm310, %v3646, 0.0
      %v4498 = vadd.f32 %v4496, %v4497
      %v4499 = vsel %vm310, %v3774, 0.0
      %v4500 = vadd.f32 %v4498, %v4499
      %v4501 = vsel %vm310, %v3902, 0.0
      %v4502 = vadd.f32 %v4500, %v4501
      %v4503 = vsel %vm310, %v4030, 0.0
      %v4504 = vadd.f32 %v4502, %v4503
      %v4505 = vsel %vm310, %v2881, 0.0
      %v4506 = vsel %vm310, %v3009, 0.0
      %v4507 = vadd.f32 %v4505, %v4506
      %v4508 = vsel %vm310, %v3137, 0.0
      %v4509 = vadd.f32 %v4507, %v4508
      %v4510 = vsel %vm310, %v3265, 0.0
      %v4511 = vadd.f32 %v4509, %v4510
      %v4512 = vsel %vm310, %v3393, 0.0
      %v4513 = vadd.f32 %v4511, %v4512
      %v4514 = vsel %vm310, %v3521, 0.0
      %v4515 = vadd.f32 %v4513, %v4514
      %v4516 = vsel %vm310, %v3649, 0.0
      %v4517 = vadd.f32 %v4515, %v4516
      %v4518 = vsel %vm310, %v3777, 0.0
      %v4519 = vadd.f32 %v4517, %v4518
      %v4520 = vsel %vm310, %v3905, 0.0
      %v4521 = vadd.f32 %v4519, %v4520
      %v4522 = vsel %vm310, %v4033, 0.0
      %v4523 = vadd.f32 %v4521, %v4522
      %v4524 = vsel %vm310, %v2886, 0.0
      %v4525 = vsel %vm310, %v3014, 0.0
      %v4526 = vadd.f32 %v4524, %v4525
      %v4527 = vsel %vm310, %v3142, 0.0
      %v4528 = vadd.f32 %v4526, %v4527
      %v4529 = vsel %vm310, %v3270, 0.0
      %v4530 = vadd.f32 %v4528, %v4529
      %v4531 = vsel %vm310, %v3398, 0.0
      %v4532 = vadd.f32 %v4530, %v4531
      %v4533 = vsel %vm310, %v3526, 0.0
      %v4534 = vadd.f32 %v4532, %v4533
      %v4535 = vsel %vm310, %v3654, 0.0
      %v4536 = vadd.f32 %v4534, %v4535
      %v4537 = vsel %vm310, %v3782, 0.0
      %v4538 = vadd.f32 %v4536, %v4537
      %v4539 = vsel %vm310, %v3910, 0.0
      %v4540 = vadd.f32 %v4538, %v4539
      %v4541 = vsel %vm310, %v4038, 0.0
      %v4542 = vadd.f32 %v4540, %v4541
      %v4543 = vsel %vm310, %v2889, 0.0
      %v4544 = vsel %vm310, %v3017, 0.0
      %v4545 = vadd.f32 %v4543, %v4544
      %v4546 = vsel %vm310, %v3145, 0.0
      %v4547 = vadd.f32 %v4545, %v4546
      %v4548 = vsel %vm310, %v3273, 0.0
      %v4549 = vadd.f32 %v4547, %v4548
      %v4550 = vsel %vm310, %v3401, 0.0
      %v4551 = vadd.f32 %v4549, %v4550
      %v4552 = vsel %vm310, %v3529, 0.0
      %v4553 = vadd.f32 %v4551, %v4552
      %v4554 = vsel %vm310, %v3657, 0.0
      %v4555 = vadd.f32 %v4553, %v4554
      %v4556 = vsel %vm310, %v3785, 0.0
      %v4557 = vadd.f32 %v4555, %v4556
      %v4558 = vsel %vm310, %v3913, 0.0
      %v4559 = vadd.f32 %v4557, %v4558
      %v4560 = vsel %vm310, %v4041, 0.0
      %v4561 = vadd.f32 %v4559, %v4560
      %v4562 = vsel %vm310, %v2894, 0.0
      %v4563 = vsel %vm310, %v3022, 0.0
      %v4564 = vadd.f32 %v4562, %v4563
      %v4565 = vsel %vm310, %v3150, 0.0
      %v4566 = vadd.f32 %v4564, %v4565
      %v4567 = vsel %vm310, %v3278, 0.0
      %v4568 = vadd.f32 %v4566, %v4567
      %v4569 = vsel %vm310, %v3406, 0.0
      %v4570 = vadd.f32 %v4568, %v4569
      %v4571 = vsel %vm310, %v3534, 0.0
      %v4572 = vadd.f32 %v4570, %v4571
      %v4573 = vsel %vm310, %v3662, 0.0
      %v4574 = vadd.f32 %v4572, %v4573
      %v4575 = vsel %vm310, %v3790, 0.0
      %v4576 = vadd.f32 %v4574, %v4575
      %v4577 = vsel %vm310, %v3918, 0.0
      %v4578 = vadd.f32 %v4576, %v4577
      %v4579 = vsel %vm310, %v4046, 0.0
      %v4580 = vadd.f32 %v4578, %v4579
      %v4581 = vsel %vm310, %v2897, 0.0
      %v4582 = vsel %vm310, %v3025, 0.0
      %v4583 = vadd.f32 %v4581, %v4582
      %v4584 = vsel %vm310, %v3153, 0.0
      %v4585 = vadd.f32 %v4583, %v4584
      %v4586 = vsel %vm310, %v3281, 0.0
      %v4587 = vadd.f32 %v4585, %v4586
      %v4588 = vsel %vm310, %v3409, 0.0
      %v4589 = vadd.f32 %v4587, %v4588
      %v4590 = vsel %vm310, %v3537, 0.0
      %v4591 = vadd.f32 %v4589, %v4590
      %v4592 = vsel %vm310, %v3665, 0.0
      %v4593 = vadd.f32 %v4591, %v4592
      %v4594 = vsel %vm310, %v3793, 0.0
      %v4595 = vadd.f32 %v4593, %v4594
      %v4596 = vsel %vm310, %v3921, 0.0
      %v4597 = vadd.f32 %v4595, %v4596
      %v4598 = vsel %vm310, %v4049, 0.0
      %v4599 = vadd.f32 %v4597, %v4598
      %v4600 = vsel %vm310, %v2902, 0.0
      %v4601 = vsel %vm310, %v3030, 0.0
      %v4602 = vadd.f32 %v4600, %v4601
      %v4603 = vsel %vm310, %v3158, 0.0
      %v4604 = vadd.f32 %v4602, %v4603
      %v4605 = vsel %vm310, %v3286, 0.0
      %v4606 = vadd.f32 %v4604, %v4605
      %v4607 = vsel %vm310, %v3414, 0.0
      %v4608 = vadd.f32 %v4606, %v4607
      %v4609 = vsel %vm310, %v3542, 0.0
      %v4610 = vadd.f32 %v4608, %v4609
      %v4611 = vsel %vm310, %v3670, 0.0
      %v4612 = vadd.f32 %v4610, %v4611
      %v4613 = vsel %vm310, %v3798, 0.0
      %v4614 = vadd.f32 %v4612, %v4613
      %v4615 = vsel %vm310, %v3926, 0.0
      %v4616 = vadd.f32 %v4614, %v4615
      %v4617 = vsel %vm310, %v4054, 0.0
      %v4618 = vadd.f32 %v4616, %v4617
      %v4619 = vsel %vm310, %v2905, 0.0
      %v4620 = vsel %vm310, %v3033, 0.0
      %v4621 = vadd.f32 %v4619, %v4620
      %v4622 = vsel %vm310, %v3161, 0.0
      %v4623 = vadd.f32 %v4621, %v4622
      %v4624 = vsel %vm310, %v3289, 0.0
      %v4625 = vadd.f32 %v4623, %v4624
      %v4626 = vsel %vm310, %v3417, 0.0
      %v4627 = vadd.f32 %v4625, %v4626
      %v4628 = vsel %vm310, %v3545, 0.0
      %v4629 = vadd.f32 %v4627, %v4628
      %v4630 = vsel %vm310, %v3673, 0.0
      %v4631 = vadd.f32 %v4629, %v4630
      %v4632 = vsel %vm310, %v3801, 0.0
      %v4633 = vadd.f32 %v4631, %v4632
      %v4634 = vsel %vm310, %v3929, 0.0
      %v4635 = vadd.f32 %v4633, %v4634
      %v4636 = vsel %vm310, %v4057, 0.0
      %v4637 = vadd.f32 %v4635, %v4636
      %v4638 = vsel %vm310, %v2910, 0.0
      %v4639 = vsel %vm310, %v3038, 0.0
      %v4640 = vadd.f32 %v4638, %v4639
      %v4641 = vsel %vm310, %v3166, 0.0
      %v4642 = vadd.f32 %v4640, %v4641
      %v4643 = vsel %vm310, %v3294, 0.0
      %v4644 = vadd.f32 %v4642, %v4643
      %v4645 = vsel %vm310, %v3422, 0.0
      %v4646 = vadd.f32 %v4644, %v4645
      %v4647 = vsel %vm310, %v3550, 0.0
      %v4648 = vadd.f32 %v4646, %v4647
      %v4649 = vsel %vm310, %v3678, 0.0
      %v4650 = vadd.f32 %v4648, %v4649
      %v4651 = vsel %vm310, %v3806, 0.0
      %v4652 = vadd.f32 %v4650, %v4651
      %v4653 = vsel %vm310, %v3934, 0.0
      %v4654 = vadd.f32 %v4652, %v4653
      %v4655 = vsel %vm310, %v4062, 0.0
      %v4656 = vadd.f32 %v4654, %v4655
      %v4657 = vsel %vm310, %v2913, 0.0
      %v4658 = vsel %vm310, %v3041, 0.0
      %v4659 = vadd.f32 %v4657, %v4658
      %v4660 = vsel %vm310, %v3169, 0.0
      %v4661 = vadd.f32 %v4659, %v4660
      %v4662 = vsel %vm310, %v3297, 0.0
      %v4663 = vadd.f32 %v4661, %v4662
      %v4664 = vsel %vm310, %v3425, 0.0
      %v4665 = vadd.f32 %v4663, %v4664
      %v4666 = vsel %vm310, %v3553, 0.0
      %v4667 = vadd.f32 %v4665, %v4666
      %v4668 = vsel %vm310, %v3681, 0.0
      %v4669 = vadd.f32 %v4667, %v4668
      %v4670 = vsel %vm310, %v3809, 0.0
      %v4671 = vadd.f32 %v4669, %v4670
      %v4672 = vsel %vm310, %v3937, 0.0
      %v4673 = vadd.f32 %v4671, %v4672
      %v4674 = vsel %vm310, %v4065, 0.0
      %v4675 = vadd.f32 %v4673, %v4674
      %v4676 = vrcp.pop 10.0
      %v4677 = vmul.f32 %v4086, %v4676
      %v4678 = vmul.f32 %v4105, %v4676
      %v4679 = vmul.f32 %v4124, %v4676
      %v4680 = vmul.f32 %v4143, %v4676
      %v4681 = vmul.f32 %v4162, %v4676
      %v4682 = vmul.f32 %v4181, %v4676
      %v4683 = vmul.f32 %v4200, %v4676
      %v4684 = vmul.f32 %v4219, %v4676
      %v4685 = vmul.f32 %v4238, %v4676
      %v4686 = vmul.f32 %v4257, %v4676
      %v4687 = vmul.f32 %v4276, %v4676
      %v4688 = vmul.f32 %v4295, %v4676
      %v4689 = vmul.f32 %v4314, %v4676
      %v4690 = vmul.f32 %v4333, %v4676
      %v4691 = vmul.f32 %v4352, %v4676
      %v4692 = vmul.f32 %v4371, %v4676
      %v4693 = vmul.f32 %v4390, %v4676
      %v4694 = vmul.f32 %v4409, %v4676
      %v4695 = vmul.f32 %v4428, %v4676
      %v4696 = vmul.f32 %v4447, %v4676
      %v4697 = vmul.f32 %v4466, %v4676
      %v4698 = vmul.f32 %v4485, %v4676
      %v4699 = vmul.f32 %v4504, %v4676
      %v4700 = vmul.f32 %v4523, %v4676
      %v4701 = vmul.f32 %v4542, %v4676
      %v4702 = vmul.f32 %v4561, %v4676
      %v4703 = vmul.f32 %v4580, %v4676
      %v4704 = vmul.f32 %v4599, %v4676
      %v4705 = vmul.f32 %v4618, %v4676
      %v4706 = vmul.f32 %v4637, %v4676
      %v4707 = vmul.f32 %v4656, %v4676
      %v4708 = vmul.f32 %v4675, %v4676
      %v4709 = vsub.f32 %v2790, %v4677
      %v4710 = vsub.f32 %v2793, %v4678
      %v4711 = vsub.f32 %v2798, %v4679
      %v4712 = vsub.f32 %v2801, %v4680
      %v4713 = vsub.f32 %v2806, %v4681
      %v4714 = vsub.f32 %v2809, %v4682
      %v4715 = vsub.f32 %v2814, %v4683
      %v4716 = vsub.f32 %v2817, %v4684
      %v4717 = vsub.f32 %v2822, %v4685
      %v4718 = vsub.f32 %v2825, %v4686
      %v4719 = vsub.f32 %v2830, %v4687
      %v4720 = vsub.f32 %v2833, %v4688
      %v4721 = vsub.f32 %v2838, %v4689
      %v4722 = vsub.f32 %v2841, %v4690
      %v4723 = vsub.f32 %v2846, %v4691
      %v4724 = vsub.f32 %v2849, %v4692
      %v4725 = vsub.f32 %v2854, %v4693
      %v4726 = vsub.f32 %v2857, %v4694
      %v4727 = vsub.f32 %v2862, %v4695
      %v4728 = vsub.f32 %v2865, %v4696
      %v4729 = vsub.f32 %v2870, %v4697
      %v4730 = vsub.f32 %v2873, %v4698
      %v4731 = vsub.f32 %v2878, %v4699
      %v4732 = vsub.f32 %v2881, %v4700
      %v4733 = vsub.f32 %v2886, %v4701
      %v4734 = vsub.f32 %v2889, %v4702
      %v4735 = vsub.f32 %v2894, %v4703
      %v4736 = vsub.f32 %v2897, %v4704
      %v4737 = vsub.f32 %v2902, %v4705
      %v4738 = vsub.f32 %v2905, %v4706
      %v4739 = vsub.f32 %v2910, %v4707
      %v4740 = vsub.f32 %v2913, %v4708
      %v4741 = vsub.f32 %v2918, %v4677
      %v4742 = vsub.f32 %v2921, %v4678
      %v4743 = vsub.f32 %v2926, %v4679
      %v4744 = vsub.f32 %v2929, %v4680
      %v4745 = vsub.f32 %v2934, %v4681
      %v4746 = vsub.f32 %v2937, %v4682
      %v4747 = vsub.f32 %v2942, %v4683
      %v4748 = vsub.f32 %v2945, %v4684
      %v4749 = vsub.f32 %v2950, %v4685
      %v4750 = vsub.f32 %v2953, %v4686
      %v4751 = vsub.f32 %v2958, %v4687
      %v4752 = vsub.f32 %v2961, %v4688
      %v4753 = vsub.f32 %v2966, %v4689
      %v4754 = vsub.f32 %v2969, %v4690
      %v4755 = vsub.f32 %v2974, %v4691
      %v4756 = vsub.f32 %v2977, %v4692
      %v4757 = vsub.f32 %v2982, %v4693
      %v4758 = vsub.f32 %v2985, %v4694
      %v4759 = vsub.f32 %v2990, %v4695
      %v4760 = vsub.f32 %v2993, %v4696
      %v4761 = vsub.f32 %v2998, %v4697
      %v4762 = vsub.f32 %v3001, %v4698
      %v4763 = vsub.f32 %v3006, %v4699
      %v4764 = vsub.f32 %v3009, %v4700
      %v4765 = vsub.f32 %v3014, %v4701
      %v4766 = vsub.f32 %v3017, %v4702
      %v4767 = vsub.f32 %v3022, %v4703
      %v4768 = vsub.f32 %v3025, %v4704
      %v4769 = vsub.f32 %v3030, %v4705
      %v4770 = vsub.f32 %v3033, %v4706
      %v4771 = vsub.f32 %v3038, %v4707
      %v4772 = vsub.f32 %v3041, %v4708
      %v4773 = vsub.f32 %v3046, %v4677
      %v4774 = vsub.f32 %v3049, %v4678
      %v4775 = vsub.f32 %v3054, %v4679
      %v4776 = vsub.f32 %v3057, %v4680
      %v4777 = vsub.f32 %v3062, %v4681
      %v4778 = vsub.f32 %v3065, %v4682
      %v4779 = vsub.f32 %v3070, %v4683
      %v4780 = vsub.f32 %v3073, %v4684
      %v4781 = vsub.f32 %v3078, %v4685
      %v4782 = vsub.f32 %v3081, %v4686
      %v4783 = vsub.f32 %v3086, %v4687
      %v4784 = vsub.f32 %v3089, %v4688
      %v4785 = vsub.f32 %v3094, %v4689
      %v4786 = vsub.f32 %v3097, %v4690
      %v4787 = vsub.f32 %v3102, %v4691
      %v4788 = vsub.f32 %v3105, %v4692
      %v4789 = vsub.f32 %v3110, %v4693
      %v4790 = vsub.f32 %v3113, %v4694
      %v4791 = vsub.f32 %v3118, %v4695
      %v4792 = vsub.f32 %v3121, %v4696
      %v4793 = vsub.f32 %v3126, %v4697
      %v4794 = vsub.f32 %v3129, %v4698
      %v4795 = vsub.f32 %v3134, %v4699
      %v4796 = vsub.f32 %v3137, %v4700
      %v4797 = vsub.f32 %v3142, %v4701
      %v4798 = vsub.f32 %v3145, %v4702
      %v4799 = vsub.f32 %v3150, %v4703
      %v4800 = vsub.f32 %v3153, %v4704
      %v4801 = vsub.f32 %v3158, %v4705
      %v4802 = vsub.f32 %v3161, %v4706
      %v4803 = vsub.f32 %v3166, %v4707
      %v4804 = vsub.f32 %v3169, %v4708
      %v4805 = vsub.f32 %v3174, %v4677
      %v4806 = vsub.f32 %v3177, %v4678
      %v4807 = vsub.f32 %v3182, %v4679
      %v4808 = vsub.f32 %v3185, %v4680
      %v4809 = vsub.f32 %v3190, %v4681
      %v4810 = vsub.f32 %v3193, %v4682
      %v4811 = vsub.f32 %v3198, %v4683
      %v4812 = vsub.f32 %v3201, %v4684
      %v4813 = vsub.f32 %v3206, %v4685
      %v4814 = vsub.f32 %v3209, %v4686
      %v4815 = vsub.f32 %v3214, %v4687
      %v4816 = vsub.f32 %v3217, %v4688
      %v4817 = vsub.f32 %v3222, %v4689
      %v4818 = vsub.f32 %v3225, %v4690
      %v4819 = vsub.f32 %v3230, %v4691
      %v4820 = vsub.f32 %v3233, %v4692
      %v4821 = vsub.f32 %v3238, %v4693
      %v4822 = vsub.f32 %v3241, %v4694
      %v4823 = vsub.f32 %v3246, %v4695
      %v4824 = vsub.f32 %v3249, %v4696
      %v4825 = vsub.f32 %v3254, %v4697
      %v4826 = vsub.f32 %v3257, %v4698
      %v4827 = vsub.f32 %v3262, %v4699
      %v4828 = vsub.f32 %v3265, %v4700
      %v4829 = vsub.f32 %v3270, %v4701
      %v4830 = vsub.f32 %v3273, %v4702
      %v4831 = vsub.f32 %v3278, %v4703
      %v4832 = vsub.f32 %v3281, %v4704
      %v4833 = vsub.f32 %v3286, %v4705
      %v4834 = vsub.f32 %v3289, %v4706
      %v4835 = vsub.f32 %v3294, %v4707
      %v4836 = vsub.f32 %v3297, %v4708
      %v4837 = vsub.f32 %v3302, %v4677
      %v4838 = vsub.f32 %v3305, %v4678
      %v4839 = vsub.f32 %v3310, %v4679
      %v4840 = vsub.f32 %v3313, %v4680
      %v4841 = vsub.f32 %v3318, %v4681
      %v4842 = vsub.f32 %v3321, %v4682
      %v4843 = vsub.f32 %v3326, %v4683
      %v4844 = vsub.f32 %v3329, %v4684
      %v4845 = vsub.f32 %v3334, %v4685
      %v4846 = vsub.f32 %v3337, %v4686
      %v4847 = vsub.f32 %v3342, %v4687
      %v4848 = vsub.f32 %v3345, %v4688
      %v4849 = vsub.f32 %v3350, %v4689
      %v4850 = vsub.f32 %v3353, %v4690
      %v4851 = vsub.f32 %v3358, %v4691
      %v4852 = vsub.f32 %v3361, %v4692
      %v4853 = vsub.f32 %v3366, %v4693
      %v4854 = vsub.f32 %v3369, %v4694
      %v4855 = vsub.f32 %v3374, %v4695
      %v4856 = vsub.f32 %v3377, %v4696
      %v4857 = vsub.f32 %v3382, %v4697
      %v4858 = vsub.f32 %v3385, %v4698
      %v4859 = vsub.f32 %v3390, %v4699
      %v4860 = vsub.f32 %v3393, %v4700
      %v4861 = vsub.f32 %v3398, %v4701
      %v4862 = vsub.f32 %v3401, %v4702
      %v4863 = vsub.f32 %v3406, %v4703
      %v4864 = vsub.f32 %v3409, %v4704
      %v4865 = vsub.f32 %v3414, %v4705
      %v4866 = vsub.f32 %v3417, %v4706
      %v4867 = vsub.f32 %v3422, %v4707
      %v4868 = vsub.f32 %v3425, %v4708
      %v4869 = vsub.f32 %v3430, %v4677
      %v4870 = vsub.f32 %v3433, %v4678
      %v4871 = vsub.f32 %v3438, %v4679
      %v4872 = vsub.f32 %v3441, %v4680
      %v4873 = vsub.f32 %v3446, %v4681
      %v4874 = vsub.f32 %v3449, %v4682
      %v4875 = vsub.f32 %v3454, %v4683
      %v4876 = vsub.f32 %v3457, %v4684
      %v4877 = vsub.f32 %v3462, %v4685
      %v4878 = vsub.f32 %v3465, %v4686
      %v4879 = vsub.f32 %v3470, %v4687
      %v4880 = vsub.f32 %v3473, %v4688
      %v4881 = vsub.f32 %v3478, %v4689
      %v4882 = vsub.f32 %v3481, %v4690
      %v4883 = vsub.f32 %v3486, %v4691
      %v4884 = vsub.f32 %v3489, %v4692
      %v4885 = vsub.f32 %v3494, %v4693
      %v4886 = vsub.f32 %v3497, %v4694
      %v4887 = vsub.f32 %v3502, %v4695
      %v4888 = vsub.f32 %v3505, %v4696
      %v4889 = vsub.f32 %v3510, %v4697
      %v4890 = vsub.f32 %v3513, %v4698
      %v4891 = vsub.f32 %v3518, %v4699
      %v4892 = vsub.f32 %v3521, %v4700
      %v4893 = vsub.f32 %v3526, %v4701
      %v4894 = vsub.f32 %v3529, %v4702
      %v4895 = vsub.f32 %v3534, %v4703
      %v4896 = vsub.f32 %v3537, %v4704
      %v4897 = vsub.f32 %v3542, %v4705
      %v4898 = vsub.f32 %v3545, %v4706
      %v4899 = vsub.f32 %v3550, %v4707
      %v4900 = vsub.f32 %v3553, %v4708
      %v4901 = vsub.f32 %v3558, %v4677
      %v4902 = vsub.f32 %v3561, %v4678
      %v4903 = vsub.f32 %v3566, %v4679
      %v4904 = vsub.f32 %v3569, %v4680
      %v4905 = vsub.f32 %v3574, %v4681
      %v4906 = vsub.f32 %v3577, %v4682
      %v4907 = vsub.f32 %v3582, %v4683
      %v4908 = vsub.f32 %v3585, %v4684
      %v4909 = vsub.f32 %v3590, %v4685
      %v4910 = vsub.f32 %v3593, %v4686
      %v4911 = vsub.f32 %v3598, %v4687
      %v4912 = vsub.f32 %v3601, %v4688
      %v4913 = vsub.f32 %v3606, %v4689
      %v4914 = vsub.f32 %v3609, %v4690
      %v4915 = vsub.f32 %v3614, %v4691
      %v4916 = vsub.f32 %v3617, %v4692
      %v4917 = vsub.f32 %v3622, %v4693
      %v4918 = vsub.f32 %v3625, %v4694
      %v4919 = vsub.f32 %v3630, %v4695
      %v4920 = vsub.f32 %v3633, %v4696
      %v4921 = vsub.f32 %v3638, %v4697
      %v4922 = vsub.f32 %v3641, %v4698
      %v4923 = vsub.f32 %v3646, %v4699
      %v4924 = vsub.f32 %v3649, %v4700
      %v4925 = vsub.f32 %v3654, %v4701
      %v4926 = vsub.f32 %v3657, %v4702
      %v4927 = vsub.f32 %v3662, %v4703
      %v4928 = vsub.f32 %v3665, %v4704
      %v4929 = vsub.f32 %v3670, %v4705
      %v4930 = vsub.f32 %v3673, %v4706
      %v4931 = vsub.f32 %v3678, %v4707
      %v4932 = vsub.f32 %v3681, %v4708
      %v4933 = vsub.f32 %v3686, %v4677
      %v4934 = vsub.f32 %v3689, %v4678
      %v4935 = vsub.f32 %v3694, %v4679
      %v4936 = vsub.f32 %v3697, %v4680
      %v4937 = vsub.f32 %v3702, %v4681
      %v4938 = vsub.f32 %v3705, %v4682
      %v4939 = vsub.f32 %v3710, %v4683
      %v4940 = vsub.f32 %v3713, %v4684
      %v4941 = vsub.f32 %v3718, %v4685
      %v4942 = vsub.f32 %v3721, %v4686
      %v4943 = vsub.f32 %v3726, %v4687
      %v4944 = vsub.f32 %v3729, %v4688
      %v4945 = vsub.f32 %v3734, %v4689
      %v4946 = vsub.f32 %v3737, %v4690
      %v4947 = vsub.f32 %v3742, %v4691
      %v4948 = vsub.f32 %v3745, %v4692
      %v4949 = vsub.f32 %v3750, %v4693
      %v4950 = vsub.f32 %v3753, %v4694
      %v4951 = vsub.f32 %v3758, %v4695
      %v4952 = vsub.f32 %v3761, %v4696
      %v4953 = vsub.f32 %v3766, %v4697
      %v4954 = vsub.f32 %v3769, %v4698
      %v4955 = vsub.f32 %v3774, %v4699
      %v4956 = vsub.f32 %v3777, %v4700
      %v4957 = vsub.f32 %v3782, %v4701
      %v4958 = vsub.f32 %v3785, %v4702
      %v4959 = vsub.f32 %v3790, %v4703
      %v4960 = vsub.f32 %v3793, %v4704
      %v4961 = vsub.f32 %v3798, %v4705
      %v4962 = vsub.f32 %v3801, %v4706
      %v4963 = vsub.f32 %v3806, %v4707
      %v4964 = vsub.f32 %v3809, %v4708
      %v4965 = vsub.f32 %v3814, %v4677
      %v4966 = vsub.f32 %v3817, %v4678
      %v4967 = vsub.f32 %v3822, %v4679
      %v4968 = vsub.f32 %v3825, %v4680
      %v4969 = vsub.f32 %v3830, %v4681
      %v4970 = vsub.f32 %v3833, %v4682
      %v4971 = vsub.f32 %v3838, %v4683
      %v4972 = vsub.f32 %v3841, %v4684
      %v4973 = vsub.f32 %v3846, %v4685
      %v4974 = vsub.f32 %v3849, %v4686
      %v4975 = vsub.f32 %v3854, %v4687
      %v4976 = vsub.f32 %v3857, %v4688
      %v4977 = vsub.f32 %v3862, %v4689
      %v4978 = vsub.f32 %v3865, %v4690
      %v4979 = vsub.f32 %v3870, %v4691
      %v4980 = vsub.f32 %v3873, %v4692
      %v4981 = vsub.f32 %v3878, %v4693
      %v4982 = vsub.f32 %v3881, %v4694
      %v4983 = vsub.f32 %v3886, %v4695
      %v4984 = vsub.f32 %v3889, %v4696
      %v4985 = vsub.f32 %v3894, %v4697
      %v4986 = vsub.f32 %v3897, %v4698
      %v4987 = vsub.f32 %v3902, %v4699
      %v4988 = vsub.f32 %v3905, %v4700
      %v4989 = vsub.f32 %v3910, %v4701
      %v4990 = vsub.f32 %v3913, %v4702
      %v4991 = vsub.f32 %v3918, %v4703
      %v4992 = vsub.f32 %v3921, %v4704
      %v4993 = vsub.f32 %v3926, %v4705
      %v4994 = vsub.f32 %v3929, %v4706
      %v4995 = vsub.f32 %v3934, %v4707
      %v4996 = vsub.f32 %v3937, %v4708
      %v4997 = vsub.f32 %v3942, %v4677
      %v4998 = vsub.f32 %v3945, %v4678
      %v4999 = vsub.f32 %v3950, %v4679
      %v5000 = vsub.f32 %v3953, %v4680
      %v5001 = vsub.f32 %v3958, %v4681
      %v5002 = vsub.f32 %v3961, %v4682
      %v5003 = vsub.f32 %v3966, %v4683
      %v5004 = vsub.f32 %v3969, %v4684
      %v5005 = vsub.f32 %v3974, %v4685
      %v5006 = vsub.f32 %v3977, %v4686
      %v5007 = vsub.f32 %v3982, %v4687
      %v5008 = vsub.f32 %v3985, %v4688
      %v5009 = vsub.f32 %v3990, %v4689
      %v5010 = vsub.f32 %v3993, %v4690
      %v5011 = vsub.f32 %v3998, %v4691
      %v5012 = vsub.f32 %v4001, %v4692
      %v5013 = vsub.f32 %v4006, %v4693
      %v5014 = vsub.f32 %v4009, %v4694
      %v5015 = vsub.f32 %v4014, %v4695
      %v5016 = vsub.f32 %v4017, %v4696
      %v5017 = vsub.f32 %v4022, %v4697
      %v5018 = vsub.f32 %v4025, %v4698
      %v5019 = vsub.f32 %v4030, %v4699
      %v5020 = vsub.f32 %v4033, %v4700
      %v5021 = vsub.f32 %v4038, %v4701
      %v5022 = vsub.f32 %v4041, %v4702
      %v5023 = vsub.f32 %v4046, %v4703
      %v5024 = vsub.f32 %v4049, %v4704
      %v5025 = vsub.f32 %v4054, %v4705
      %v5026 = vsub.f32 %v4057, %v4706
      %v5027 = vsub.f32 %v4062, %v4707
      %v5028 = vsub.f32 %v4065, %v4708
      %v5029 = vmul.f32 %v4709, %v4709
      %v5030 = vmul.f32 %v4710, %v4710
      %v5031 = vmul.f32 %v4711, %v4711
      %v5032 = vmul.f32 %v4712, %v4712
      %v5033 = vmul.f32 %v4713, %v4713
      %v5034 = vmul.f32 %v4714, %v4714
      %v5035 = vmul.f32 %v4715, %v4715
      %v5036 = vmul.f32 %v4716, %v4716
      %v5037 = vmul.f32 %v4717, %v4717
      %v5038 = vmul.f32 %v4718, %v4718
      %v5039 = vmul.f32 %v4719, %v4719
      %v5040 = vmul.f32 %v4720, %v4720
      %v5041 = vmul.f32 %v4721, %v4721
      %v5042 = vmul.f32 %v4722, %v4722
      %v5043 = vmul.f32 %v4723, %v4723
      %v5044 = vmul.f32 %v4724, %v4724
      %v5045 = vmul.f32 %v4725, %v4725
      %v5046 = vmul.f32 %v4726, %v4726
      %v5047 = vmul.f32 %v4727, %v4727
      %v5048 = vmul.f32 %v4728, %v4728
      %v5049 = vmul.f32 %v4729, %v4729
      %v5050 = vmul.f32 %v4730, %v4730
      %v5051 = vmul.f32 %v4731, %v4731
      %v5052 = vmul.f32 %v4732, %v4732
      %v5053 = vmul.f32 %v4733, %v4733
      %v5054 = vmul.f32 %v4734, %v4734
      %v5055 = vmul.f32 %v4735, %v4735
      %v5056 = vmul.f32 %v4736, %v4736
      %v5057 = vmul.f32 %v4737, %v4737
      %v5058 = vmul.f32 %v4738, %v4738
      %v5059 = vmul.f32 %v4739, %v4739
      %v5060 = vmul.f32 %v4740, %v4740
      %v5061 = vmul.f32 %v4741, %v4741
      %v5062 = vmul.f32 %v4742, %v4742
      %v5063 = vmul.f32 %v4743, %v4743
      %v5064 = vmul.f32 %v4744, %v4744
      %v5065 = vmul.f32 %v4745, %v4745
      %v5066 = vmul.f32 %v4746, %v4746
      %v5067 = vmul.f32 %v4747, %v4747
      %v5068 = vmul.f32 %v4748, %v4748
      %v5069 = vmul.f32 %v4749, %v4749
      %v5070 = vmul.f32 %v4750, %v4750
      %v5071 = vmul.f32 %v4751, %v4751
      %v5072 = vmul.f32 %v4752, %v4752
      %v5073 = vmul.f32 %v4753, %v4753
      %v5074 = vmul.f32 %v4754, %v4754
      %v5075 = vmul.f32 %v4755, %v4755
      %v5076 = vmul.f32 %v4756, %v4756
      %v5077 = vmul.f32 %v4757, %v4757
      %v5078 = vmul.f32 %v4758, %v4758
      %v5079 = vmul.f32 %v4759, %v4759
      %v5080 = vmul.f32 %v4760, %v4760
      %v5081 = vmul.f32 %v4761, %v4761
      %v5082 = vmul.f32 %v4762, %v4762
      %v5083 = vmul.f32 %v4763, %v4763
      %v5084 = vmul.f32 %v4764, %v4764
      %v5085 = vmul.f32 %v4765, %v4765
      %v5086 = vmul.f32 %v4766, %v4766
      %v5087 = vmul.f32 %v4767, %v4767
      %v5088 = vmul.f32 %v4768, %v4768
      %v5089 = vmul.f32 %v4769, %v4769
      %v5090 = vmul.f32 %v4770, %v4770
      %v5091 = vmul.f32 %v4771, %v4771
      %v5092 = vmul.f32 %v4772, %v4772
      %v5093 = vmul.f32 %v4773, %v4773
      %v5094 = vmul.f32 %v4774, %v4774
      %v5095 = vmul.f32 %v4775, %v4775
      %v5096 = vmul.f32 %v4776, %v4776
      %v5097 = vmul.f32 %v4777, %v4777
      %v5098 = vmul.f32 %v4778, %v4778
      %v5099 = vmul.f32 %v4779, %v4779
      %v5100 = vmul.f32 %v4780, %v4780
      %v5101 = vmul.f32 %v4781, %v4781
      %v5102 = vmul.f32 %v4782, %v4782
      %v5103 = vmul.f32 %v4783, %v4783
      %v5104 = vmul.f32 %v4784, %v4784
      %v5105 = vmul.f32 %v4785, %v4785
      %v5106 = vmul.f32 %v4786, %v4786
      %v5107 = vmul.f32 %v4787, %v4787
      %v5108 = vmul.f32 %v4788, %v4788
      %v5109 = vmul.f32 %v4789, %v4789
      %v5110 = vmul.f32 %v4790, %v4790
      %v5111 = vmul.f32 %v4791, %v4791
      %v5112 = vmul.f32 %v4792, %v4792
      %v5113 = vmul.f32 %v4793, %v4793
      %v5114 = vmul.f32 %v4794, %v4794
      %v5115 = vmul.f32 %v4795, %v4795
      %v5116 = vmul.f32 %v4796, %v4796
      %v5117 = vmul.f32 %v4797, %v4797
      %v5118 = vmul.f32 %v4798, %v4798
      %v5119 = vmul.f32 %v4799, %v4799
      %v5120 = vmul.f32 %v4800, %v4800
      %v5121 = vmul.f32 %v4801, %v4801
      %v5122 = vmul.f32 %v4802, %v4802
      %v5123 = vmul.f32 %v4803, %v4803
      %v5124 = vmul.f32 %v4804, %v4804
      %v5125 = vmul.f32 %v4805, %v4805
      %v5126 = vmul.f32 %v4806, %v4806
      %v5127 = vmul.f32 %v4807, %v4807
      %v5128 = vmul.f32 %v4808, %v4808
      %v5129 = vmul.f32 %v4809, %v4809
      %v5130 = vmul.f32 %v4810, %v4810
      %v5131 = vmul.f32 %v4811, %v4811
      %v5132 = vmul.f32 %v4812, %v4812
      %v5133 = vmul.f32 %v4813, %v4813
      %v5134 = vmul.f32 %v4814, %v4814
      %v5135 = vmul.f32 %v4815, %v4815
      %v5136 = vmul.f32 %v4816, %v4816
      %v5137 = vmul.f32 %v4817, %v4817
      %v5138 = vmul.f32 %v4818, %v4818
      %v5139 = vmul.f32 %v4819, %v4819
      %v5140 = vmul.f32 %v4820, %v4820
      %v5141 = vmul.f32 %v4821, %v4821
      %v5142 = vmul.f32 %v4822, %v4822
      %v5143 = vmul.f32 %v4823, %v4823
      %v5144 = vmul.f32 %v4824, %v4824
      %v5145 = vmul.f32 %v4825, %v4825
      %v5146 = vmul.f32 %v4826, %v4826
      %v5147 = vmul.f32 %v4827, %v4827
      %v5148 = vmul.f32 %v4828, %v4828
      %v5149 = vmul.f32 %v4829, %v4829
      %v5150 = vmul.f32 %v4830, %v4830
      %v5151 = vmul.f32 %v4831, %v4831
      %v5152 = vmul.f32 %v4832, %v4832
      %v5153 = vmul.f32 %v4833, %v4833
      %v5154 = vmul.f32 %v4834, %v4834
      %v5155 = vmul.f32 %v4835, %v4835
      %v5156 = vmul.f32 %v4836, %v4836
      %v5157 = vmul.f32 %v4837, %v4837
      %v5158 = vmul.f32 %v4838, %v4838
      %v5159 = vmul.f32 %v4839, %v4839
      %v5160 = vmul.f32 %v4840, %v4840
      %v5161 = vmul.f32 %v4841, %v4841
      %v5162 = vmul.f32 %v4842, %v4842
      %v5163 = vmul.f32 %v4843, %v4843
      %v5164 = vmul.f32 %v4844, %v4844
      %v5165 = vmul.f32 %v4845, %v4845
      %v5166 = vmul.f32 %v4846, %v4846
      %v5167 = vmul.f32 %v4847, %v4847
      %v5168 = vmul.f32 %v4848, %v4848
      %v5169 = vmul.f32 %v4849, %v4849
      %v5170 = vmul.f32 %v4850, %v4850
      %v5171 = vmul.f32 %v4851, %v4851
      %v5172 = vmul.f32 %v4852, %v4852
      %v5173 = vmul.f32 %v4853, %v4853
      %v5174 = vmul.f32 %v4854, %v4854
      %v5175 = vmul.f32 %v4855, %v4855
      %v5176 = vmul.f32 %v4856, %v4856
      %v5177 = vmul.f32 %v4857, %v4857
      %v5178 = vmul.f32 %v4858, %v4858
      %v5179 = vmul.f32 %v4859, %v4859
      %v5180 = vmul.f32 %v4860, %v4860
      %v5181 = vmul.f32 %v4861, %v4861
      %v5182 = vmul.f32 %v4862, %v4862
      %v5183 = vmul.f32 %v4863, %v4863
      %v5184 = vmul.f32 %v4864, %v4864
      %v5185 = vmul.f32 %v4865, %v4865
      %v5186 = vmul.f32 %v4866, %v4866
      %v5187 = vmul.f32 %v4867, %v4867
      %v5188 = vmul.f32 %v4868, %v4868
      %v5189 = vmul.f32 %v4869, %v4869
      %v5190 = vmul.f32 %v4870, %v4870
      %v5191 = vmul.f32 %v4871, %v4871
      %v5192 = vmul.f32 %v4872, %v4872
      %v5193 = vmul.f32 %v4873, %v4873
      %v5194 = vmul.f32 %v4874, %v4874
      %v5195 = vmul.f32 %v4875, %v4875
      %v5196 = vmul.f32 %v4876, %v4876
      %v5197 = vmul.f32 %v4877, %v4877
      %v5198 = vmul.f32 %v4878, %v4878
      %v5199 = vmul.f32 %v4879, %v4879
      %v5200 = vmul.f32 %v4880, %v4880
      %v5201 = vmul.f32 %v4881, %v4881
      %v5202 = vmul.f32 %v4882, %v4882
      %v5203 = vmul.f32 %v4883, %v4883
      %v5204 = vmul.f32 %v4884, %v4884
      %v5205 = vmul.f32 %v4885, %v4885
      %v5206 = vmul.f32 %v4886, %v4886
      %v5207 = vmul.f32 %v4887, %v4887
      %v5208 = vmul.f32 %v4888, %v4888
      %v5209 = vmul.f32 %v4889, %v4889
      %v5210 = vmul.f32 %v4890, %v4890
      %v5211 = vmul.f32 %v4891, %v4891
      %v5212 = vmul.f32 %v4892, %v4892
      %v5213 = vmul.f32 %v4893, %v4893
      %v5214 = vmul.f32 %v4894, %v4894
      %v5215 = vmul.f32 %v4895, %v4895
      %v5216 = vmul.f32 %v4896, %v4896
      %v5217 = vmul.f32 %v4897, %v4897
      %v5218 = vmul.f32 %v4898, %v4898
      %v5219 = vmul.f32 %v4899, %v4899
      %v5220 = vmul.f32 %v4900, %v4900
      %v5221 = vmul.f32 %v4901, %v4901
      %v5222 = vmul.f32 %v4902, %v4902
      %v5223 = vmul.f32 %v4903, %v4903
      %v5224 = vmul.f32 %v4904, %v4904
      %v5225 = vmul.f32 %v4905, %v4905
      %v5226 = vmul.f32 %v4906, %v4906
      %v5227 = vmul.f32 %v4907, %v4907
      %v5228 = vmul.f32 %v4908, %v4908
      %v5229 = vmul.f32 %v4909, %v4909
      %v5230 = vmul.f32 %v4910, %v4910
      %v5231 = vmul.f32 %v4911, %v4911
      %v5232 = vmul.f32 %v4912, %v4912
      %v5233 = vmul.f32 %v4913, %v4913
      %v5234 = vmul.f32 %v4914, %v4914
      %v5235 = vmul.f32 %v4915, %v4915
      %v5236 = vmul.f32 %v4916, %v4916
      %v5237 = vmul.f32 %v4917, %v4917
      %v5238 = vmul.f32 %v4918, %v4918
      %v5239 = vmul.f32 %v4919, %v4919
      %v5240 = vmul.f32 %v4920, %v4920
      %v5241 = vmul.f32 %v4921, %v4921
      %v5242 = vmul.f32 %v4922, %v4922
      %v5243 = vmul.f32 %v4923, %v4923
      %v5244 = vmul.f32 %v4924, %v4924
      %v5245 = vmul.f32 %v4925, %v4925
      %v5246 = vmul.f32 %v4926, %v4926
      %v5247 = vmul.f32 %v4927, %v4927
      %v5248 = vmul.f32 %v4928, %v4928
      %v5249 = vmul.f32 %v4929, %v4929
      %v5250 = vmul.f32 %v4930, %v4930
      %v5251 = vmul.f32 %v4931, %v4931
      %v5252 = vmul.f32 %v4932, %v4932
      %v5253 = vmul.f32 %v4933, %v4933
      %v5254 = vmul.f32 %v4934, %v4934
      %v5255 = vmul.f32 %v4935, %v4935
      %v5256 = vmul.f32 %v4936, %v4936
      %v5257 = vmul.f32 %v4937, %v4937
      %v5258 = vmul.f32 %v4938, %v4938
      %v5259 = vmul.f32 %v4939, %v4939
      %v5260 = vmul.f32 %v4940, %v4940
      %v5261 = vmul.f32 %v4941, %v4941
      %v5262 = vmul.f32 %v4942, %v4942
      %v5263 = vmul.f32 %v4943, %v4943
      %v5264 = vmul.f32 %v4944, %v4944
      %v5265 = vmul.f32 %v4945, %v4945
      %v5266 = vmul.f32 %v4946, %v4946
      %v5267 = vmul.f32 %v4947, %v4947
      %v5268 = vmul.f32 %v4948, %v4948
      %v5269 = vmul.f32 %v4949, %v4949
      %v5270 = vmul.f32 %v4950, %v4950
      %v5271 = vmul.f32 %v4951, %v4951
      %v5272 = vmul.f32 %v4952, %v4952
      %v5273 = vmul.f32 %v4953, %v4953
      %v5274 = vmul.f32 %v4954, %v4954
      %v5275 = vmul.f32 %v4955, %v4955
      %v5276 = vmul.f32 %v4956, %v4956
      %v5277 = vmul.f32 %v4957, %v4957
      %v5278 = vmul.f32 %v4958, %v4958
      %v5279 = vmul.f32 %v4959, %v4959
      %v5280 = vmul.f32 %v4960, %v4960
      %v5281 = vmul.f32 %v4961, %v4961
      %v5282 = vmul.f32 %v4962, %v4962
      %v5283 = vmul.f32 %v4963, %v4963
      %v5284 = vmul.f32 %v4964, %v4964
      %v5285 = vmul.f32 %v4965, %v4965
      %v5286 = vmul.f32 %v4966, %v4966
      %v5287 = vmul.f32 %v4967, %v4967
      %v5288 = vmul.f32 %v4968, %v4968
      %v5289 = vmul.f32 %v4969, %v4969
      %v5290 = vmul.f32 %v4970, %v4970
      %v5291 = vmul.f32 %v4971, %v4971
      %v5292 = vmul.f32 %v4972, %v4972
      %v5293 = vmul.f32 %v4973, %v4973
      %v5294 = vmul.f32 %v4974, %v4974
      %v5295 = vmul.f32 %v4975, %v4975
      %v5296 = vmul.f32 %v4976, %v4976
      %v5297 = vmul.f32 %v4977, %v4977
      %v5298 = vmul.f32 %v4978, %v4978
      %v5299 = vmul.f32 %v4979, %v4979
      %v5300 = vmul.f32 %v4980, %v4980
      %v5301 = vmul.f32 %v4981, %v4981
      %v5302 = vmul.f32 %v4982, %v4982
      %v5303 = vmul.f32 %v4983, %v4983
      %v5304 = vmul.f32 %v4984, %v4984
      %v5305 = vmul.f32 %v4985, %v4985
      %v5306 = vmul.f32 %v4986, %v4986
      %v5307 = vmul.f32 %v4987, %v4987
      %v5308 = vmul.f32 %v4988, %v4988
      %v5309 = vmul.f32 %v4989, %v4989
      %v5310 = vmul.f32 %v4990, %v4990
      %v5311 = vmul.f32 %v4991, %v4991
      %v5312 = vmul.f32 %v4992, %v4992
      %v5313 = vmul.f32 %v4993, %v4993
      %v5314 = vmul.f32 %v4994, %v4994
      %v5315 = vmul.f32 %v4995, %v4995
      %v5316 = vmul.f32 %v4996, %v4996
      %v5317 = vmul.f32 %v4997, %v4997
      %v5318 = vmul.f32 %v4998, %v4998
      %v5319 = vmul.f32 %v4999, %v4999
      %v5320 = vmul.f32 %v5000, %v5000
      %v5321 = vmul.f32 %v5001, %v5001
      %v5322 = vmul.f32 %v5002, %v5002
      %v5323 = vmul.f32 %v5003, %v5003
      %v5324 = vmul.f32 %v5004, %v5004
      %v5325 = vmul.f32 %v5005, %v5005
      %v5326 = vmul.f32 %v5006, %v5006
      %v5327 = vmul.f32 %v5007, %v5007
      %v5328 = vmul.f32 %v5008, %v5008
      %v5329 = vmul.f32 %v5009, %v5009
      %v5330 = vmul.f32 %v5010, %v5010
      %v5331 = vmul.f32 %v5011, %v5011
      %v5332 = vmul.f32 %v5012, %v5012
      %v5333 = vmul.f32 %v5013, %v5013
      %v5334 = vmul.f32 %v5014, %v5014
      %v5335 = vmul.f32 %v5015, %v5015
      %v5336 = vmul.f32 %v5016, %v5016
      %v5337 = vmul.f32 %v5017, %v5017
      %v5338 = vmul.f32 %v5018, %v5018
      %v5339 = vmul.f32 %v5019, %v5019
      %v5340 = vmul.f32 %v5020, %v5020
      %v5341 = vmul.f32 %v5021, %v5021
      %v5342 = vmul.f32 %v5022, %v5022
      %v5343 = vmul.f32 %v5023, %v5023
      %v5344 = vmul.f32 %v5024, %v5024
      %v5345 = vmul.f32 %v5025, %v5025
      %v5346 = vmul.f32 %v5026, %v5026
      %v5347 = vmul.f32 %v5027, %v5027
      %v5348 = vmul.f32 %v5028, %v5028
      %v5349 = vsel %vm310, %v5029, 0.0
      %v5350 = vsel %vm310, %v5061, 0.0
      %v5351 = vadd.f32 %v5349, %v5350
      %v5352 = vsel %vm310, %v5093, 0.0
      %v5353 = vadd.f32 %v5351, %v5352
      %v5354 = vsel %vm310, %v5125, 0.0
      %v5355 = vadd.f32 %v5353, %v5354
      %v5356 = vsel %vm310, %v5157, 0.0
      %v5357 = vadd.f32 %v5355, %v5356
      %v5358 = vsel %vm310, %v5189, 0.0
      %v5359 = vadd.f32 %v5357, %v5358
      %v5360 = vsel %vm310, %v5221, 0.0
      %v5361 = vadd.f32 %v5359, %v5360
      %v5362 = vsel %vm310, %v5253, 0.0
      %v5363 = vadd.f32 %v5361, %v5362
      %v5364 = vsel %vm310, %v5285, 0.0
      %v5365 = vadd.f32 %v5363, %v5364
      %v5366 = vsel %vm310, %v5317, 0.0
      %v5367 = vadd.f32 %v5365, %v5366
      %v5368 = vsel %vm310, %v5030, 0.0
      %v5369 = vsel %vm310, %v5062, 0.0
      %v5370 = vadd.f32 %v5368, %v5369
      %v5371 = vsel %vm310, %v5094, 0.0
      %v5372 = vadd.f32 %v5370, %v5371
      %v5373 = vsel %vm310, %v5126, 0.0
      %v5374 = vadd.f32 %v5372, %v5373
      %v5375 = vsel %vm310, %v5158, 0.0
      %v5376 = vadd.f32 %v5374, %v5375
      %v5377 = vsel %vm310, %v5190, 0.0
      %v5378 = vadd.f32 %v5376, %v5377
      %v5379 = vsel %vm310, %v5222, 0.0
      %v5380 = vadd.f32 %v5378, %v5379
      %v5381 = vsel %vm310, %v5254, 0.0
      %v5382 = vadd.f32 %v5380, %v5381
      %v5383 = vsel %vm310, %v5286, 0.0
      %v5384 = vadd.f32 %v5382, %v5383
      %v5385 = vsel %vm310, %v5318, 0.0
      %v5386 = vadd.f32 %v5384, %v5385
      %v5387 = vsel %vm310, %v5031, 0.0
      %v5388 = vsel %vm310, %v5063, 0.0
      %v5389 = vadd.f32 %v5387, %v5388
      %v5390 = vsel %vm310, %v5095, 0.0
      %v5391 = vadd.f32 %v5389, %v5390
      %v5392 = vsel %vm310, %v5127, 0.0
      %v5393 = vadd.f32 %v5391, %v5392
      %v5394 = vsel %vm310, %v5159, 0.0
      %v5395 = vadd.f32 %v5393, %v5394
      %v5396 = vsel %vm310, %v5191, 0.0
      %v5397 = vadd.f32 %v5395, %v5396
      %v5398 = vsel %vm310, %v5223, 0.0
      %v5399 = vadd.f32 %v5397, %v5398
      %v5400 = vsel %vm310, %v5255, 0.0
      %v5401 = vadd.f32 %v5399, %v5400
      %v5402 = vsel %vm310, %v5287, 0.0
      %v5403 = vadd.f32 %v5401, %v5402
      %v5404 = vsel %vm310, %v5319, 0.0
      %v5405 = vadd.f32 %v5403, %v5404
      %v5406 = vsel %vm310, %v5032, 0.0
      %v5407 = vsel %vm310, %v5064, 0.0
      %v5408 = vadd.f32 %v5406, %v5407
      %v5409 = vsel %vm310, %v5096, 0.0
      %v5410 = vadd.f32 %v5408, %v5409
      %v5411 = vsel %vm310, %v5128, 0.0
      %v5412 = vadd.f32 %v5410, %v5411
      %v5413 = vsel %vm310, %v5160, 0.0
      %v5414 = vadd.f32 %v5412, %v5413
      %v5415 = vsel %vm310, %v5192, 0.0
      %v5416 = vadd.f32 %v5414, %v5415
      %v5417 = vsel %vm310, %v5224, 0.0
      %v5418 = vadd.f32 %v5416, %v5417
      %v5419 = vsel %vm310, %v5256, 0.0
      %v5420 = vadd.f32 %v5418, %v5419
      %v5421 = vsel %vm310, %v5288, 0.0
      %v5422 = vadd.f32 %v5420, %v5421
      %v5423 = vsel %vm310, %v5320, 0.0
      %v5424 = vadd.f32 %v5422, %v5423
      %v5425 = vsel %vm310, %v5033, 0.0
      %v5426 = vsel %vm310, %v5065, 0.0
      %v5427 = vadd.f32 %v5425, %v5426
      %v5428 = vsel %vm310, %v5097, 0.0
      %v5429 = vadd.f32 %v5427, %v5428
      %v5430 = vsel %vm310, %v5129, 0.0
      %v5431 = vadd.f32 %v5429, %v5430
      %v5432 = vsel %vm310, %v5161, 0.0
      %v5433 = vadd.f32 %v5431, %v5432
      %v5434 = vsel %vm310, %v5193, 0.0
      %v5435 = vadd.f32 %v5433, %v5434
      %v5436 = vsel %vm310, %v5225, 0.0
      %v5437 = vadd.f32 %v5435, %v5436
      %v5438 = vsel %vm310, %v5257, 0.0
      %v5439 = vadd.f32 %v5437, %v5438
      %v5440 = vsel %vm310, %v5289, 0.0
      %v5441 = vadd.f32 %v5439, %v5440
      %v5442 = vsel %vm310, %v5321, 0.0
      %v5443 = vadd.f32 %v5441, %v5442
      %v5444 = vsel %vm310, %v5034, 0.0
      %v5445 = vsel %vm310, %v5066, 0.0
      %v5446 = vadd.f32 %v5444, %v5445
      %v5447 = vsel %vm310, %v5098, 0.0
      %v5448 = vadd.f32 %v5446, %v5447
      %v5449 = vsel %vm310, %v5130, 0.0
      %v5450 = vadd.f32 %v5448, %v5449
      %v5451 = vsel %vm310, %v5162, 0.0
      %v5452 = vadd.f32 %v5450, %v5451
      %v5453 = vsel %vm310, %v5194, 0.0
      %v5454 = vadd.f32 %v5452, %v5453
      %v5455 = vsel %vm310, %v5226, 0.0
      %v5456 = vadd.f32 %v5454, %v5455
      %v5457 = vsel %vm310, %v5258, 0.0
      %v5458 = vadd.f32 %v5456, %v5457
      %v5459 = vsel %vm310, %v5290, 0.0
      %v5460 = vadd.f32 %v5458, %v5459
      %v5461 = vsel %vm310, %v5322, 0.0
      %v5462 = vadd.f32 %v5460, %v5461
      %v5463 = vsel %vm310, %v5035, 0.0
      %v5464 = vsel %vm310, %v5067, 0.0
      %v5465 = vadd.f32 %v5463, %v5464
      %v5466 = vsel %vm310, %v5099, 0.0
      %v5467 = vadd.f32 %v5465, %v5466
      %v5468 = vsel %vm310, %v5131, 0.0
      %v5469 = vadd.f32 %v5467, %v5468
      %v5470 = vsel %vm310, %v5163, 0.0
      %v5471 = vadd.f32 %v5469, %v5470
      %v5472 = vsel %vm310, %v5195, 0.0
      %v5473 = vadd.f32 %v5471, %v5472
      %v5474 = vsel %vm310, %v5227, 0.0
      %v5475 = vadd.f32 %v5473, %v5474
      %v5476 = vsel %vm310, %v5259, 0.0
      %v5477 = vadd.f32 %v5475, %v5476
      %v5478 = vsel %vm310, %v5291, 0.0
      %v5479 = vadd.f32 %v5477, %v5478
      %v5480 = vsel %vm310, %v5323, 0.0
      %v5481 = vadd.f32 %v5479, %v5480
      %v5482 = vsel %vm310, %v5036, 0.0
      %v5483 = vsel %vm310, %v5068, 0.0
      %v5484 = vadd.f32 %v5482, %v5483
      %v5485 = vsel %vm310, %v5100, 0.0
      %v5486 = vadd.f32 %v5484, %v5485
      %v5487 = vsel %vm310, %v5132, 0.0
      %v5488 = vadd.f32 %v5486, %v5487
      %v5489 = vsel %vm310, %v5164, 0.0
      %v5490 = vadd.f32 %v5488, %v5489
      %v5491 = vsel %vm310, %v5196, 0.0
      %v5492 = vadd.f32 %v5490, %v5491
      %v5493 = vsel %vm310, %v5228, 0.0
      %v5494 = vadd.f32 %v5492, %v5493
      %v5495 = vsel %vm310, %v5260, 0.0
      %v5496 = vadd.f32 %v5494, %v5495
      %v5497 = vsel %vm310, %v5292, 0.0
      %v5498 = vadd.f32 %v5496, %v5497
      %v5499 = vsel %vm310, %v5324, 0.0
      %v5500 = vadd.f32 %v5498, %v5499
      %v5501 = vsel %vm310, %v5037, 0.0
      %v5502 = vsel %vm310, %v5069, 0.0
      %v5503 = vadd.f32 %v5501, %v5502
      %v5504 = vsel %vm310, %v5101, 0.0
      %v5505 = vadd.f32 %v5503, %v5504
      %v5506 = vsel %vm310, %v5133, 0.0
      %v5507 = vadd.f32 %v5505, %v5506
      %v5508 = vsel %vm310, %v5165, 0.0
      %v5509 = vadd.f32 %v5507, %v5508
      %v5510 = vsel %vm310, %v5197, 0.0
      %v5511 = vadd.f32 %v5509, %v5510
      %v5512 = vsel %vm310, %v5229, 0.0
      %v5513 = vadd.f32 %v5511, %v5512
      %v5514 = vsel %vm310, %v5261, 0.0
      %v5515 = vadd.f32 %v5513, %v5514
      %v5516 = vsel %vm310, %v5293, 0.0
      %v5517 = vadd.f32 %v5515, %v5516
      %v5518 = vsel %vm310, %v5325, 0.0
      %v5519 = vadd.f32 %v5517, %v5518
      %v5520 = vsel %vm310, %v5038, 0.0
      %v5521 = vsel %vm310, %v5070, 0.0
      %v5522 = vadd.f32 %v5520, %v5521
      %v5523 = vsel %vm310, %v5102, 0.0
      %v5524 = vadd.f32 %v5522, %v5523
      %v5525 = vsel %vm310, %v5134, 0.0
      %v5526 = vadd.f32 %v5524, %v5525
      %v5527 = vsel %vm310, %v5166, 0.0
      %v5528 = vadd.f32 %v5526, %v5527
      %v5529 = vsel %vm310, %v5198, 0.0
      %v5530 = vadd.f32 %v5528, %v5529
      %v5531 = vsel %vm310, %v5230, 0.0
      %v5532 = vadd.f32 %v5530, %v5531
      %v5533 = vsel %vm310, %v5262, 0.0
      %v5534 = vadd.f32 %v5532, %v5533
      %v5535 = vsel %vm310, %v5294, 0.0
      %v5536 = vadd.f32 %v5534, %v5535
      %v5537 = vsel %vm310, %v5326, 0.0
      %v5538 = vadd.f32 %v5536, %v5537
      %v5539 = vsel %vm310, %v5039, 0.0
      %v5540 = vsel %vm310, %v5071, 0.0
      %v5541 = vadd.f32 %v5539, %v5540
      %v5542 = vsel %vm310, %v5103, 0.0
      %v5543 = vadd.f32 %v5541, %v5542
      %v5544 = vsel %vm310, %v5135, 0.0
      %v5545 = vadd.f32 %v5543, %v5544
      %v5546 = vsel %vm310, %v5167, 0.0
      %v5547 = vadd.f32 %v5545, %v5546
      %v5548 = vsel %vm310, %v5199, 0.0
      %v5549 = vadd.f32 %v5547, %v5548
      %v5550 = vsel %vm310, %v5231, 0.0
      %v5551 = vadd.f32 %v5549, %v5550
      %v5552 = vsel %vm310, %v5263, 0.0
      %v5553 = vadd.f32 %v5551, %v5552
      %v5554 = vsel %vm310, %v5295, 0.0
      %v5555 = vadd.f32 %v5553, %v5554
      %v5556 = vsel %vm310, %v5327, 0.0
      %v5557 = vadd.f32 %v5555, %v5556
      %v5558 = vsel %vm310, %v5040, 0.0
      %v5559 = vsel %vm310, %v5072, 0.0
      %v5560 = vadd.f32 %v5558, %v5559
      %v5561 = vsel %vm310, %v5104, 0.0
      %v5562 = vadd.f32 %v5560, %v5561
      %v5563 = vsel %vm310, %v5136, 0.0
      %v5564 = vadd.f32 %v5562, %v5563
      %v5565 = vsel %vm310, %v5168, 0.0
      %v5566 = vadd.f32 %v5564, %v5565
      %v5567 = vsel %vm310, %v5200, 0.0
      %v5568 = vadd.f32 %v5566, %v5567
      %v5569 = vsel %vm310, %v5232, 0.0
      %v5570 = vadd.f32 %v5568, %v5569
      %v5571 = vsel %vm310, %v5264, 0.0
      %v5572 = vadd.f32 %v5570, %v5571
      %v5573 = vsel %vm310, %v5296, 0.0
      %v5574 = vadd.f32 %v5572, %v5573
      %v5575 = vsel %vm310, %v5328, 0.0
      %v5576 = vadd.f32 %v5574, %v5575
      %v5577 = vsel %vm310, %v5041, 0.0
      %v5578 = vsel %vm310, %v5073, 0.0
      %v5579 = vadd.f32 %v5577, %v5578
      %v5580 = vsel %vm310, %v5105, 0.0
      %v5581 = vadd.f32 %v5579, %v5580
      %v5582 = vsel %vm310, %v5137, 0.0
      %v5583 = vadd.f32 %v5581, %v5582
      %v5584 = vsel %vm310, %v5169, 0.0
      %v5585 = vadd.f32 %v5583, %v5584
      %v5586 = vsel %vm310, %v5201, 0.0
      %v5587 = vadd.f32 %v5585, %v5586
      %v5588 = vsel %vm310, %v5233, 0.0
      %v5589 = vadd.f32 %v5587, %v5588
      %v5590 = vsel %vm310, %v5265, 0.0
      %v5591 = vadd.f32 %v5589, %v5590
      %v5592 = vsel %vm310, %v5297, 0.0
      %v5593 = vadd.f32 %v5591, %v5592
      %v5594 = vsel %vm310, %v5329, 0.0
      %v5595 = vadd.f32 %v5593, %v5594
      %v5596 = vsel %vm310, %v5042, 0.0
      %v5597 = vsel %vm310, %v5074, 0.0
      %v5598 = vadd.f32 %v5596, %v5597
      %v5599 = vsel %vm310, %v5106, 0.0
      %v5600 = vadd.f32 %v5598, %v5599
      %v5601 = vsel %vm310, %v5138, 0.0
      %v5602 = vadd.f32 %v5600, %v5601
      %v5603 = vsel %vm310, %v5170, 0.0
      %v5604 = vadd.f32 %v5602, %v5603
      %v5605 = vsel %vm310, %v5202, 0.0
      %v5606 = vadd.f32 %v5604, %v5605
      %v5607 = vsel %vm310, %v5234, 0.0
      %v5608 = vadd.f32 %v5606, %v5607
      %v5609 = vsel %vm310, %v5266, 0.0
      %v5610 = vadd.f32 %v5608, %v5609
      %v5611 = vsel %vm310, %v5298, 0.0
      %v5612 = vadd.f32 %v5610, %v5611
      %v5613 = vsel %vm310, %v5330, 0.0
      %v5614 = vadd.f32 %v5612, %v5613
      %v5615 = vsel %vm310, %v5043, 0.0
      %v5616 = vsel %vm310, %v5075, 0.0
      %v5617 = vadd.f32 %v5615, %v5616
      %v5618 = vsel %vm310, %v5107, 0.0
      %v5619 = vadd.f32 %v5617, %v5618
      %v5620 = vsel %vm310, %v5139, 0.0
      %v5621 = vadd.f32 %v5619, %v5620
      %v5622 = vsel %vm310, %v5171, 0.0
      %v5623 = vadd.f32 %v5621, %v5622
      %v5624 = vsel %vm310, %v5203, 0.0
      %v5625 = vadd.f32 %v5623, %v5624
      %v5626 = vsel %vm310, %v5235, 0.0
      %v5627 = vadd.f32 %v5625, %v5626
      %v5628 = vsel %vm310, %v5267, 0.0
      %v5629 = vadd.f32 %v5627, %v5628
      %v5630 = vsel %vm310, %v5299, 0.0
      %v5631 = vadd.f32 %v5629, %v5630
      %v5632 = vsel %vm310, %v5331, 0.0
      %v5633 = vadd.f32 %v5631, %v5632
      %v5634 = vsel %vm310, %v5044, 0.0
      %v5635 = vsel %vm310, %v5076, 0.0
      %v5636 = vadd.f32 %v5634, %v5635
      %v5637 = vsel %vm310, %v5108, 0.0
      %v5638 = vadd.f32 %v5636, %v5637
      %v5639 = vsel %vm310, %v5140, 0.0
      %v5640 = vadd.f32 %v5638, %v5639
      %v5641 = vsel %vm310, %v5172, 0.0
      %v5642 = vadd.f32 %v5640, %v5641
      %v5643 = vsel %vm310, %v5204, 0.0
      %v5644 = vadd.f32 %v5642, %v5643
      %v5645 = vsel %vm310, %v5236, 0.0
      %v5646 = vadd.f32 %v5644, %v5645
      %v5647 = vsel %vm310, %v5268, 0.0
      %v5648 = vadd.f32 %v5646, %v5647
      %v5649 = vsel %vm310, %v5300, 0.0
      %v5650 = vadd.f32 %v5648, %v5649
      %v5651 = vsel %vm310, %v5332, 0.0
      %v5652 = vadd.f32 %v5650, %v5651
      %v5653 = vsel %vm310, %v5045, 0.0
      %v5654 = vsel %vm310, %v5077, 0.0
      %v5655 = vadd.f32 %v5653, %v5654
      %v5656 = vsel %vm310, %v5109, 0.0
      %v5657 = vadd.f32 %v5655, %v5656
      %v5658 = vsel %vm310, %v5141, 0.0
      %v5659 = vadd.f32 %v5657, %v5658
      %v5660 = vsel %vm310, %v5173, 0.0
      %v5661 = vadd.f32 %v5659, %v5660
      %v5662 = vsel %vm310, %v5205, 0.0
      %v5663 = vadd.f32 %v5661, %v5662
      %v5664 = vsel %vm310, %v5237, 0.0
      %v5665 = vadd.f32 %v5663, %v5664
      %v5666 = vsel %vm310, %v5269, 0.0
      %v5667 = vadd.f32 %v5665, %v5666
      %v5668 = vsel %vm310, %v5301, 0.0
      %v5669 = vadd.f32 %v5667, %v5668
      %v5670 = vsel %vm310, %v5333, 0.0
      %v5671 = vadd.f32 %v5669, %v5670
      %v5672 = vsel %vm310, %v5046, 0.0
      %v5673 = vsel %vm310, %v5078, 0.0
      %v5674 = vadd.f32 %v5672, %v5673
      %v5675 = vsel %vm310, %v5110, 0.0
      %v5676 = vadd.f32 %v5674, %v5675
      %v5677 = vsel %vm310, %v5142, 0.0
      %v5678 = vadd.f32 %v5676, %v5677
      %v5679 = vsel %vm310, %v5174, 0.0
      %v5680 = vadd.f32 %v5678, %v5679
      %v5681 = vsel %vm310, %v5206, 0.0
      %v5682 = vadd.f32 %v5680, %v5681
      %v5683 = vsel %vm310, %v5238, 0.0
      %v5684 = vadd.f32 %v5682, %v5683
      %v5685 = vsel %vm310, %v5270, 0.0
      %v5686 = vadd.f32 %v5684, %v5685
      %v5687 = vsel %vm310, %v5302, 0.0
      %v5688 = vadd.f32 %v5686, %v5687
      %v5689 = vsel %vm310, %v5334, 0.0
      %v5690 = vadd.f32 %v5688, %v5689
      %v5691 = vsel %vm310, %v5047, 0.0
      %v5692 = vsel %vm310, %v5079, 0.0
      %v5693 = vadd.f32 %v5691, %v5692
      %v5694 = vsel %vm310, %v5111, 0.0
      %v5695 = vadd.f32 %v5693, %v5694
      %v5696 = vsel %vm310, %v5143, 0.0
      %v5697 = vadd.f32 %v5695, %v5696
      %v5698 = vsel %vm310, %v5175, 0.0
      %v5699 = vadd.f32 %v5697, %v5698
      %v5700 = vsel %vm310, %v5207, 0.0
      %v5701 = vadd.f32 %v5699, %v5700
      %v5702 = vsel %vm310, %v5239, 0.0
      %v5703 = vadd.f32 %v5701, %v5702
      %v5704 = vsel %vm310, %v5271, 0.0
      %v5705 = vadd.f32 %v5703, %v5704
      %v5706 = vsel %vm310, %v5303, 0.0
      %v5707 = vadd.f32 %v5705, %v5706
      %v5708 = vsel %vm310, %v5335, 0.0
      %v5709 = vadd.f32 %v5707, %v5708
      %v5710 = vsel %vm310, %v5048, 0.0
      %v5711 = vsel %vm310, %v5080, 0.0
      %v5712 = vadd.f32 %v5710, %v5711
      %v5713 = vsel %vm310, %v5112, 0.0
      %v5714 = vadd.f32 %v5712, %v5713
      %v5715 = vsel %vm310, %v5144, 0.0
      %v5716 = vadd.f32 %v5714, %v5715
      %v5717 = vsel %vm310, %v5176, 0.0
      %v5718 = vadd.f32 %v5716, %v5717
      %v5719 = vsel %vm310, %v5208, 0.0
      %v5720 = vadd.f32 %v5718, %v5719
      %v5721 = vsel %vm310, %v5240, 0.0
      %v5722 = vadd.f32 %v5720, %v5721
      %v5723 = vsel %vm310, %v5272, 0.0
      %v5724 = vadd.f32 %v5722, %v5723
      %v5725 = vsel %vm310, %v5304, 0.0
      %v5726 = vadd.f32 %v5724, %v5725
      %v5727 = vsel %vm310, %v5336, 0.0
      %v5728 = vadd.f32 %v5726, %v5727
      %v5729 = vsel %vm310, %v5049, 0.0
      %v5730 = vsel %vm310, %v5081, 0.0
      %v5731 = vadd.f32 %v5729, %v5730
      %v5732 = vsel %vm310, %v5113, 0.0
      %v5733 = vadd.f32 %v5731, %v5732
      %v5734 = vsel %vm310, %v5145, 0.0
      %v5735 = vadd.f32 %v5733, %v5734
      %v5736 = vsel %vm310, %v5177, 0.0
      %v5737 = vadd.f32 %v5735, %v5736
      %v5738 = vsel %vm310, %v5209, 0.0
      %v5739 = vadd.f32 %v5737, %v5738
      %v5740 = vsel %vm310, %v5241, 0.0
      %v5741 = vadd.f32 %v5739, %v5740
      %v5742 = vsel %vm310, %v5273, 0.0
      %v5743 = vadd.f32 %v5741, %v5742
      %v5744 = vsel %vm310, %v5305, 0.0
      %v5745 = vadd.f32 %v5743, %v5744
      %v5746 = vsel %vm310, %v5337, 0.0
      %v5747 = vadd.f32 %v5745, %v5746
      %v5748 = vsel %vm310, %v5050, 0.0
      %v5749 = vsel %vm310, %v5082, 0.0
      %v5750 = vadd.f32 %v5748, %v5749
      %v5751 = vsel %vm310, %v5114, 0.0
      %v5752 = vadd.f32 %v5750, %v5751
      %v5753 = vsel %vm310, %v5146, 0.0
      %v5754 = vadd.f32 %v5752, %v5753
      %v5755 = vsel %vm310, %v5178, 0.0
      %v5756 = vadd.f32 %v5754, %v5755
      %v5757 = vsel %vm310, %v5210, 0.0
      %v5758 = vadd.f32 %v5756, %v5757
      %v5759 = vsel %vm310, %v5242, 0.0
      %v5760 = vadd.f32 %v5758, %v5759
      %v5761 = vsel %vm310, %v5274, 0.0
      %v5762 = vadd.f32 %v5760, %v5761
      %v5763 = vsel %vm310, %v5306, 0.0
      %v5764 = vadd.f32 %v5762, %v5763
      %v5765 = vsel %vm310, %v5338, 0.0
      %v5766 = vadd.f32 %v5764, %v5765
      %v5767 = vsel %vm310, %v5051, 0.0
      %v5768 = vsel %vm310, %v5083, 0.0
      %v5769 = vadd.f32 %v5767, %v5768
      %v5770 = vsel %vm310, %v5115, 0.0
      %v5771 = vadd.f32 %v5769, %v5770
      %v5772 = vsel %vm310, %v5147, 0.0
      %v5773 = vadd.f32 %v5771, %v5772
      %v5774 = vsel %vm310, %v5179, 0.0
      %v5775 = vadd.f32 %v5773, %v5774
      %v5776 = vsel %vm310, %v5211, 0.0
      %v5777 = vadd.f32 %v5775, %v5776
      %v5778 = vsel %vm310, %v5243, 0.0
      %v5779 = vadd.f32 %v5777, %v5778
      %v5780 = vsel %vm310, %v5275, 0.0
      %v5781 = vadd.f32 %v5779, %v5780
      %v5782 = vsel %vm310, %v5307, 0.0
      %v5783 = vadd.f32 %v5781, %v5782
      %v5784 = vsel %vm310, %v5339, 0.0
      %v5785 = vadd.f32 %v5783, %v5784
      %v5786 = vsel %vm310, %v5052, 0.0
      %v5787 = vsel %vm310, %v5084, 0.0
      %v5788 = vadd.f32 %v5786, %v5787
      %v5789 = vsel %vm310, %v5116, 0.0
      %v5790 = vadd.f32 %v5788, %v5789
      %v5791 = vsel %vm310, %v5148, 0.0
      %v5792 = vadd.f32 %v5790, %v5791
      %v5793 = vsel %vm310, %v5180, 0.0
      %v5794 = vadd.f32 %v5792, %v5793
      %v5795 = vsel %vm310, %v5212, 0.0
      %v5796 = vadd.f32 %v5794, %v5795
      %v5797 = vsel %vm310, %v5244, 0.0
      %v5798 = vadd.f32 %v5796, %v5797
      %v5799 = vsel %vm310, %v5276, 0.0
      %v5800 = vadd.f32 %v5798, %v5799
      %v5801 = vsel %vm310, %v5308, 0.0
      %v5802 = vadd.f32 %v5800, %v5801
      %v5803 = vsel %vm310, %v5340, 0.0
      %v5804 = vadd.f32 %v5802, %v5803
      %v5805 = vsel %vm310, %v5053, 0.0
      %v5806 = vsel %vm310, %v5085, 0.0
      %v5807 = vadd.f32 %v5805, %v5806
      %v5808 = vsel %vm310, %v5117, 0.0
      %v5809 = vadd.f32 %v5807, %v5808
      %v5810 = vsel %vm310, %v5149, 0.0
      %v5811 = vadd.f32 %v5809, %v5810
      %v5812 = vsel %vm310, %v5181, 0.0
      %v5813 = vadd.f32 %v5811, %v5812
      %v5814 = vsel %vm310, %v5213, 0.0
      %v5815 = vadd.f32 %v5813, %v5814
      %v5816 = vsel %vm310, %v5245, 0.0
      %v5817 = vadd.f32 %v5815, %v5816
      %v5818 = vsel %vm310, %v5277, 0.0
      %v5819 = vadd.f32 %v5817, %v5818
      %v5820 = vsel %vm310, %v5309, 0.0
      %v5821 = vadd.f32 %v5819, %v5820
      %v5822 = vsel %vm310, %v5341, 0.0
      %v5823 = vadd.f32 %v5821, %v5822
      %v5824 = vsel %vm310, %v5054, 0.0
      %v5825 = vsel %vm310, %v5086, 0.0
      %v5826 = vadd.f32 %v5824, %v5825
      %v5827 = vsel %vm310, %v5118, 0.0
      %v5828 = vadd.f32 %v5826, %v5827
      %v5829 = vsel %vm310, %v5150, 0.0
      %v5830 = vadd.f32 %v5828, %v5829
      %v5831 = vsel %vm310, %v5182, 0.0
      %v5832 = vadd.f32 %v5830, %v5831
      %v5833 = vsel %vm310, %v5214, 0.0
      %v5834 = vadd.f32 %v5832, %v5833
      %v5835 = vsel %vm310, %v5246, 0.0
      %v5836 = vadd.f32 %v5834, %v5835
      %v5837 = vsel %vm310, %v5278, 0.0
      %v5838 = vadd.f32 %v5836, %v5837
      %v5839 = vsel %vm310, %v5310, 0.0
      %v5840 = vadd.f32 %v5838, %v5839
      %v5841 = vsel %vm310, %v5342, 0.0
      %v5842 = vadd.f32 %v5840, %v5841
      %v5843 = vsel %vm310, %v5055, 0.0
      %v5844 = vsel %vm310, %v5087, 0.0
      %v5845 = vadd.f32 %v5843, %v5844
      %v5846 = vsel %vm310, %v5119, 0.0
      %v5847 = vadd.f32 %v5845, %v5846
      %v5848 = vsel %vm310, %v5151, 0.0
      %v5849 = vadd.f32 %v5847, %v5848
      %v5850 = vsel %vm310, %v5183, 0.0
      %v5851 = vadd.f32 %v5849, %v5850
      %v5852 = vsel %vm310, %v5215, 0.0
      %v5853 = vadd.f32 %v5851, %v5852
      %v5854 = vsel %vm310, %v5247, 0.0
      %v5855 = vadd.f32 %v5853, %v5854
      %v5856 = vsel %vm310, %v5279, 0.0
      %v5857 = vadd.f32 %v5855, %v5856
      %v5858 = vsel %vm310, %v5311, 0.0
      %v5859 = vadd.f32 %v5857, %v5858
      %v5860 = vsel %vm310, %v5343, 0.0
      %v5861 = vadd.f32 %v5859, %v5860
      %v5862 = vsel %vm310, %v5056, 0.0
      %v5863 = vsel %vm310, %v5088, 0.0
      %v5864 = vadd.f32 %v5862, %v5863
      %v5865 = vsel %vm310, %v5120, 0.0
      %v5866 = vadd.f32 %v5864, %v5865
      %v5867 = vsel %vm310, %v5152, 0.0
      %v5868 = vadd.f32 %v5866, %v5867
      %v5869 = vsel %vm310, %v5184, 0.0
      %v5870 = vadd.f32 %v5868, %v5869
      %v5871 = vsel %vm310, %v5216, 0.0
      %v5872 = vadd.f32 %v5870, %v5871
      %v5873 = vsel %vm310, %v5248, 0.0
      %v5874 = vadd.f32 %v5872, %v5873
      %v5875 = vsel %vm310, %v5280, 0.0
      %v5876 = vadd.f32 %v5874, %v5875
      %v5877 = vsel %vm310, %v5312, 0.0
      %v5878 = vadd.f32 %v5876, %v5877
      %v5879 = vsel %vm310, %v5344, 0.0
      %v5880 = vadd.f32 %v5878, %v5879
      %v5881 = vsel %vm310, %v5057, 0.0
      %v5882 = vsel %vm310, %v5089, 0.0
      %v5883 = vadd.f32 %v5881, %v5882
      %v5884 = vsel %vm310, %v5121, 0.0
      %v5885 = vadd.f32 %v5883, %v5884
      %v5886 = vsel %vm310, %v5153, 0.0
      %v5887 = vadd.f32 %v5885, %v5886
      %v5888 = vsel %vm310, %v5185, 0.0
      %v5889 = vadd.f32 %v5887, %v5888
      %v5890 = vsel %vm310, %v5217, 0.0
      %v5891 = vadd.f32 %v5889, %v5890
      %v5892 = vsel %vm310, %v5249, 0.0
      %v5893 = vadd.f32 %v5891, %v5892
      %v5894 = vsel %vm310, %v5281, 0.0
      %v5895 = vadd.f32 %v5893, %v5894
      %v5896 = vsel %vm310, %v5313, 0.0
      %v5897 = vadd.f32 %v5895, %v5896
      %v5898 = vsel %vm310, %v5345, 0.0
      %v5899 = vadd.f32 %v5897, %v5898
      %v5900 = vsel %vm310, %v5058, 0.0
      %v5901 = vsel %vm310, %v5090, 0.0
      %v5902 = vadd.f32 %v5900, %v5901
      %v5903 = vsel %vm310, %v5122, 0.0
      %v5904 = vadd.f32 %v5902, %v5903
      %v5905 = vsel %vm310, %v5154, 0.0
      %v5906 = vadd.f32 %v5904, %v5905
      %v5907 = vsel %vm310, %v5186, 0.0
      %v5908 = vadd.f32 %v5906, %v5907
      %v5909 = vsel %vm310, %v5218, 0.0
      %v5910 = vadd.f32 %v5908, %v5909
      %v5911 = vsel %vm310, %v5250, 0.0
      %v5912 = vadd.f32 %v5910, %v5911
      %v5913 = vsel %vm310, %v5282, 0.0
      %v5914 = vadd.f32 %v5912, %v5913
      %v5915 = vsel %vm310, %v5314, 0.0
      %v5916 = vadd.f32 %v5914, %v5915
      %v5917 = vsel %vm310, %v5346, 0.0
      %v5918 = vadd.f32 %v5916, %v5917
      %v5919 = vsel %vm310, %v5059, 0.0
      %v5920 = vsel %vm310, %v5091, 0.0
      %v5921 = vadd.f32 %v5919, %v5920
      %v5922 = vsel %vm310, %v5123, 0.0
      %v5923 = vadd.f32 %v5921, %v5922
      %v5924 = vsel %vm310, %v5155, 0.0
      %v5925 = vadd.f32 %v5923, %v5924
      %v5926 = vsel %vm310, %v5187, 0.0
      %v5927 = vadd.f32 %v5925, %v5926
      %v5928 = vsel %vm310, %v5219, 0.0
      %v5929 = vadd.f32 %v5927, %v5928
      %v5930 = vsel %vm310, %v5251, 0.0
      %v5931 = vadd.f32 %v5929, %v5930
      %v5932 = vsel %vm310, %v5283, 0.0
      %v5933 = vadd.f32 %v5931, %v5932
      %v5934 = vsel %vm310, %v5315, 0.0
      %v5935 = vadd.f32 %v5933, %v5934
      %v5936 = vsel %vm310, %v5347, 0.0
      %v5937 = vadd.f32 %v5935, %v5936
      %v5938 = vsel %vm310, %v5060, 0.0
      %v5939 = vsel %vm310, %v5092, 0.0
      %v5940 = vadd.f32 %v5938, %v5939
      %v5941 = vsel %vm310, %v5124, 0.0
      %v5942 = vadd.f32 %v5940, %v5941
      %v5943 = vsel %vm310, %v5156, 0.0
      %v5944 = vadd.f32 %v5942, %v5943
      %v5945 = vsel %vm310, %v5188, 0.0
      %v5946 = vadd.f32 %v5944, %v5945
      %v5947 = vsel %vm310, %v5220, 0.0
      %v5948 = vadd.f32 %v5946, %v5947
      %v5949 = vsel %vm310, %v5252, 0.0
      %v5950 = vadd.f32 %v5948, %v5949
      %v5951 = vsel %vm310, %v5284, 0.0
      %v5952 = vadd.f32 %v5950, %v5951
      %v5953 = vsel %vm310, %v5316, 0.0
      %v5954 = vadd.f32 %v5952, %v5953
      %v5955 = vsel %vm310, %v5348, 0.0
      %v5956 = vadd.f32 %v5954, %v5955
      %v5957 = vmul.f32 %v5367, 0.11111111
      %v5958 = vmul.f32 %v5386, 0.11111111
      %v5959 = vmul.f32 %v5405, 0.11111111
      %v5960 = vmul.f32 %v5424, 0.11111111
      %v5961 = vmul.f32 %v5443, 0.11111111
      %v5962 = vmul.f32 %v5462, 0.11111111
      %v5963 = vmul.f32 %v5481, 0.11111111
      %v5964 = vmul.f32 %v5500, 0.11111111
      %v5965 = vmul.f32 %v5519, 0.11111111
      %v5966 = vmul.f32 %v5538, 0.11111111
      %v5967 = vmul.f32 %v5557, 0.11111111
      %v5968 = vmul.f32 %v5576, 0.11111111
      %v5969 = vmul.f32 %v5595, 0.11111111
      %v5970 = vmul.f32 %v5614, 0.11111111
      %v5971 = vmul.f32 %v5633, 0.11111111
      %v5972 = vmul.f32 %v5652, 0.11111111
      %v5973 = vmul.f32 %v5671, 0.11111111
      %v5974 = vmul.f32 %v5690, 0.11111111
      %v5975 = vmul.f32 %v5709, 0.11111111
      %v5976 = vmul.f32 %v5728, 0.11111111
      %v5977 = vmul.f32 %v5747, 0.11111111
      %v5978 = vmul.f32 %v5766, 0.11111111
      %v5979 = vmul.f32 %v5785, 0.11111111
      %v5980 = vmul.f32 %v5804, 0.11111111
      %v5981 = vmul.f32 %v5823, 0.11111111
      %v5982 = vmul.f32 %v5842, 0.11111111
      %v5983 = vmul.f32 %v5861, 0.11111111
      %v5984 = vmul.f32 %v5880, 0.11111111
      %v5985 = vmul.f32 %v5899, 0.11111111
      %v5986 = vmul.f32 %v5918, 0.11111111
      %v5987 = vmul.f32 %v5937, 0.11111111
      %v5988 = vmul.f32 %v5956, 0.11111111
      %v5989 = vsel %vm310, %v5957, 0.0
      %v5990 = vsel %vm310, %v5958, 0.0
      %v5991 = vadd.f32 %v5989, %v5990
      %v5992 = vsel %vm310, %v5959, 0.0
      %v5993 = vadd.f32 %v5991, %v5992
      %v5994 = vsel %vm310, %v5960, 0.0
      %v5995 = vadd.f32 %v5993, %v5994
      %v5996 = vsel %vm310, %v5961, 0.0
      %v5997 = vadd.f32 %v5995, %v5996
      %v5998 = vsel %vm310, %v5962, 0.0
      %v5999 = vadd.f32 %v5997, %v5998
      %v6000 = vsel %vm310, %v5963, 0.0
      %v6001 = vadd.f32 %v5999, %v6000
      %v6002 = vsel %vm310, %v5964, 0.0
      %v6003 = vadd.f32 %v6001, %v6002
      %v6004 = vsel %vm310, %v5965, 0.0
      %v6005 = vadd.f32 %v6003, %v6004
      %v6006 = vsel %vm310, %v5966, 0.0
      %v6007 = vadd.f32 %v6005, %v6006
      %v6008 = vsel %vm310, %v5967, 0.0
      %v6009 = vadd.f32 %v6007, %v6008
      %v6010 = vsel %vm310, %v5968, 0.0
      %v6011 = vadd.f32 %v6009, %v6010
      %v6012 = vsel %vm310, %v5969, 0.0
      %v6013 = vadd.f32 %v6011, %v6012
      %v6014 = vsel %vm310, %v5970, 0.0
      %v6015 = vadd.f32 %v6013, %v6014
      %v6016 = vsel %vm310, %v5971, 0.0
      %v6017 = vadd.f32 %v6015, %v6016
      %v6018 = vsel %vm310, %v5972, 0.0
      %v6019 = vadd.f32 %v6017, %v6018
      %v6020 = vsel %vm310, %v5973, 0.0
      %v6021 = vadd.f32 %v6019, %v6020
      %v6022 = vsel %vm310, %v5974, 0.0
      %v6023 = vadd.f32 %v6021, %v6022
      %v6024 = vsel %vm310, %v5975, 0.0
      %v6025 = vadd.f32 %v6023, %v6024
      %v6026 = vsel %vm310, %v5976, 0.0
      %v6027 = vadd.f32 %v6025, %v6026
      %v6028 = vsel %vm310, %v5977, 0.0
      %v6029 = vadd.f32 %v6027, %v6028
      %v6030 = vsel %vm310, %v5978, 0.0
      %v6031 = vadd.f32 %v6029, %v6030
      %v6032 = vsel %vm310, %v5979, 0.0
      %v6033 = vadd.f32 %v6031, %v6032
      %v6034 = vsel %vm310, %v5980, 0.0
      %v6035 = vadd.f32 %v6033, %v6034
      %v6036 = vsel %vm310, %v5981, 0.0
      %v6037 = vadd.f32 %v6035, %v6036
      %v6038 = vsel %vm310, %v5982, 0.0
      %v6039 = vadd.f32 %v6037, %v6038
      %v6040 = vsel %vm310, %v5983, 0.0
      %v6041 = vadd.f32 %v6039, %v6040
      %v6042 = vsel %vm310, %v5984, 0.0
      %v6043 = vadd.f32 %v6041, %v6042
      %v6044 = vsel %vm310, %v5985, 0.0
      %v6045 = vadd.f32 %v6043, %v6044
      %v6046 = vsel %vm310, %v5986, 0.0
      %v6047 = vadd.f32 %v6045, %v6046
      %v6048 = vsel %vm310, %v5987, 0.0
      %v6049 = vadd.f32 %v6047, %v6048
      %v6050 = vsel %vm310, %v5988, 0.0
      %v6051 = vadd.f32 %v6049, %v6050
      %v6052 = vrot.slane %v6051, 4
      %v6053 = vadd.f32 %v6051, %v6052
      %v6054 = vrot.slane %v6053, 2
      %v6055 = vadd.f32 %v6053, %v6054
      %v6056 = vrot.slane %v6055, 1
      %v6057 = vadd.f32 %v6055, %v6056
      %v6058 = vmul.f32 %v6057, %v380
      %v6059 = vsub.f32 1.0, %v6058
      %v6060 = vmul.f32 %v540, %v6059
      %v6061 = vlaneseq
      %v6062 = vshrl.u32 %v6061, 7
      %v6063 = vsub.s32 0, %v6062
      %v6064 = vrot.slane %v6060, %v6063
      %v6065 = vmul.f32 %v246, %v6064
      %v6066 = vmul.f32 %v247, %v6064
      %v6067 = vmul.f32 %v248, %v6064
      %v6068 = vmul.f32 %v249, %v6064
      %v6069 = vmul.f32 %v250, %v6064
      %v6070 = vmul.f32 %v251, %v6064
      %v6071 = vmul.f32 %v252, %v6064
      %v6072 = vmul.f32 %v253, %v6064
      %v6073 = vmul.f32 %v254, %v6064
      %v6074 = vmul.f32 %v255, %v6064
      %v6075 = vmul.f32 %v256, %v6064
      %v6076 = vmul.f32 %v257, %v6064
      %v6077 = vmul.f32 %v258, %v6064
      %v6078 = vmul.f32 %v259, %v6064
      %v6079 = vmul.f32 %v260, %v6064
      %v6080 = vmul.f32 %v261, %v6064
      %v6081 = vmul.f32 %v262, %v6064
      %v6082 = vmul.f32 %v263, %v6064
      %v6083 = vmul.f32 %v264, %v6064
      %v6084 = vmul.f32 %v265, %v6064
      %v6085 = vmul.f32 %v266, %v6064
      %v6086 = vmul.f32 %v267, %v6064
      %v6087 = vmul.f32 %v268, %v6064
      %v6088 = vmul.f32 %v269, %v6064
      %v6089 = vmul.f32 %v270, %v6064
      %v6090 = vmul.f32 %v271, %v6064
      %v6091 = vmul.f32 %v272, %v6064
      %v6092 = vmul.f32 %v273, %v6064
      %v6093 = vmul.f32 %v274, %v6064
      %v6094 = vmul.f32 %v275, %v6064
      %v6095 = vmul.f32 %v276, %v6064
      %v6096 = vmul.f32 %v277, %v6064
      %6097 = vst.msk [vmem:[%s244] sm:$0xff] %vm310, %v6065
      %6098 = vst.msk [vmem:[%s244 + $0x8] sm:$0xff] %vm310, %v6066
      %6099 = vst.msk [vmem:[%s244 + $0x10] sm:$0xff] %vm310, %v6067
      %6100 = vst.msk [vmem:[%s244 + $0x18] sm:$0xff] %vm310, %v6068
      %6101 = vst.msk [vmem:[%s244 + $0x20] sm:$0xff] %vm310, %v6069
      %6102 = vst.msk [vmem:[%s244 + $0x28] sm:$0xff] %vm310, %v6070
      %6103 = vst.msk [vmem:[%s244 + $0x30] sm:$0xff] %vm310, %v6071
      %6104 = vst.msk [vmem:[%s244 + $0x38] sm:$0xff] %vm310, %v6072
      %6105 = vst.msk [vmem:[%s244 + $0x40] sm:$0xff] %vm310, %v6073
      %6106 = vst.msk [vmem:[%s244 + $0x48] sm:$0xff] %vm310, %v6074
      %6107 = vst.msk [vmem:[%s244 + $0x50] sm:$0xff] %vm310, %v6075
      %6108 = vst.msk [vmem:[%s244 + $0x58] sm:$0xff] %vm310, %v6076
      %6109 = vst.msk [vmem:[%s244 + $0x60] sm:$0xff] %vm310, %v6077
      %6110 = vst.msk [vmem:[%s244 + $0x68] sm:$0xff] %vm310, %v6078
      %6111 = vst.msk [vmem:[%s244 + $0x70] sm:$0xff] %vm310, %v6079
      %6112 = vst.msk [vmem:[%s244 + $0x78] sm:$0xff] %vm310, %v6080
      %6113 = vst.msk [vmem:[%s244 + $0x80] sm:$0xff] %vm310, %v6081
      %6114 = vst.msk [vmem:[%s244 + $0x88] sm:$0xff] %vm310, %v6082
      %6115 = vst.msk [vmem:[%s244 + $0x90] sm:$0xff] %vm310, %v6083
      %6116 = vst.msk [vmem:[%s244 + $0x98] sm:$0xff] %vm310, %v6084
      %6117 = vst.msk [vmem:[%s244 + $0xa0] sm:$0xff] %vm310, %v6085
      %6118 = vst.msk [vmem:[%s244 + $0xa8] sm:$0xff] %vm310, %v6086
      %6119 = vst.msk [vmem:[%s244 + $0xb0] sm:$0xff] %vm310, %v6087
      %6120 = vst.msk [vmem:[%s244 + $0xb8] sm:$0xff] %vm310, %v6088
      %6121 = vst.msk [vmem:[%s244 + $0xc0] sm:$0xff] %vm310, %v6089
      %6122 = vst.msk [vmem:[%s244 + $0xc8] sm:$0xff] %vm310, %v6090
      %6123 = vst.msk [vmem:[%s244 + $0xd0] sm:$0xff] %vm310, %v6091
      %6124 = vst.msk [vmem:[%s244 + $0xd8] sm:$0xff] %vm310, %v6092
      %6125 = vst.msk [vmem:[%s244 + $0xe0] sm:$0xff] %vm310, %v6093
      %6126 = vst.msk [vmem:[%s244 + $0xe8] sm:$0xff] %vm310, %v6094
      %6127 = vst.msk [vmem:[%s244 + $0xf0] sm:$0xff] %vm310, %v6095
      %6128 = vst.msk [vmem:[%s244 + $0xf8] sm:$0xff] %vm310, %v6096
      %p6129 = scmp.lt.s32.totalorder %s16, 1
      %s6130 = scalar_select %p6129, %s16, 1
      %s6131 = smul.addr %s6130, 32
      %s6132 = smul.addr %s6131, 8
      %s6133 = scalar_lea.vmem %s5, %s6132
      // Predicated region
      $region41: #{tpu_custom_call.1} parent=39 // pred_check
        %p6134 = pneg %p149
      $region42: #{tpu_custom_call.1} parent=39 // pred_check_branch
        %6136 = sbr.rel (%p6134) target = $region44
      $region43: #{tpu_custom_call.1} parent=39 // pred_region
        _
      $region44: #{tpu_custom_call.1} parent=39 // pred_fallthru
        _
    $region40: #{tpu_custom_call.1} parent=5 // pred_fallthru
      _
    %p6137 = scmp.le.s32.totalorder 2, %s11
    // Predicated region
    $region45: #{tpu_custom_call.1} parent=5 // pred_check
      %p6138 = pneg %p6137
    $region46: #{tpu_custom_call.1} parent=5 // pred_check_branch
      %6140 = sbr.rel (%p6138) target = $region48
    $region47: #{tpu_custom_call.1} parent=5 // pred_region
      %s6141 = ssub.s32 %s11, 2
      // Predicated region
      $region49: #{tpu_custom_call.1} parent=47 // pred_check
        %p6142 = pneg %p155
      $region50: #{tpu_custom_call.1} parent=47 // pred_check_branch
        %6144 = sbr.rel (%p6142) target = $region52
      $region51: #{tpu_custom_call.1} parent=47 // pred_region
        %p6145 = scmp.lt.s32.totalorder %s17, 1
        %s6146 = scalar_select %p6145, %s17, 1
        %s6147 = smul.addr %s6146, 32
        %s6148 = smul.addr %s6147, 8
        %s6149 = scalar_lea.vmem %s5, %s6148
      $region52: #{tpu_custom_call.1} parent=47 // pred_fallthru
        _
    $region48: #{tpu_custom_call.1} parent=5 // pred_fallthru
      _
  $region6: #{tpu_custom_call.1} parent=0 // loop_footer
    %s15 = sadd.s32 1, %s11
  $region7: #{tpu_custom_call.1} parent=0 // loop_footer_branch
    %10 = sbr.rel target = $region3
  $region8: #{tpu_custom_call.1} parent=0 // loop_exit
    _

</llo_original>
